<compile_context>
chip_gen: v7x
topology: tpu7x:2x2x1
jax: 0.10.0
libtpu: 0.0.40
codegen_flags: <defaults>
</compile_context>

<pallas_src>
import functools

import numpy as np
import jax
import jax.numpy as jnp
from jax import lax
from jax.experimental import pallas as pl
from jax.experimental.pallas import tpu as pltpu


def _round_up(x, m):
    return ((x + m - 1) // m) * m


def _supcon_kernel(inv_t, n_pad_protos, col_flag_ref,
                   f_row_ref, f_col_ref, protos_ref, novcol_ref, roww_ref,
                   out_ref, acc_a, acc_e):
    """Grid = (row tiles ["parallel"], column tiles ["arbitrary" reduction])."""
    j = pl.program_id(1)
    nj = pl.num_programs(1)

    @pl.when(j == 0)
    def _init():
        acc_a[...] = jnp.zeros_like(acc_a)
        acc_e[...] = jnp.zeros_like(acc_e)

    # Skip column tiles that contain no novel proposals: they contribute exactly
    # zero to both accumulators (per-tile flag is scalar-prefetched into SMEM).
    @pl.when(col_flag_ref[j] > 0)
    def _step():
        # Fold 1/T into the (tm, kp) row operand (cheaper than scaling (tm, tn)).
        frs = f_row_ref[...] * inv_t                                    # bf16
        # s[r, c] = <f_r, f_c> / T on the MXU (bf16 inputs, f32 accumulation).
        s = lax.dot_general(frs, f_col_ref[...],
                            dimension_numbers=(((1,), (1,)), ((), ())),
                            preferred_element_type=jnp.float32)         # (tm, tn)
        es = jnp.exp(s)                                                  # EUP
        w = novcol_ref[...]                                              # (tn, 1) novel-column weights
        # Masked row reductions offloaded to the MXU (keeps the VALU slots free);
        # the self-pair (diagonal) term is subtracted once in the finalize step.
        acc_a[...] += jnp.dot(s, w, preferred_element_type=jnp.float32)
        acc_e[...] += jnp.dot(es, w, preferred_element_type=jnp.float32)

    @pl.when(j == nj - 1)
    def _finalize():
        fr = f_row_ref[...]
        frs = fr * inv_t
        # Prototype similarities for this row tile: (tm, Bp) = f_row @ protos.T / T.
        sp = lax.dot_general(frs, protos_ref[...],
                             dimension_numbers=(((1,), (1,)), ((), ())),
                             preferred_element_type=jnp.float32)
        # Padded proto rows are all-zero => sp == 0 there, so the linear sum needs
        # no mask and the exp sum over-counts by exactly exp(0) * n_pad_protos.
        p_lin = jnp.sum(sp, axis=1, keepdims=True)                 # ni_pk.sum (no exp, torch semantics)
        p_exp = jnp.sum(jnp.exp(sp), axis=1, keepdims=True) - n_pad_protos

        # Self-pair term s_ii (and exp(s_ii)) that the diagonal tile accumulated
        # for novel rows; recomputed identically to the MXU value and subtracted
        # once here instead of building an iota/diag mask on every (i, j) tile.
        diag_s = jnp.sum(frs.astype(jnp.float32) * fr.astype(jnp.float32),
                         axis=1, keepdims=True)                    # (tm, 1)

        rw = roww_ref[...]                                         # (tm, 8) packed per-row params
        w_nov = rw[:, 0:1]     # novel row & Nn > 1
        w_base = rw[:, 1:2]    # base row
        w_avg = rw[:, 2:3]     # w_nov / (Nn - 1)
        nov_row = rw[:, 3:4]   # novel row (ungated) -> diagonal was accumulated
        bi_pi = rw[:, 4:5]     # <f_i, protos[label_i]> / T (precomputed)

        a_sum = acc_a[...] - diag_s * nov_row
        e_sum = acc_e[...] - jnp.exp(diag_s) * nov_row

        # Guard log args for disabled rows (padded / background / single-novel)
        # so 0 * log(<=0) never produces NaN.
        novel_arg = jnp.where(w_nov > 0.0, e_sum + p_lin, 1.0)
        base_arg = jnp.where(w_base > 0.0, e_sum + p_exp, 1.0)
        out_ref[...] = (w_nov * jnp.log(novel_arg) - w_avg * a_sum
                        + w_base * (jnp.log(base_arg) - bi_pi))


def supcon_loss_with_prototype(features, labels, protos, proto_labels, *,
                               num_classes, temperature=0.2, block=256):
    """JAX/Pallas equivalent of SupConLossWithPrototype.forward (literal semantics)."""
    features = features.astype(jnp.float32)
    protos_f32 = protos.astype(jnp.float32)
    labels = labels.astype(jnp.int32)
    proto_labels = proto_labels.astype(jnp.int32)

    m, k = features.shape
    b = protos_f32.shape[0]
    mp = _round_up(m, block)
    kp = _round_up(k, 128)
    bp = _round_up(b, 128)

    # ---- static-shape mask construction (replaces torch boolean indexing) ----
    fg = labels != num_classes
    in_protos = jnp.any(labels[:, None] == proto_labels[None, :], axis=1)
    base = fg & in_protos
    novel = fg & jnp.logical_not(in_protos)
    numel = jnp.sum(fg.astype(jnp.float32))
    n_novel = jnp.sum(novel.astype(jnp.float32))

    nov_f = novel.astype(jnp.float32)
    w_nov = jnp.where(n_novel > 1.0, nov_f, 0.0)
    w_base = base.astype(jnp.float32)
    w_avg = w_nov / jnp.maximum(n_novel - 1.0, 1.0)

    # bi_pi numerator for base rows.  Literal torch semantics: protos indexed by
    # the class label itself (assumes proto_labels == arange(B), as in the torch
    # code); non-base rows are clipped and later zeroed by w_base.
    proto_rows = protos_f32[jnp.clip(labels, 0, b - 1)]                   # (m, k)
    bi_pi = jnp.sum(features * proto_rows, axis=1) / temperature          # (m,)

    zeros = jnp.zeros_like(w_nov)
    row_params = jnp.stack([w_nov, w_base, w_avg, nov_f, bi_pi,
                            zeros, zeros, zeros], axis=1)                  # (m, 8)
    row_params = jnp.pad(row_params, ((0, mp - m), (0, 0)))

    # ---- lane-dense padded operands; bf16 for the MXU, f32 accumulation ----
    f_bf = jnp.pad(features, ((0, mp - m), (0, kp - k))).astype(jnp.bfloat16)
    protos_bf = jnp.pad(protos_f32, ((0, bp - b), (0, kp - k))).astype(jnp.bfloat16)
    nov_col = jnp.pad(nov_f, (0, mp - m)).reshape(mp, 1)                   # (Mp, 1)

    n_tiles = mp // block
    # Per-column-tile "has any novel column" flag -> scalar prefetch, skips dead tiles.
    col_flags = (jnp.max(nov_col.reshape(n_tiles, block), axis=1) > 0.0).astype(jnp.int32)

    kernel = functools.partial(_supcon_kernel, 1.0 / temperature, float(bp - b))

    per_row = pl.pallas_call(
        kernel,
        out_shape=jax.ShapeDtypeStruct((mp, 1), jnp.float32),
        grid_spec=pltpu.PrefetchScalarGridSpec(
            num_scalar_prefetch=1,
            grid=(n_tiles, n_tiles),
            in_specs=[
                pl.BlockSpec((block, kp), lambda i, j, flags: (i, 0)),   # row feature tile
                pl.BlockSpec((block, kp), lambda i, j, flags: (j, 0)),   # column feature tile
                pl.BlockSpec((bp, kp), lambda i, j, flags: (0, 0)),      # prototypes (resident)
                pl.BlockSpec((block, 1), lambda i, j, flags: (j, 0)),    # novel column weights
                pl.BlockSpec((block, 8), lambda i, j, flags: (i, 0)),    # packed per-row params
            ],
            out_specs=pl.BlockSpec((block, 1), lambda i, j, flags: (i, 0)),
            scratch_shapes=[pltpu.VMEM((block, 1), jnp.float32),   # acc: Sum s_ij   (novel cols)
                            pltpu.VMEM((block, 1), jnp.float32)],  # acc: Sum e^s_ij (novel cols)
        ),
        compiler_params=pltpu.CompilerParams(
            dimension_semantics=("parallel", "arbitrary"),
            vmem_limit_bytes=48 * 1024 * 1024),
    )(col_flags, f_bf, f_bf, protos_bf, nov_col, row_params)

    # Padded / background / gated rows contribute exactly 0.
    return jnp.sum(per_row) / jnp.maximum(numel, 1.0)


if __name__ == "__main__":
    key = jax.random.PRNGKey(0)
    k1, k2, k3 = jax.random.split(key, 3)

    M, K, B = 64, 32, 4
    NUM_CLASSES = 8          # labels in [0, 8]; 8 == background
    TEMPERATURE = 0.2

    feats = jax.random.normal(k1, (M, K), dtype=jnp.float32)
    feats = feats / jnp.linalg.norm(feats, axis=1, keepdims=True)
    protos = jax.random.normal(k3, (B, K), dtype=jnp.float32)
    protos = protos / jnp.linalg.norm(protos, axis=1, keepdims=True)
    proto_labels = jnp.arange(B, dtype=jnp.int32)               # base classes 0..3

    labels = jax.random.randint(k2, (M,), 0, NUM_CLASSES + 1, dtype=jnp.int32)
    # Guarantee >=2 novel, >=1 base and >=1 background proposal.
    labels = labels.at[0].set(4).at[1].set(5).at[2].set(0).at[3].set(NUM_CLASSES)

    loss_fn = jax.jit(functools.partial(
        supcon_loss_with_prototype, num_classes=NUM_CLASSES, temperature=TEMPERATURE))
    loss = jax.block_until_ready(loss_fn(feats, labels, protos, proto_labels))

    # ---- pure-numpy reference of the literal torch forward ----
    f_np = np.asarray(feats, dtype=np.float64)
    l_np = np.asarray(labels)
    p_np = np.asarray(protos, dtype=np.float64)
    pl_np = np.asarray(proto_labels)
    T = TEMPERATURE

    fg = l_np != NUM_CLASSES
    f_k, l_k = f_np[fg], l_np[fg]
    numel = f_k.shape[0]
    base = np.isin(l_k, pl_np)
    novel = ~base

    loss_novel = 0.0
    if novel.sum() > 1:
        fn = f_k[novel]
        ni_pk = fn @ p_np.T / T
        ni_nj = fn @ fn.T / T
        numer_mask = 1.0 - np.eye(fn.shape[0])
        denom = (np.exp(ni_nj) * numer_mask).sum(1, keepdims=True) + ni_pk.sum(1, keepdims=True)
        log_prob = ni_nj - np.log(denom)
        # torch's novel_label_mask is an all-True broadcast no-op; reproduced literally.
        loss_novel = (-(log_prob * numer_mask).sum(1) / numer_mask.sum(1)).sum()
    loss_base = 0.0
    if base.any():
        fb = f_k[base]
        bi_pi = np.einsum('nc,nc->n', fb, p_np[l_k[base]]) / T
        bi_nk = fb @ f_k[novel].T / T
        bi_pk = fb @ p_np.T / T
        lp = bi_pi - np.log(np.exp(bi_nk).sum(1) + np.exp(bi_pk).sum(1))
        loss_base = (-lp).sum()
    ref = (loss_novel + loss_base) / numel

    # bf16 MXU inputs (f32 accumulation) -> use a bf16-appropriate tolerance.
    np.testing.assert_allclose(float(loss), ref, rtol=1e-2, atol=1e-2)
    print("KERNEL_OK")
</pallas_src>

<mosaic_0001>
module attributes {stable_mosaic.version = 11 : i64} {
  func.func @_supcon_kernel(%arg0: i32, %arg1: i32, %arg2: memref<1xi32, #tpu.memory_space<smem>>, %arg3: memref<256x128xbf16, #tpu.memory_space<vmem>>, %arg4: memref<256x128xbf16, #tpu.memory_space<vmem>>, %arg5: memref<128x128xbf16, #tpu.memory_space<vmem>>, %arg6: memref<256x1xf32, #tpu.memory_space<vmem>>, %arg7: memref<256x8xf32, #tpu.memory_space<vmem>>, %arg8: memref<256x1xf32, #tpu.memory_space<vmem>>, %arg9: memref<256x1xf32, #tpu.memory_space<vmem>>, %arg10: memref<256x1xf32, #tpu.memory_space<vmem>>) attributes {dimension_semantics = [#tpu.dimension_semantics<parallel>, #tpu.dimension_semantics<arbitrary>], iteration_bounds = array<i64: 1, 1>, scalar_prefetch = 1 : i64, scratch_operands = 2 : i64, tpu.core_type = #tpu.core_type<tc>, window_params = [{transform_indices = @transform_0, window_bounds = array<i64: 256, 128>}, {transform_indices = @transform_1, window_bounds = array<i64: 256, 128>}, {pipeline_mode = #tpu.pipeline_mode<synchronous>, transform_indices = @transform_2, window_bounds = array<i64: 128, 128>}, {transform_indices = @transform_3, window_bounds = array<i64: 256, 1>}, {transform_indices = @transform_4, window_bounds = array<i64: 256, 8>}, {transform_indices = @transform_5, window_bounds = array<i64: 256, 1>}]} {
    %c0_i32 = arith.constant 0 : i32
    %0 = arith.cmpi eq, %arg1, %c0_i32 : i32
    %1 = arith.extui %0 : i1 to i32
    %c0_i32_0 = arith.constant 0 : i32
    %2 = arith.cmpi ne, %1, %c0_i32_0 : i32
    scf.if %2 {
      %cst = arith.constant 0.000000e+00 : f32
      %11 = vector.broadcast %cst : f32 to vector<256x1xf32>
      %c0 = arith.constant 0 : index
      %c0_5 = arith.constant 0 : index
      %12 = vector.load %arg9[%c0, %c0_5] : memref<256x1xf32, #tpu.memory_space<vmem>>, vector<256x1xf32>
      tpu.vector_store %arg9[%c0, %c0_5], %11 {strides = array<i32>} : memref<256x1xf32, #tpu.memory_space<vmem>>, vector<256x1xf32>,
      %cst_6 = arith.constant 0.000000e+00 : f32
      %13 = vector.broadcast %cst_6 : f32 to vector<256x1xf32>
      %c0_7 = arith.constant 0 : index
      %c0_8 = arith.constant 0 : index
      %14 = vector.load %arg10[%c0_7, %c0_8] : memref<256x1xf32, #tpu.memory_space<vmem>>, vector<256x1xf32>
      tpu.vector_store %arg10[%c0_7, %c0_8], %13 {strides = array<i32>} : memref<256x1xf32, #tpu.memory_space<vmem>>, vector<256x1xf32>,
    } else {
    }
    %3 = arith.index_cast %arg1 : i32 to index
    %4 = memref.load %arg2[%3] : memref<1xi32, #tpu.memory_space<smem>>
    %c0_i32_1 = arith.constant 0 : i32
    %5 = arith.cmpi sgt, %4, %c0_i32_1 : i32
    %6 = arith.extui %5 : i1 to i32
    %c0_i32_2 = arith.constant 0 : i32
    %7 = arith.cmpi ne, %6, %c0_i32_2 : i32
    scf.if %7 {
      %c0 = arith.constant 0 : index
      %c0_5 = arith.constant 0 : index
      %11 = vector.load %arg3[%c0, %c0_5] : memref<256x128xbf16, #tpu.memory_space<vmem>>, vector<256x128xbf16>
      %cst = arith.constant 5.000000e+00 : bf16
      %12 = vector.broadcast %cst : bf16 to vector<256x128xbf16>
      %13 = arith.mulf %11, %12 : vector<256x128xbf16>
      %c0_6 = arith.constant 0 : index
      %c0_7 = arith.constant 0 : index
      %14 = vector.load %arg4[%c0_6, %c0_7] : memref<256x128xbf16, #tpu.memory_space<vmem>>, vector<256x128xbf16>
      %cst_8 = arith.constant dense<0.000000e+00> : vector<256x256xf32>
      %15 = tpu.matmul %13, %14, %cst_8 {dimension_numbers = #tpu.dot_dimension_numbers<[1], [1], [0], [0], [0, 0, 1, 0], [], []>} : vector<256x128xbf16>, vector<256x128xbf16>, vector<256x256xf32> -> vector<256x256xf32>
      %16 = math.exp %15 : vector<256x256xf32>
      %c0_9 = arith.constant 0 : index
      %c0_10 = arith.constant 0 : index
      %17 = vector.load %arg6[%c0_9, %c0_10] : memref<256x1xf32, #tpu.memory_space<vmem>>, vector<256x1xf32>
      %c0_11 = arith.constant 0 : index
      %c0_12 = arith.constant 0 : index
      %18 = vector.load %arg9[%c0_11, %c0_12] : memref<256x1xf32, #tpu.memory_space<vmem>>, vector<256x1xf32>
      %cst_13 = arith.constant dense<0.000000e+00> : vector<256x1xf32>
      %19 = tpu.matmul %15, %17, %cst_13 {dimension_numbers = #tpu.dot_dimension_numbers<[1], [0], [0], [1], [0, 0, 1, 1], [], []>} : vector<256x256xf32>, vector<256x1xf32>, vector<256x1xf32> -> vector<256x1xf32>
      %20 = arith.addf %18, %19 : vector<256x1xf32>
      %c0_14 = arith.constant 0 : index
      %c0_15 = arith.constant 0 : index
      %21 = vector.load %arg9[%c0_14, %c0_15] : memref<256x1xf32, #tpu.memory_space<vmem>>, vector<256x1xf32>
      tpu.vector_store %arg9[%c0_14, %c0_15], %20 {strides = array<i32>} : memref<256x1xf32, #tpu.memory_space<vmem>>, vector<256x1xf32>,
      %c0_16 = arith.constant 0 : index
      %c0_17 = arith.constant 0 : index
      %22 = vector.load %arg10[%c0_16, %c0_17] : memref<256x1xf32, #tpu.memory_space<vmem>>, vector<256x1xf32>
      %cst_18 = arith.constant dense<0.000000e+00> : vector<256x1xf32>
      %23 = tpu.matmul %16, %17, %cst_18 {dimension_numbers = #tpu.dot_dimension_numbers<[1], [0], [0], [1], [0, 0, 1, 1], [], []>} : vector<256x256xf32>, vector<256x1xf32>, vector<256x1xf32> -> vector<256x1xf32>
      %24 = arith.addf %22, %23 : vector<256x1xf32>
      %c0_19 = arith.constant 0 : index
      %c0_20 = arith.constant 0 : index
      %25 = vector.load %arg10[%c0_19, %c0_20] : memref<256x1xf32, #tpu.memory_space<vmem>>, vector<256x1xf32>
      tpu.vector_store %arg10[%c0_19, %c0_20], %24 {strides = array<i32>} : memref<256x1xf32, #tpu.memory_space<vmem>>, vector<256x1xf32>,
    } else {
    }
    %c0_i32_3 = arith.constant 0 : i32
    %8 = arith.cmpi eq, %arg1, %c0_i32_3 : i32
    %9 = arith.extui %8 : i1 to i32
    %c0_i32_4 = arith.constant 0 : i32
    %10 = arith.cmpi ne, %9, %c0_i32_4 : i32
    scf.if %10 {
      %c0 = arith.constant 0 : index
      %c0_5 = arith.constant 0 : index
      %11 = vector.load %arg3[%c0, %c0_5] : memref<256x128xbf16, #tpu.memory_space<vmem>>, vector<256x128xbf16>
      %cst = arith.constant 5.000000e+00 : bf16
      %12 = vector.broadcast %cst : bf16 to vector<256x128xbf16>
      %13 = arith.mulf %11, %12 : vector<256x128xbf16>
      %c0_6 = arith.constant 0 : index
      %c0_7 = arith.constant 0 : index
      %14 = vector.load %arg5[%c0_6, %c0_7] : memref<128x128xbf16, #tpu.memory_space<vmem>>, vector<128x128xbf16>
      %cst_8 = arith.constant dense<0.000000e+00> : vector<256x128xf32>
      %15 = tpu.matmul %13, %14, %cst_8 {dimension_numbers = #tpu.dot_dimension_numbers<[1], [1], [0], [0], [0, 0, 1, 0], [], []>} : vector<256x128xbf16>, vector<128x128xbf16>, vector<256x128xf32> -> vector<256x128xf32>
      %cst_9 = arith.constant dense<0.000000e+00> : vector<256xf32>
      %16 = vector.multi_reduction <add>, %15, %cst_9 [1] : vector<256x128xf32> to vector<256xf32>
      %17 = vector.shape_cast %16 : vector<256xf32> to vector<256x1xf32>
      %18 = math.exp %15 : vector<256x128xf32>
      %cst_10 = arith.constant dense<0.000000e+00> : vector<256xf32>
      %19 = vector.multi_reduction <add>, %18, %cst_10 [1] : vector<256x128xf32> to vector<256xf32>
      %20 = vector.shape_cast %19 : vector<256xf32> to vector<256x1xf32>
      %cst_11 = arith.constant 1.240000e+02 : f32
      %21 = vector.broadcast %cst_11 : f32 to vector<256x1xf32>
      %22 = arith.subf %20, %21 : vector<256x1xf32>
      %23 = arith.extf %13 : vector<256x128xbf16> to vector<256x128xf32>
      %24 = arith.extf %11 : vector<256x128xbf16> to vector<256x128xf32>
      %25 = arith.mulf %23, %24 : vector<256x128xf32>
      %cst_12 = arith.constant dense<0.000000e+00> : vector<256xf32>
      %26 = vector.multi_reduction <add>, %25, %cst_12 [1] : vector<256x128xf32> to vector<256xf32>
      %27 = vector.shape_cast %26 : vector<256xf32> to vector<256x1xf32>
      %c0_13 = arith.constant 0 : index
      %c0_14 = arith.constant 0 : index
      %28 = vector.load %arg7[%c0_13, %c0_14] : memref<256x8xf32, #tpu.memory_space<vmem>>, vector<256x8xf32>
      %29 = vector.extract_strided_slice %28 {offsets = [0, 0], sizes = [256, 1], strides = [1, 1]} : vector<256x8xf32> to vector<256x1xf32>
      %30 = vector.extract_strided_slice %28 {offsets = [0, 1], sizes = [256, 1], strides = [1, 1]} : vector<256x8xf32> to vector<256x1xf32>
      %31 = vector.extract_strided_slice %28 {offsets = [0, 2], sizes = [256, 1], strides = [1, 1]} : vector<256x8xf32> to vector<256x1xf32>
      %32 = vector.extract_strided_slice %28 {offsets = [0, 3], sizes = [256, 1], strides = [1, 1]} : vector<256x8xf32> to vector<256x1xf32>
      %33 = vector.extract_strided_slice %28 {offsets = [0, 4], sizes = [256, 1], strides = [1, 1]} : vector<256x8xf32> to vector<256x1xf32>
      %c0_15 = arith.constant 0 : index
      %c0_16 = arith.constant 0 : index
      %34 = vector.load %arg9[%c0_15, %c0_16] : memref<256x1xf32, #tpu.memory_space<vmem>>, vector<256x1xf32>
      %35 = arith.mulf %27, %32 : vector<256x1xf32>
      %36 = arith.subf %34, %35 : vector<256x1xf32>
      %c0_17 = arith.constant 0 : index
      %c0_18 = arith.constant 0 : index
      %37 = vector.load %arg10[%c0_17, %c0_18] : memref<256x1xf32, #tpu.memory_space<vmem>>, vector<256x1xf32>
      %38 = math.exp %27 : vector<256x1xf32>
      %39 = arith.mulf %38, %32 : vector<256x1xf32>
      %40 = arith.subf %37, %39 : vector<256x1xf32>
      %cst_19 = arith.constant 0.000000e+00 : f32
      %41 = vector.broadcast %cst_19 : f32 to vector<256x1xf32>
      %42 = arith.cmpf ogt, %29, %41 : vector<256x1xf32>
      %43 = arith.addf %40, %17 : vector<256x1xf32>
      %cst_20 = arith.constant 1.000000e+00 : f32
      %44 = vector.broadcast %cst_20 : f32 to vector<256x1xf32>
      %45 = arith.select %42, %43, %44 : vector<256x1xi1>, vector<256x1xf32>
      %cst_21 = arith.constant 0.000000e+00 : f32
      %46 = vector.broadcast %cst_21 : f32 to vector<256x1xf32>
      %47 = arith.cmpf ogt, %30, %46 : vector<256x1xf32>
      %48 = arith.addf %40, %22 : vector<256x1xf32>
      %cst_22 = arith.constant 1.000000e+00 : f32
      %49 = vector.broadcast %cst_22 : f32 to vector<256x1xf32>
      %50 = arith.select %47, %48, %49 : vector<256x1xi1>, vector<256x1xf32>
      %51 = math.log %45 : vector<256x1xf32>
      %52 = arith.mulf %29, %51 : vector<256x1xf32>
      %53 = arith.mulf %31, %36 : vector<256x1xf32>
      %54 = arith.subf %52, %53 : vector<256x1xf32>
      %55 = math.log %50 : vector<256x1xf32>
      %56 = arith.subf %55, %33 : vector<256x1xf32>
      %57 = arith.mulf %30, %56 : vector<256x1xf32>
      %58 = arith.addf %54, %57 : vector<256x1xf32>
      %c0_23 = arith.constant 0 : index
      %c0_24 = arith.constant 0 : index
      %59 = vector.load %arg8[%c0_23, %c0_24] : memref<256x1xf32, #tpu.memory_space<vmem>>, vector<256x1xf32>
      tpu.vector_store %arg8[%c0_23, %c0_24], %58 {strides = array<i32>} : memref<256x1xf32, #tpu.memory_space<vmem>>, vector<256x1xf32>,
    } else {
    }
    return
  }
  func.func @transform_0(%arg0: i32, %arg1: i32, %arg2: memref<1xi32, #tpu.memory_space<smem>>) -> (i32, i32) {
    %c0_i32 = arith.constant 0 : i32
    %c0_i32_0 = arith.constant 0 : i32
    return %arg0, %c0_i32 : i32, i32
  }
  func.func @transform_1(%arg0: i32, %arg1: i32, %arg2: memref<1xi32, #tpu.memory_space<smem>>) -> (i32, i32) {
    %c0_i32 = arith.constant 0 : i32
    %c0_i32_0 = arith.constant 0 : i32
    return %arg1, %c0_i32 : i32, i32
  }
  func.func @transform_2(%arg0: i32, %arg1: i32, %arg2: memref<1xi32, #tpu.memory_space<smem>>) -> (i32, i32) {
    %c0_i32 = arith.constant 0 : i32
    %c0_i32_0 = arith.constant 0 : i32
    %c0_i32_1 = arith.constant 0 : i32
    return %c0_i32, %c0_i32_0 : i32, i32
  }
  func.func @transform_3(%arg0: i32, %arg1: i32, %arg2: memref<1xi32, #tpu.memory_space<smem>>) -> (i32, i32) {
    %c0_i32 = arith.constant 0 : i32
    %c0_i32_0 = arith.constant 0 : i32
    return %arg1, %c0_i32 : i32, i32
  }
  func.func @transform_4(%arg0: i32, %arg1: i32, %arg2: memref<1xi32, #tpu.memory_space<smem>>) -> (i32, i32) {
    %c0_i32 = arith.constant 0 : i32
    %c0_i32_0 = arith.constant 0 : i32
    return %arg0, %c0_i32 : i32, i32
  }
  func.func @transform_5(%arg0: i32, %arg1: i32, %arg2: memref<1xi32, #tpu.memory_space<smem>>) -> (i32, i32) {
    %c0_i32 = arith.constant 0 : i32
    %c0_i32_0 = arith.constant 0 : i32
    return %arg0, %c0_i32 : i32, i32
  }
}

</mosaic_0001>

<llo_original>
// kernel: supcon_loss_with_prototype.1
$region0: #{supcon_loss_with_prototype.1}
  #allocation0 [shape = 'u32[]', space=smem, size = 0x4, offset = 0x4, fixed_abs, tag = 'smem constant byte address 0x4 - core index']
  #allocation1 [shape = 'u32[144,128]{1,0:T(1,128)}', space=vmem, size = 0x12000, scoped, tag = 'internal scratch']
  #allocation2 [shape = 'f32[256,1]{1,0:T(8,128)}', space=vmem, size = 0x20000, scoped, tag = 'scratch operand']
  #allocation3 [shape = 'f32[256,1]{1,0:T(8,128)}', space=vmem, size = 0x20000, scoped, tag = 'scratch operand']
  #allocation4 [shape = 's32[1]{0}', space=sflag, size = 0x4, scoped, tag = 'scoped memory for supcon_loss_with_prototype.1']
  #allocation5 [shape = 's32[1]{0:T(128)S(6)}', space=smem, size = 0x200, scoped, tag = 'prefetched SMEM operand 0']
  %s0 = inlined_call_operand.<no memory space> [shape: s32[1], index: 0, kind: input, shape index: {}]
  %s1 = inlined_call_operand.vmem [shape: bf16[256,128], index: 1, kind: input, shape index: {}, may-alias: {1,2}]
  %s2 = inlined_call_operand.vmem [shape: bf16[256,128], index: 2, kind: input, shape index: {}, may-alias: {1,2}]
  %s3 = inlined_call_operand.vmem [shape: bf16[128,128], index: 3, kind: input, shape index: {}]
  %s4 = inlined_call_operand.vmem [shape: f32[256,1], index: 4, kind: input, shape index: {}]
  %s5 = inlined_call_operand.vmem [shape: f32[256,8], index: 5, kind: input, shape index: {}]
  %s6 = inlined_call_operand.vmem [shape: f32[256,1], index: 6, kind: output, shape index: {}]
  %s7 = sld [smem:[#allocation0]]
  $region42: #{supcon_loss_with_prototype.1} parent=0
    _
  %s9 = ssub.s32 1, %s7
  %s10 = scalar_select 0, %s9, %s7
  %11 = sst [smem:[#allocation5]] %s0
  // Predicated region
  $region2: #{supcon_loss_with_prototype.1} parent=0 // pred_check
    _
  $region3: #{supcon_loss_with_prototype.1} parent=0 // pred_check_branch
    %13 = sbr.rel (0) target = $region5
  $region4: #{supcon_loss_with_prototype.1} parent=0 // pred_region
    _
  $region5: #{supcon_loss_with_prototype.1} parent=0 // pred_fallthru
    _
  // Predicated region
  $region6: #{supcon_loss_with_prototype.1} parent=0 // pred_check
    _
  $region7: #{supcon_loss_with_prototype.1} parent=0 // pred_check_branch
    %15 = sbr.rel (0) target = $region9
  $region8: #{supcon_loss_with_prototype.1} parent=0 // pred_region
    _
  $region9: #{supcon_loss_with_prototype.1} parent=0 // pred_fallthru
    _
  // Predicated region
  $region10: #{supcon_loss_with_prototype.1} parent=0 // pred_check
    _
  $region11: #{supcon_loss_with_prototype.1} parent=0 // pred_check_branch
    %17 = sbr.rel (0) target = $region13
  $region12: #{supcon_loss_with_prototype.1} parent=0 // pred_region
    _
  $region13: #{supcon_loss_with_prototype.1} parent=0 // pred_fallthru
    _
  // Predicated region
  $region14: #{supcon_loss_with_prototype.1} parent=0 // pred_check
    _
  $region15: #{supcon_loss_with_prototype.1} parent=0 // pred_check_branch
    %19 = sbr.rel (0) target = $region17
  $region16: #{supcon_loss_with_prototype.1} parent=0 // pred_region
    _
  $region17: #{supcon_loss_with_prototype.1} parent=0 // pred_fallthru
    _
  // Predicated region
  $region18: #{supcon_loss_with_prototype.1} parent=0 // pred_check
    _
  $region19: #{supcon_loss_with_prototype.1} parent=0 // pred_check_branch
    %21 = sbr.rel (0) target = $region21
  $region20: #{supcon_loss_with_prototype.1} parent=0 // pred_region
    _
  $region21: #{supcon_loss_with_prototype.1} parent=0 // pred_fallthru
    _
  %p24 = scmp.eq.s32.totalorder 0, 0
  // Predicated region
  $region22: #{supcon_loss_with_prototype.1} parent=0 // pred_check
    %p25 = pneg %p24
  $region23: #{supcon_loss_with_prototype.1} parent=0 // pred_check_branch
    %27 = sbr.rel (%p25) target = $region25
  $region24: #{supcon_loss_with_prototype.1} parent=0 // pred_region
    %vm28 = vcmask 7168
    %29 = vst.msk [vmem:[#allocation2] sm:$0xff] %vm28, 0.0
    %30 = vst.msk [vmem:[#allocation2 + $0x8] sm:$0xff] %vm28, 0.0
    %31 = vst.msk [vmem:[#allocation2 + $0x10] sm:$0xff] %vm28, 0.0
    %32 = vst.msk [vmem:[#allocation2 + $0x18] sm:$0xff] %vm28, 0.0
    %33 = vst.msk [vmem:[#allocation2 + $0x20] sm:$0xff] %vm28, 0.0
    %34 = vst.msk [vmem:[#allocation2 + $0x28] sm:$0xff] %vm28, 0.0
    %35 = vst.msk [vmem:[#allocation2 + $0x30] sm:$0xff] %vm28, 0.0
    %36 = vst.msk [vmem:[#allocation2 + $0x38] sm:$0xff] %vm28, 0.0
    %37 = vst.msk [vmem:[#allocation2 + $0x40] sm:$0xff] %vm28, 0.0
    %38 = vst.msk [vmem:[#allocation2 + $0x48] sm:$0xff] %vm28, 0.0
    %39 = vst.msk [vmem:[#allocation2 + $0x50] sm:$0xff] %vm28, 0.0
    %40 = vst.msk [vmem:[#allocation2 + $0x58] sm:$0xff] %vm28, 0.0
    %41 = vst.msk [vmem:[#allocation2 + $0x60] sm:$0xff] %vm28, 0.0
    %42 = vst.msk [vmem:[#allocation2 + $0x68] sm:$0xff] %vm28, 0.0
    %43 = vst.msk [vmem:[#allocation2 + $0x70] sm:$0xff] %vm28, 0.0
    %44 = vst.msk [vmem:[#allocation2 + $0x78] sm:$0xff] %vm28, 0.0
    %45 = vst.msk [vmem:[#allocation2 + $0x80] sm:$0xff] %vm28, 0.0
    %46 = vst.msk [vmem:[#allocation2 + $0x88] sm:$0xff] %vm28, 0.0
    %47 = vst.msk [vmem:[#allocation2 + $0x90] sm:$0xff] %vm28, 0.0
    %48 = vst.msk [vmem:[#allocation2 + $0x98] sm:$0xff] %vm28, 0.0
    %49 = vst.msk [vmem:[#allocation2 + $0xa0] sm:$0xff] %vm28, 0.0
    %50 = vst.msk [vmem:[#allocation2 + $0xa8] sm:$0xff] %vm28, 0.0
    %51 = vst.msk [vmem:[#allocation2 + $0xb0] sm:$0xff] %vm28, 0.0
    %52 = vst.msk [vmem:[#allocation2 + $0xb8] sm:$0xff] %vm28, 0.0
    %53 = vst.msk [vmem:[#allocation2 + $0xc0] sm:$0xff] %vm28, 0.0
    %54 = vst.msk [vmem:[#allocation2 + $0xc8] sm:$0xff] %vm28, 0.0
    %55 = vst.msk [vmem:[#allocation2 + $0xd0] sm:$0xff] %vm28, 0.0
    %56 = vst.msk [vmem:[#allocation2 + $0xd8] sm:$0xff] %vm28, 0.0
    %57 = vst.msk [vmem:[#allocation2 + $0xe0] sm:$0xff] %vm28, 0.0
    %58 = vst.msk [vmem:[#allocation2 + $0xe8] sm:$0xff] %vm28, 0.0
    %59 = vst.msk [vmem:[#allocation2 + $0xf0] sm:$0xff] %vm28, 0.0
    %60 = vst.msk [vmem:[#allocation2 + $0xf8] sm:$0xff] %vm28, 0.0
    %61 = vst.msk [vmem:[#allocation3] sm:$0xff] %vm28, 0.0
    %62 = vst.msk [vmem:[#allocation3 + $0x8] sm:$0xff] %vm28, 0.0
    %63 = vst.msk [vmem:[#allocation3 + $0x10] sm:$0xff] %vm28, 0.0
    %64 = vst.msk [vmem:[#allocation3 + $0x18] sm:$0xff] %vm28, 0.0
    %65 = vst.msk [vmem:[#allocation3 + $0x20] sm:$0xff] %vm28, 0.0
    %66 = vst.msk [vmem:[#allocation3 + $0x28] sm:$0xff] %vm28, 0.0
    %67 = vst.msk [vmem:[#allocation3 + $0x30] sm:$0xff] %vm28, 0.0
    %68 = vst.msk [vmem:[#allocation3 + $0x38] sm:$0xff] %vm28, 0.0
    %69 = vst.msk [vmem:[#allocation3 + $0x40] sm:$0xff] %vm28, 0.0
    %70 = vst.msk [vmem:[#allocation3 + $0x48] sm:$0xff] %vm28, 0.0
    %71 = vst.msk [vmem:[#allocation3 + $0x50] sm:$0xff] %vm28, 0.0
    %72 = vst.msk [vmem:[#allocation3 + $0x58] sm:$0xff] %vm28, 0.0
    %73 = vst.msk [vmem:[#allocation3 + $0x60] sm:$0xff] %vm28, 0.0
    %74 = vst.msk [vmem:[#allocation3 + $0x68] sm:$0xff] %vm28, 0.0
    %75 = vst.msk [vmem:[#allocation3 + $0x70] sm:$0xff] %vm28, 0.0
    %76 = vst.msk [vmem:[#allocation3 + $0x78] sm:$0xff] %vm28, 0.0
    %77 = vst.msk [vmem:[#allocation3 + $0x80] sm:$0xff] %vm28, 0.0
    %78 = vst.msk [vmem:[#allocation3 + $0x88] sm:$0xff] %vm28, 0.0
    %79 = vst.msk [vmem:[#allocation3 + $0x90] sm:$0xff] %vm28, 0.0
    %80 = vst.msk [vmem:[#allocation3 + $0x98] sm:$0xff] %vm28, 0.0
    %81 = vst.msk [vmem:[#allocation3 + $0xa0] sm:$0xff] %vm28, 0.0
    %82 = vst.msk [vmem:[#allocation3 + $0xa8] sm:$0xff] %vm28, 0.0
    %83 = vst.msk [vmem:[#allocation3 + $0xb0] sm:$0xff] %vm28, 0.0
    %84 = vst.msk [vmem:[#allocation3 + $0xb8] sm:$0xff] %vm28, 0.0
    %85 = vst.msk [vmem:[#allocation3 + $0xc0] sm:$0xff] %vm28, 0.0
    %86 = vst.msk [vmem:[#allocation3 + $0xc8] sm:$0xff] %vm28, 0.0
    %87 = vst.msk [vmem:[#allocation3 + $0xd0] sm:$0xff] %vm28, 0.0
    %88 = vst.msk [vmem:[#allocation3 + $0xd8] sm:$0xff] %vm28, 0.0
    %89 = vst.msk [vmem:[#allocation3 + $0xe0] sm:$0xff] %vm28, 0.0
    %90 = vst.msk [vmem:[#allocation3 + $0xe8] sm:$0xff] %vm28, 0.0
    %91 = vst.msk [vmem:[#allocation3 + $0xf0] sm:$0xff] %vm28, 0.0
    %92 = vst.msk [vmem:[#allocation3 + $0xf8] sm:$0xff] %vm28, 0.0
  $region25: #{supcon_loss_with_prototype.1} parent=0 // pred_fallthru
    _
  %s93 = sld [smem:[#allocation5]]
  %p94 = scmp.gt.s32.totalorder %s93, 0
  // Predicated region
  $region26: #{supcon_loss_with_prototype.1} parent=0 // pred_check
    %p95 = pneg %p94
  $region27: #{supcon_loss_with_prototype.1} parent=0 // pred_check_branch
    %97 = sbr.rel (%p95) target = $region29
  $region28: #{supcon_loss_with_prototype.1} parent=0 // pred_region
    %v98 = vld [vmem:[%s1] sm:$0xf]
    %v99 = vld [vmem:[%s1 + $0x4] sm:$0xf]
    %v100 = vld [vmem:[%s1 + $0x8] sm:$0xf]
    %v101 = vld [vmem:[%s1 + $0xc] sm:$0xf]
    %v102 = vld [vmem:[%s1 + $0x10] sm:$0xf]
    %v103 = vld [vmem:[%s1 + $0x14] sm:$0xf]
    %v104 = vld [vmem:[%s1 + $0x18] sm:$0xf]
    %v105 = vld [vmem:[%s1 + $0x1c] sm:$0xf]
    %v106 = vld [vmem:[%s1 + $0x20] sm:$0xf]
    %v107 = vld [vmem:[%s1 + $0x24] sm:$0xf]
    %v108 = vld [vmem:[%s1 + $0x28] sm:$0xf]
    %v109 = vld [vmem:[%s1 + $0x2c] sm:$0xf]
    %v110 = vld [vmem:[%s1 + $0x30] sm:$0xf]
    %v111 = vld [vmem:[%s1 + $0x34] sm:$0xf]
    %v112 = vld [vmem:[%s1 + $0x38] sm:$0xf]
    %v113 = vld [vmem:[%s1 + $0x3c] sm:$0xf]
    %v114 = vld [vmem:[%s1 + $0x40] sm:$0xf]
    %v115 = vld [vmem:[%s1 + $0x44] sm:$0xf]
    %v116 = vld [vmem:[%s1 + $0x48] sm:$0xf]
    %v117 = vld [vmem:[%s1 + $0x4c] sm:$0xf]
    %v118 = vld [vmem:[%s1 + $0x50] sm:$0xf]
    %v119 = vld [vmem:[%s1 + $0x54] sm:$0xf]
    %v120 = vld [vmem:[%s1 + $0x58] sm:$0xf]
    %v121 = vld [vmem:[%s1 + $0x5c] sm:$0xf]
    %v122 = vld [vmem:[%s1 + $0x60] sm:$0xf]
    %v123 = vld [vmem:[%s1 + $0x64] sm:$0xf]
    %v124 = vld [vmem:[%s1 + $0x68] sm:$0xf]
    %v125 = vld [vmem:[%s1 + $0x6c] sm:$0xf]
    %v126 = vld [vmem:[%s1 + $0x70] sm:$0xf]
    %v127 = vld [vmem:[%s1 + $0x74] sm:$0xf]
    %v128 = vld [vmem:[%s1 + $0x78] sm:$0xf]
    %v129 = vld [vmem:[%s1 + $0x7c] sm:$0xf]
    %v130 = vmul.bf16 %v98, 1084244128
    %v131 = vmul.bf16 %v99, 1084244128
    %v132 = vmul.bf16 %v100, 1084244128
    %v133 = vmul.bf16 %v101, 1084244128
    %v134 = vmul.bf16 %v102, 1084244128
    %v135 = vmul.bf16 %v103, 1084244128
    %v136 = vmul.bf16 %v104, 1084244128
    %v137 = vmul.bf16 %v105, 1084244128
    %v138 = vmul.bf16 %v106, 1084244128
    %v139 = vmul.bf16 %v107, 1084244128
    %v140 = vmul.bf16 %v108, 1084244128
    %v141 = vmul.bf16 %v109, 1084244128
    %v142 = vmul.bf16 %v110, 1084244128
    %v143 = vmul.bf16 %v111, 1084244128
    %v144 = vmul.bf16 %v112, 1084244128
    %v145 = vmul.bf16 %v113, 1084244128
    %v146 = vmul.bf16 %v114, 1084244128
    %v147 = vmul.bf16 %v115, 1084244128
    %v148 = vmul.bf16 %v116, 1084244128
    %v149 = vmul.bf16 %v117, 1084244128
    %v150 = vmul.bf16 %v118, 1084244128
    %v151 = vmul.bf16 %v119, 1084244128
    %v152 = vmul.bf16 %v120, 1084244128
    %v153 = vmul.bf16 %v121, 1084244128
    %v154 = vmul.bf16 %v122, 1084244128
    %v155 = vmul.bf16 %v123, 1084244128
    %v156 = vmul.bf16 %v124, 1084244128
    %v157 = vmul.bf16 %v125, 1084244128
    %v158 = vmul.bf16 %v126, 1084244128
    %v159 = vmul.bf16 %v127, 1084244128
    %v160 = vmul.bf16 %v128, 1084244128
    %v161 = vmul.bf16 %v129, 1084244128
    %v162 = vld [vmem:[%s2] sm:$0xf]
    %v163 = vld [vmem:[%s2 + $0x4] sm:$0xf]
    %v164 = vld [vmem:[%s2 + $0x8] sm:$0xf]
    %v165 = vld [vmem:[%s2 + $0xc] sm:$0xf]
    %v166 = vld [vmem:[%s2 + $0x10] sm:$0xf]
    %v167 = vld [vmem:[%s2 + $0x14] sm:$0xf]
    %v168 = vld [vmem:[%s2 + $0x18] sm:$0xf]
    %v169 = vld [vmem:[%s2 + $0x1c] sm:$0xf]
    %v170 = vld [vmem:[%s2 + $0x20] sm:$0xf]
    %v171 = vld [vmem:[%s2 + $0x24] sm:$0xf]
    %v172 = vld [vmem:[%s2 + $0x28] sm:$0xf]
    %v173 = vld [vmem:[%s2 + $0x2c] sm:$0xf]
    %v174 = vld [vmem:[%s2 + $0x30] sm:$0xf]
    %v175 = vld [vmem:[%s2 + $0x34] sm:$0xf]
    %v176 = vld [vmem:[%s2 + $0x38] sm:$0xf]
    %v177 = vld [vmem:[%s2 + $0x3c] sm:$0xf]
    %v178 = vld [vmem:[%s2 + $0x40] sm:$0xf]
    %v179 = vld [vmem:[%s2 + $0x44] sm:$0xf]
    %v180 = vld [vmem:[%s2 + $0x48] sm:$0xf]
    %v181 = vld [vmem:[%s2 + $0x4c] sm:$0xf]
    %v182 = vld [vmem:[%s2 + $0x50] sm:$0xf]
    %v183 = vld [vmem:[%s2 + $0x54] sm:$0xf]
    %v184 = vld [vmem:[%s2 + $0x58] sm:$0xf]
    %v185 = vld [vmem:[%s2 + $0x5c] sm:$0xf]
    %v186 = vld [vmem:[%s2 + $0x60] sm:$0xf]
    %v187 = vld [vmem:[%s2 + $0x64] sm:$0xf]
    %v188 = vld [vmem:[%s2 + $0x68] sm:$0xf]
    %v189 = vld [vmem:[%s2 + $0x6c] sm:$0xf]
    %v190 = vld [vmem:[%s2 + $0x70] sm:$0xf]
    %v191 = vld [vmem:[%s2 + $0x74] sm:$0xf]
    %v192 = vld [vmem:[%s2 + $0x78] sm:$0xf]
    %v193 = vld [vmem:[%s2 + $0x7c] sm:$0xf]
    %v226 = vunpack.c.l.b16 %v130
    %v227 = vunpack.c.l.b16 %v131
    %v228 = vunpack.c.l.b16 %v132
    %v229 = vunpack.c.l.b16 %v133
    %v230 = vunpack.c.l.b16 %v134
    %v231 = vunpack.c.l.b16 %v135
    %v232 = vunpack.c.l.b16 %v136
    %v233 = vunpack.c.l.b16 %v137
    %v234 = vunpack.c.l.b16 %v138
    %v235 = vunpack.c.l.b16 %v139
    %v236 = vunpack.c.l.b16 %v140
    %v237 = vunpack.c.l.b16 %v141
    %v238 = vunpack.c.l.b16 %v142
    %v239 = vunpack.c.l.b16 %v143
    %v240 = vunpack.c.l.b16 %v144
    %v241 = vunpack.c.l.b16 %v145
    %v242 = vunpack.c.l.b16 %v146
    %v243 = vunpack.c.l.b16 %v147
    %v244 = vunpack.c.l.b16 %v148
    %v245 = vunpack.c.l.b16 %v149
    %v246 = vunpack.c.l.b16 %v150
    %v247 = vunpack.c.l.b16 %v151
    %v248 = vunpack.c.l.b16 %v152
    %v249 = vunpack.c.l.b16 %v153
    %v250 = vunpack.c.l.b16 %v154
    %v251 = vunpack.c.l.b16 %v155
    %v252 = vunpack.c.l.b16 %v156
    %v253 = vunpack.c.l.b16 %v157
    %v254 = vunpack.c.l.b16 %v158
    %v255 = vunpack.c.l.b16 %v159
    %v256 = vunpack.c.l.b16 %v160
    %v257 = vunpack.c.l.b16 %v161
    %v258 = vpack.c.b16 %v227, %v226
    %v259 = vpack.c.b16 %v229, %v228
    %v260 = vpack.c.b16 %v231, %v230
    %v261 = vpack.c.b16 %v233, %v232
    %v262 = vpack.c.b16 %v235, %v234
    %v263 = vpack.c.b16 %v237, %v236
    %v264 = vpack.c.b16 %v239, %v238
    %v265 = vpack.c.b16 %v241, %v240
    %v266 = vpack.c.b16 %v243, %v242
    %v267 = vpack.c.b16 %v245, %v244
    %v268 = vpack.c.b16 %v247, %v246
    %v269 = vpack.c.b16 %v249, %v248
    %v270 = vpack.c.b16 %v251, %v250
    %v271 = vpack.c.b16 %v253, %v252
    %v272 = vpack.c.b16 %v255, %v254
    %v273 = vpack.c.b16 %v257, %v256
    %v322 = vunpack.c.l.b16 %v162
    %v323 = vunpack.c.l.b16 %v163
    %v324 = vunpack.c.l.b16 %v164
    %v325 = vunpack.c.l.b16 %v165
    %v326 = vunpack.c.l.b16 %v166
    %v327 = vunpack.c.l.b16 %v167
    %v328 = vunpack.c.l.b16 %v168
    %v329 = vunpack.c.l.b16 %v169
    %v330 = vunpack.c.l.b16 %v170
    %v331 = vunpack.c.l.b16 %v171
    %v332 = vunpack.c.l.b16 %v172
    %v333 = vunpack.c.l.b16 %v173
    %v334 = vunpack.c.l.b16 %v174
    %v335 = vunpack.c.l.b16 %v175
    %v336 = vunpack.c.l.b16 %v176
    %v337 = vunpack.c.l.b16 %v177
    %v338 = vunpack.c.l.b16 %v178
    %v339 = vunpack.c.l.b16 %v179
    %v340 = vunpack.c.l.b16 %v180
    %v341 = vunpack.c.l.b16 %v181
    %v342 = vunpack.c.l.b16 %v182
    %v343 = vunpack.c.l.b16 %v183
    %v344 = vunpack.c.l.b16 %v184
    %v345 = vunpack.c.l.b16 %v185
    %v346 = vunpack.c.l.b16 %v186
    %v347 = vunpack.c.l.b16 %v187
    %v348 = vunpack.c.l.b16 %v188
    %v349 = vunpack.c.l.b16 %v189
    %v350 = vunpack.c.l.b16 %v190
    %v351 = vunpack.c.l.b16 %v191
    %v352 = vunpack.c.l.b16 %v192
    %v353 = vunpack.c.l.b16 %v193
    %v354 = vpack.c.b16 %v323, %v322
    %v355 = vpack.c.b16 %v325, %v324
    %v356 = vpack.c.b16 %v327, %v326
    %v357 = vpack.c.b16 %v329, %v328
    %v358 = vpack.c.b16 %v331, %v330
    %v359 = vpack.c.b16 %v333, %v332
    %v360 = vpack.c.b16 %v335, %v334
    %v361 = vpack.c.b16 %v337, %v336
    %v362 = vpack.c.b16 %v339, %v338
    %v363 = vpack.c.b16 %v341, %v340
    %v364 = vpack.c.b16 %v343, %v342
    %v365 = vpack.c.b16 %v345, %v344
    %v366 = vpack.c.b16 %v347, %v346
    %v367 = vpack.c.b16 %v349, %v348
    %v368 = vpack.c.b16 %v351, %v350
    %v369 = vpack.c.b16 %v353, %v352
    %386 = vmatprep.subr.bf16.mxu0 0
    %387 = vmatpush1.bf16.xpose.msra.mxu0 %v354
    %388 = vmatprep.subr.bf16.mxu0 0
    %389 = vmatpush1.bf16.xpose.msra.mxu0 %v355
    %390 = vmatprep.subr.bf16.mxu0 0
    %391 = vmatpush1.bf16.xpose.msra.mxu0 %v356
    %392 = vmatprep.subr.bf16.mxu0 0
    %393 = vmatpush1.bf16.xpose.msra.mxu0 %v357
    %394 = vmatprep.subr.bf16.mxu0 0
    %395 = vmatpush1.bf16.xpose.msra.mxu0 %v358
    %396 = vmatprep.subr.bf16.mxu0 0
    %397 = vmatpush1.bf16.xpose.msra.mxu0 %v359
    %398 = vmatprep.subr.bf16.mxu0 0
    %399 = vmatpush1.bf16.xpose.msra.mxu0 %v360
    %400 = vmatprep.subr.bf16.mxu0 0
    %401 = vmatpush1.bf16.xpose.msra.mxu0 %v361
    %402 = vmatprep.subr.bf16.mxu0 0
    %403 = vmatpush1.bf16.xpose.msra.mxu0 %v362
    %404 = vmatprep.subr.bf16.mxu0 0
    %405 = vmatpush1.bf16.xpose.msra.mxu0 %v363
    %406 = vmatprep.subr.bf16.mxu0 0
    %407 = vmatpush1.bf16.xpose.msra.mxu0 %v364
    %408 = vmatprep.subr.bf16.mxu0 0
    %409 = vmatpush1.bf16.xpose.msra.mxu0 %v365
    %410 = vmatprep.subr.bf16.mxu0 0
    %411 = vmatpush1.bf16.xpose.msra.mxu0 %v366
    %412 = vmatprep.subr.bf16.mxu0 0
    %413 = vmatpush1.bf16.xpose.msra.mxu0 %v367
    %414 = vmatprep.subr.bf16.mxu0 0
    %415 = vmatpush1.bf16.xpose.msra.mxu0 %v368
    %416 = vmatprep.subr.bf16.mxu0 0
    %417 = vmatpush1.bf16.xpose.msra.mxu0 %v369
    %418 = vmatprep.mubr.bf16.mxu0 0
    %419 = vmatmul.mubr.bf16.gmra.mrb[0].mxu0 %v258
    %v420 = vpop.f32.mrb[0].mxu0
    %v421 = vadd.f32 0.0, %v420
    %v422 = vpop.f32.mrb[0].mxu0
    %v423 = vadd.f32 0.0, %v422
    %v424 = vpop.f32.mrb[0].mxu0
    %v425 = vadd.f32 0.0, %v424
    %v426 = vpop.f32.mrb[0].mxu0
    %v427 = vadd.f32 0.0, %v426
    %428 = vmatprep.mubr.bf16.mxu0 0
    %429 = vmatmul.mubr.bf16.gmra.mrb[0].mxu0 %v259
    %v430 = vpop.f32.mrb[0].mxu0
    %v431 = vadd.f32 0.0, %v430
    %v432 = vpop.f32.mrb[0].mxu0
    %v433 = vadd.f32 0.0, %v432
    %v434 = vpop.f32.mrb[0].mxu0
    %v435 = vadd.f32 0.0, %v434
    %v436 = vpop.f32.mrb[0].mxu0
    %v437 = vadd.f32 0.0, %v436
    %438 = vmatprep.mubr.bf16.mxu0 0
    %439 = vmatmul.mubr.bf16.gmra.mrb[0].mxu0 %v260
    %v440 = vpop.f32.mrb[0].mxu0
    %v441 = vadd.f32 0.0, %v440
    %v442 = vpop.f32.mrb[0].mxu0
    %v443 = vadd.f32 0.0, %v442
    %v444 = vpop.f32.mrb[0].mxu0
    %v445 = vadd.f32 0.0, %v444
    %v446 = vpop.f32.mrb[0].mxu0
    %v447 = vadd.f32 0.0, %v446
    %448 = vmatprep.mubr.bf16.mxu0 0
    %449 = vmatmul.mubr.bf16.gmra.mrb[0].mxu0 %v261
    %v450 = vpop.f32.mrb[0].mxu0
    %v451 = vadd.f32 0.0, %v450
    %v452 = vpop.f32.mrb[0].mxu0
    %v453 = vadd.f32 0.0, %v452
    %v454 = vpop.f32.mrb[0].mxu0
    %v455 = vadd.f32 0.0, %v454
    %v456 = vpop.f32.mrb[0].mxu0
    %v457 = vadd.f32 0.0, %v456
    %458 = vmatprep.mubr.bf16.mxu0 0
    %459 = vmatmul.mubr.bf16.gmra.mrb[0].mxu0 %v262
    %v460 = vpop.f32.mrb[0].mxu0
    %v461 = vadd.f32 0.0, %v460
    %v462 = vpop.f32.mrb[0].mxu0
    %v463 = vadd.f32 0.0, %v462
    %v464 = vpop.f32.mrb[0].mxu0
    %v465 = vadd.f32 0.0, %v464
    %v466 = vpop.f32.mrb[0].mxu0
    %v467 = vadd.f32 0.0, %v466
    %468 = vmatprep.mubr.bf16.mxu0 0
    %469 = vmatmul.mubr.bf16.gmra.mrb[0].mxu0 %v263
    %v470 = vpop.f32.mrb[0].mxu0
    %v471 = vadd.f32 0.0, %v470
    %v472 = vpop.f32.mrb[0].mxu0
    %v473 = vadd.f32 0.0, %v472
    %v474 = vpop.f32.mrb[0].mxu0
    %v475 = vadd.f32 0.0, %v474
    %v476 = vpop.f32.mrb[0].mxu0
    %v477 = vadd.f32 0.0, %v476
    %478 = vmatprep.mubr.bf16.mxu0 0
    %479 = vmatmul.mubr.bf16.gmra.mrb[0].mxu0 %v264
    %v480 = vpop.f32.mrb[0].mxu0
    %v481 = vadd.f32 0.0, %v480
    %v482 = vpop.f32.mrb[0].mxu0
    %v483 = vadd.f32 0.0, %v482
    %v484 = vpop.f32.mrb[0].mxu0
    %v485 = vadd.f32 0.0, %v484
    %v486 = vpop.f32.mrb[0].mxu0
    %v487 = vadd.f32 0.0, %v486
    %488 = vmatprep.mubr.bf16.mxu0 0
    %489 = vmatmul.mubr.bf16.gmra.mrb[0].mxu0 %v265
    %v490 = vpop.f32.mrb[0].mxu0
    %v491 = vadd.f32 0.0, %v490
    %v492 = vpop.f32.mrb[0].mxu0
    %v493 = vadd.f32 0.0, %v492
    %v494 = vpop.f32.mrb[0].mxu0
    %v495 = vadd.f32 0.0, %v494
    %v496 = vpop.f32.mrb[0].mxu0
    %v497 = vadd.f32 0.0, %v496
    %498 = vmatprep.mubr.bf16.mxu0 0
    %499 = vmatmul.mubr.bf16.gmra.mrb[0].mxu0 %v266
    %v500 = vpop.f32.mrb[0].mxu0
    %v501 = vadd.f32 0.0, %v500
    %v502 = vpop.f32.mrb[0].mxu0
    %v503 = vadd.f32 0.0, %v502
    %v504 = vpop.f32.mrb[0].mxu0
    %v505 = vadd.f32 0.0, %v504
    %v506 = vpop.f32.mrb[0].mxu0
    %v507 = vadd.f32 0.0, %v506
    %508 = vmatprep.mubr.bf16.mxu0 0
    %509 = vmatmul.mubr.bf16.gmra.mrb[0].mxu0 %v267
    %v510 = vpop.f32.mrb[0].mxu0
    %v511 = vadd.f32 0.0, %v510
    %v512 = vpop.f32.mrb[0].mxu0
    %v513 = vadd.f32 0.0, %v512
    %v514 = vpop.f32.mrb[0].mxu0
    %v515 = vadd.f32 0.0, %v514
    %v516 = vpop.f32.mrb[0].mxu0
    %v517 = vadd.f32 0.0, %v516
    %518 = vmatprep.mubr.bf16.mxu0 0
    %519 = vmatmul.mubr.bf16.gmra.mrb[0].mxu0 %v268
    %v520 = vpop.f32.mrb[0].mxu0
    %v521 = vadd.f32 0.0, %v520
    %v522 = vpop.f32.mrb[0].mxu0
    %v523 = vadd.f32 0.0, %v522
    %v524 = vpop.f32.mrb[0].mxu0
    %v525 = vadd.f32 0.0, %v524
    %v526 = vpop.f32.mrb[0].mxu0
    %v527 = vadd.f32 0.0, %v526
    %528 = vmatprep.mubr.bf16.mxu0 0
    %529 = vmatmul.mubr.bf16.gmra.mrb[0].mxu0 %v269
    %v530 = vpop.f32.mrb[0].mxu0
    %v531 = vadd.f32 0.0, %v530
    %v532 = vpop.f32.mrb[0].mxu0
    %v533 = vadd.f32 0.0, %v532
    %v534 = vpop.f32.mrb[0].mxu0
    %v535 = vadd.f32 0.0, %v534
    %v536 = vpop.f32.mrb[0].mxu0
    %v537 = vadd.f32 0.0, %v536
    %538 = vmatprep.mubr.bf16.mxu0 0
    %539 = vmatmul.mubr.bf16.gmra.mrb[0].mxu0 %v270
    %v540 = vpop.f32.mrb[0].mxu0
    %v541 = vadd.f32 0.0, %v540
    %v542 = vpop.f32.mrb[0].mxu0
    %v543 = vadd.f32 0.0, %v542
    %v544 = vpop.f32.mrb[0].mxu0
    %v545 = vadd.f32 0.0, %v544
    %v546 = vpop.f32.mrb[0].mxu0
    %v547 = vadd.f32 0.0, %v546
    %548 = vmatprep.mubr.bf16.mxu0 0
    %549 = vmatmul.mubr.bf16.gmra.mrb[0].mxu0 %v271
    %v550 = vpop.f32.mrb[0].mxu0
    %v551 = vadd.f32 0.0, %v550
    %v552 = vpop.f32.mrb[0].mxu0
    %v553 = vadd.f32 0.0, %v552
    %v554 = vpop.f32.mrb[0].mxu0
    %v555 = vadd.f32 0.0, %v554
    %v556 = vpop.f32.mrb[0].mxu0
    %v557 = vadd.f32 0.0, %v556
    %558 = vmatprep.mubr.bf16.mxu0 0
    %559 = vmatmul.mubr.bf16.gmra.mrb[0].mxu0 %v272
    %v560 = vpop.f32.mrb[0].mxu0
    %v561 = vadd.f32 0.0, %v560
    %v562 = vpop.f32.mrb[0].mxu0
    %v563 = vadd.f32 0.0, %v562
    %v564 = vpop.f32.mrb[0].mxu0
    %v565 = vadd.f32 0.0, %v564
    %v566 = vpop.f32.mrb[0].mxu0
    %v567 = vadd.f32 0.0, %v566
    %568 = vmatprep.mubr.bf16.mxu0 0
    %569 = vmatmul.mubr.bf16.gmra.mrb[0].mxu0 %v273
    %v570 = vpop.f32.mrb[0].mxu0
    %v571 = vadd.f32 0.0, %v570
    %v572 = vpop.f32.mrb[0].mxu0
    %v573 = vadd.f32 0.0, %v572
    %v574 = vpop.f32.mrb[0].mxu0
    %v575 = vadd.f32 0.0, %v574
    %v576 = vpop.f32.mrb[0].mxu0
    %v577 = vadd.f32 0.0, %v576
    %578 = vdwg.mxu0
    %v579 = vmul.f32 %v421, 1.442695
    %v580 = vpow.pop %v579
    %v581 = vmul.f32 %v423, 1.442695
    %v582 = vpow.pop %v581
    %v583 = vmul.f32 %v425, 1.442695
    %v584 = vpow.pop %v583
    %v585 = vmul.f32 %v427, 1.442695
    %v586 = vpow.pop %v585
    %v587 = vmul.f32 %v431, 1.442695
    %v588 = vpow.pop %v587
    %v589 = vmul.f32 %v433, 1.442695
    %v590 = vpow.pop %v589
    %v591 = vmul.f32 %v435, 1.442695
    %v592 = vpow.pop %v591
    %v593 = vmul.f32 %v437, 1.442695
    %v594 = vpow.pop %v593
    %v595 = vmul.f32 %v441, 1.442695
    %v596 = vpow.pop %v595
    %v597 = vmul.f32 %v443, 1.442695
    %v598 = vpow.pop %v597
    %v599 = vmul.f32 %v445, 1.442695
    %v600 = vpow.pop %v599
    %v601 = vmul.f32 %v447, 1.442695
    %v602 = vpow.pop %v601
    %v603 = vmul.f32 %v451, 1.442695
    %v604 = vpow.pop %v603
    %v605 = vmul.f32 %v453, 1.442695
    %v606 = vpow.pop %v605
    %v607 = vmul.f32 %v455, 1.442695
    %v608 = vpow.pop %v607
    %v609 = vmul.f32 %v457, 1.442695
    %v610 = vpow.pop %v609
    %v611 = vmul.f32 %v461, 1.442695
    %v612 = vpow.pop %v611
    %v613 = vmul.f32 %v463, 1.442695
    %v614 = vpow.pop %v613
    %v615 = vmul.f32 %v465, 1.442695
    %v616 = vpow.pop %v615
    %v617 = vmul.f32 %v467, 1.442695
    %v618 = vpow.pop %v617
    %v619 = vmul.f32 %v471, 1.442695
    %v620 = vpow.pop %v619
    %v621 = vmul.f32 %v473, 1.442695
    %v622 = vpow.pop %v621
    %v623 = vmul.f32 %v475, 1.442695
    %v624 = vpow.pop %v623
    %v625 = vmul.f32 %v477, 1.442695
    %v626 = vpow.pop %v625
    %v627 = vmul.f32 %v481, 1.442695
    %v628 = vpow.pop %v627
    %v629 = vmul.f32 %v483, 1.442695
    %v630 = vpow.pop %v629
    %v631 = vmul.f32 %v485, 1.442695
    %v632 = vpow.pop %v631
    %v633 = vmul.f32 %v487, 1.442695
    %v634 = vpow.pop %v633
    %v635 = vmul.f32 %v491, 1.442695
    %v636 = vpow.pop %v635
    %v637 = vmul.f32 %v493, 1.442695
    %v638 = vpow.pop %v637
    %v639 = vmul.f32 %v495, 1.442695
    %v640 = vpow.pop %v639
    %v641 = vmul.f32 %v497, 1.442695
    %v642 = vpow.pop %v641
    %v643 = vmul.f32 %v501, 1.442695
    %v644 = vpow.pop %v643
    %v645 = vmul.f32 %v503, 1.442695
    %v646 = vpow.pop %v645
    %v647 = vmul.f32 %v505, 1.442695
    %v648 = vpow.pop %v647
    %v649 = vmul.f32 %v507, 1.442695
    %v650 = vpow.pop %v649
    %v651 = vmul.f32 %v511, 1.442695
    %v652 = vpow.pop %v651
    %v653 = vmul.f32 %v513, 1.442695
    %v654 = vpow.pop %v653
    %v655 = vmul.f32 %v515, 1.442695
    %v656 = vpow.pop %v655
    %v657 = vmul.f32 %v517, 1.442695
    %v658 = vpow.pop %v657
    %v659 = vmul.f32 %v521, 1.442695
    %v660 = vpow.pop %v659
    %v661 = vmul.f32 %v523, 1.442695
    %v662 = vpow.pop %v661
    %v663 = vmul.f32 %v525, 1.442695
    %v664 = vpow.pop %v663
    %v665 = vmul.f32 %v527, 1.442695
    %v666 = vpow.pop %v665
    %v667 = vmul.f32 %v531, 1.442695
    %v668 = vpow.pop %v667
    %v669 = vmul.f32 %v533, 1.442695
    %v670 = vpow.pop %v669
    %v671 = vmul.f32 %v535, 1.442695
    %v672 = vpow.pop %v671
    %v673 = vmul.f32 %v537, 1.442695
    %v674 = vpow.pop %v673
    %v675 = vmul.f32 %v541, 1.442695
    %v676 = vpow.pop %v675
    %v677 = vmul.f32 %v543, 1.442695
    %v678 = vpow.pop %v677
    %v679 = vmul.f32 %v545, 1.442695
    %v680 = vpow.pop %v679
    %v681 = vmul.f32 %v547, 1.442695
    %v682 = vpow.pop %v681
    %v683 = vmul.f32 %v551, 1.442695
    %v684 = vpow.pop %v683
    %v685 = vmul.f32 %v553, 1.442695
    %v686 = vpow.pop %v685
    %v687 = vmul.f32 %v555, 1.442695
    %v688 = vpow.pop %v687
    %v689 = vmul.f32 %v557, 1.442695
    %v690 = vpow.pop %v689
    %v691 = vmul.f32 %v561, 1.442695
    %v692 = vpow.pop %v691
    %v693 = vmul.f32 %v563, 1.442695
    %v694 = vpow.pop %v693
    %v695 = vmul.f32 %v565, 1.442695
    %v696 = vpow.pop %v695
    %v697 = vmul.f32 %v567, 1.442695
    %v698 = vpow.pop %v697
    %v699 = vmul.f32 %v571, 1.442695
    %v700 = vpow.pop %v699
    %v701 = vmul.f32 %v573, 1.442695
    %v702 = vpow.pop %v701
    %v703 = vmul.f32 %v575, 1.442695
    %v704 = vpow.pop %v703
    %v705 = vmul.f32 %v577, 1.442695
    %v706 = vpow.pop %v705
    %v707 = vld [vmem:[%s4] sm:$0xff]
    %v708 = vld [vmem:[%s4 + $0x8] sm:$0xff]
    %v709 = vld [vmem:[%s4 + $0x10] sm:$0xff]
    %v710 = vld [vmem:[%s4 + $0x18] sm:$0xff]
    %v711 = vld [vmem:[%s4 + $0x20] sm:$0xff]
    %v712 = vld [vmem:[%s4 + $0x28] sm:$0xff]
    %v713 = vld [vmem:[%s4 + $0x30] sm:$0xff]
    %v714 = vld [vmem:[%s4 + $0x38] sm:$0xff]
    %v715 = vld [vmem:[%s4 + $0x40] sm:$0xff]
    %v716 = vld [vmem:[%s4 + $0x48] sm:$0xff]
    %v717 = vld [vmem:[%s4 + $0x50] sm:$0xff]
    %v718 = vld [vmem:[%s4 + $0x58] sm:$0xff]
    %v719 = vld [vmem:[%s4 + $0x60] sm:$0xff]
    %v720 = vld [vmem:[%s4 + $0x68] sm:$0xff]
    %v721 = vld [vmem:[%s4 + $0x70] sm:$0xff]
    %v722 = vld [vmem:[%s4 + $0x78] sm:$0xff]
    %v723 = vld [vmem:[%s4 + $0x80] sm:$0xff]
    %v724 = vld [vmem:[%s4 + $0x88] sm:$0xff]
    %v725 = vld [vmem:[%s4 + $0x90] sm:$0xff]
    %v726 = vld [vmem:[%s4 + $0x98] sm:$0xff]
    %v727 = vld [vmem:[%s4 + $0xa0] sm:$0xff]
    %v728 = vld [vmem:[%s4 + $0xa8] sm:$0xff]
    %v729 = vld [vmem:[%s4 + $0xb0] sm:$0xff]
    %v730 = vld [vmem:[%s4 + $0xb8] sm:$0xff]
    %v731 = vld [vmem:[%s4 + $0xc0] sm:$0xff]
    %v732 = vld [vmem:[%s4 + $0xc8] sm:$0xff]
    %v733 = vld [vmem:[%s4 + $0xd0] sm:$0xff]
    %v734 = vld [vmem:[%s4 + $0xd8] sm:$0xff]
    %v735 = vld [vmem:[%s4 + $0xe0] sm:$0xff]
    %v736 = vld [vmem:[%s4 + $0xe8] sm:$0xff]
    %v737 = vld [vmem:[%s4 + $0xf0] sm:$0xff]
    %v738 = vld [vmem:[%s4 + $0xf8] sm:$0xff]
    %v739 = vld [vmem:[#allocation2] sm:$0xff]
    %v740 = vld [vmem:[#allocation2 + $0x8] sm:$0xff]
    %v741 = vld [vmem:[#allocation2 + $0x10] sm:$0xff]
    %v742 = vld [vmem:[#allocation2 + $0x18] sm:$0xff]
    %v743 = vld [vmem:[#allocation2 + $0x20] sm:$0xff]
    %v744 = vld [vmem:[#allocation2 + $0x28] sm:$0xff]
    %v745 = vld [vmem:[#allocation2 + $0x30] sm:$0xff]
    %v746 = vld [vmem:[#allocation2 + $0x38] sm:$0xff]
    %v747 = vld [vmem:[#allocation2 + $0x40] sm:$0xff]
    %v748 = vld [vmem:[#allocation2 + $0x48] sm:$0xff]
    %v749 = vld [vmem:[#allocation2 + $0x50] sm:$0xff]
    %v750 = vld [vmem:[#allocation2 + $0x58] sm:$0xff]
    %v751 = vld [vmem:[#allocation2 + $0x60] sm:$0xff]
    %v752 = vld [vmem:[#allocation2 + $0x68] sm:$0xff]
    %v753 = vld [vmem:[#allocation2 + $0x70] sm:$0xff]
    %v754 = vld [vmem:[#allocation2 + $0x78] sm:$0xff]
    %v755 = vld [vmem:[#allocation2 + $0x80] sm:$0xff]
    %v756 = vld [vmem:[#allocation2 + $0x88] sm:$0xff]
    %v757 = vld [vmem:[#allocation2 + $0x90] sm:$0xff]
    %v758 = vld [vmem:[#allocation2 + $0x98] sm:$0xff]
    %v759 = vld [vmem:[#allocation2 + $0xa0] sm:$0xff]
    %v760 = vld [vmem:[#allocation2 + $0xa8] sm:$0xff]
    %v761 = vld [vmem:[#allocation2 + $0xb0] sm:$0xff]
    %v762 = vld [vmem:[#allocation2 + $0xb8] sm:$0xff]
    %v763 = vld [vmem:[#allocation2 + $0xc0] sm:$0xff]
    %v764 = vld [vmem:[#allocation2 + $0xc8] sm:$0xff]
    %v765 = vld [vmem:[#allocation2 + $0xd0] sm:$0xff]
    %v766 = vld [vmem:[#allocation2 + $0xd8] sm:$0xff]
    %v767 = vld [vmem:[#allocation2 + $0xe0] sm:$0xff]
    %v768 = vld [vmem:[#allocation2 + $0xe8] sm:$0xff]
    %v769 = vld [vmem:[#allocation2 + $0xf0] sm:$0xff]
    %v770 = vld [vmem:[#allocation2 + $0xf8] sm:$0xff]
    %771 = vmatprep.subr.mxu0 0.0
    %772 = vmatpush1.msra.mxu0 %v707
    %773 = vmatprep.subr.mxu0 0.0
    %774 = vmatpush1.msra.mxu0 %v708
    %775 = vmatprep.subr.mxu0 0.0
    %776 = vmatpush1.msra.mxu0 %v709
    %777 = vmatprep.subr.mxu0 0.0
    %778 = vmatpush1.msra.mxu0 %v710
    %779 = vmatprep.subr.mxu0 0.0
    %780 = vmatpush1.msra.mxu0 %v711
    %781 = vmatprep.subr.mxu0 0.0
    %782 = vmatpush1.msra.mxu0 %v712
    %783 = vmatprep.subr.mxu0 0.0
    %784 = vmatpush1.msra.mxu0 %v713
    %785 = vmatprep.subr.mxu0 0.0
    %786 = vmatpush1.msra.mxu0 %v714
    %787 = vmatprep.subr.mxu0 0.0
    %788 = vmatpush1.msra.mxu0 %v715
    %789 = vmatprep.subr.mxu0 0.0
    %790 = vmatpush1.msra.mxu0 %v716
    %791 = vmatprep.subr.mxu0 0.0
    %792 = vmatpush1.msra.mxu0 %v717
    %793 = vmatprep.subr.mxu0 0.0
    %794 = vmatpush1.msra.mxu0 %v718
    %795 = vmatprep.subr.mxu0 0.0
    %796 = vmatpush1.msra.mxu0 %v719
    %797 = vmatprep.subr.mxu0 0.0
    %798 = vmatpush1.msra.mxu0 %v720
    %799 = vmatprep.subr.mxu0 0.0
    %800 = vmatpush1.msra.mxu0 %v721
    %801 = vmatprep.subr.mxu0 0.0
    %802 = vmatpush1.msra.mxu0 %v722
    %803 = vmatprep.subr.mxu0 0.0
    %804 = vmatpush1.msra.mxu0 %v723
    %805 = vmatprep.subr.mxu0 0.0
    %806 = vmatpush1.msra.mxu0 %v724
    %807 = vmatprep.subr.mxu0 0.0
    %808 = vmatpush1.msra.mxu0 %v725
    %809 = vmatprep.subr.mxu0 0.0
    %810 = vmatpush1.msra.mxu0 %v726
    %811 = vmatprep.subr.mxu0 0.0
    %812 = vmatpush1.msra.mxu0 %v727
    %813 = vmatprep.subr.mxu0 0.0
    %814 = vmatpush1.msra.mxu0 %v728
    %815 = vmatprep.subr.mxu0 0.0
    %816 = vmatpush1.msra.mxu0 %v729
    %817 = vmatprep.subr.mxu0 0.0
    %818 = vmatpush1.msra.mxu0 %v730
    %819 = vmatprep.subr.mxu0 0.0
    %820 = vmatpush1.msra.mxu0 %v731
    %821 = vmatprep.subr.mxu0 0.0
    %822 = vmatpush1.msra.mxu0 %v732
    %823 = vmatprep.subr.mxu0 0.0
    %824 = vmatpush1.msra.mxu0 %v733
    %825 = vmatprep.subr.mxu0 0.0
    %826 = vmatpush1.msra.mxu0 %v734
    %827 = vmatprep.subr.mxu0 0.0
    %828 = vmatpush1.msra.mxu0 %v735
    %829 = vmatprep.subr.mxu0 0.0
    %830 = vmatpush1.msra.mxu0 %v736
    %831 = vmatprep.subr.mxu0 0.0
    %832 = vmatpush1.msra.mxu0 %v737
    %833 = vmatprep.subr.mxu0 0.0
    %834 = vmatpush1.msra.mxu0 %v738
    %835 = vmatprep.mubr.f32.mxu0 %v423
    %836 = vmatmul.mubr.f32.gmra.mrb[0].mxu0 %v421
    %v837 = vpop.f32.mrb[0].mxu0
    %v838 = vadd.f32 0.0, %v837
    %v839 = vpop.f32.mrb[0].mxu0
    %840 = vmatprep.mubr.f32.mxu0 %v427
    %841 = vmatmul.mubr.f32.gmra.mrb[0].mxu0 %v425
    %v842 = vpop.f32.mrb[0].mxu0
    %v843 = vadd.f32 0.0, %v842
    %v844 = vpop.f32.mrb[0].mxu0
    %845 = vmatprep.mubr.f32.mxu0 %v433
    %846 = vmatmul.mubr.f32.gmra.mrb[0].mxu0 %v431
    %v847 = vpop.f32.mrb[0].mxu0
    %v848 = vadd.f32 0.0, %v847
    %v849 = vpop.f32.mrb[0].mxu0
    %850 = vmatprep.mubr.f32.mxu0 %v437
    %851 = vmatmul.mubr.f32.gmra.mrb[0].mxu0 %v435
    %v852 = vpop.f32.mrb[0].mxu0
    %v853 = vadd.f32 0.0, %v852
    %v854 = vpop.f32.mrb[0].mxu0
    %855 = vmatprep.mubr.f32.mxu0 %v443
    %856 = vmatmul.mubr.f32.gmra.mrb[0].mxu0 %v441
    %v857 = vpop.f32.mrb[0].mxu0
    %v858 = vadd.f32 0.0, %v857
    %v859 = vpop.f32.mrb[0].mxu0
    %860 = vmatprep.mubr.f32.mxu0 %v447
    %861 = vmatmul.mubr.f32.gmra.mrb[0].mxu0 %v445
    %v862 = vpop.f32.mrb[0].mxu0
    %v863 = vadd.f32 0.0, %v862
    %v864 = vpop.f32.mrb[0].mxu0
    %865 = vmatprep.mubr.f32.mxu0 %v453
    %866 = vmatmul.mubr.f32.gmra.mrb[0].mxu0 %v451
    %v867 = vpop.f32.mrb[0].mxu0
    %v868 = vadd.f32 0.0, %v867
    %v869 = vpop.f32.mrb[0].mxu0
    %870 = vmatprep.mubr.f32.mxu0 %v457
    %871 = vmatmul.mubr.f32.gmra.mrb[0].mxu0 %v455
    %v872 = vpop.f32.mrb[0].mxu0
    %v873 = vadd.f32 0.0, %v872
    %v874 = vpop.f32.mrb[0].mxu0
    %875 = vmatprep.mubr.f32.mxu0 %v463
    %876 = vmatmul.mubr.f32.gmra.mrb[0].mxu0 %v461
    %v877 = vpop.f32.mrb[0].mxu0
    %v878 = vadd.f32 0.0, %v877
    %v879 = vpop.f32.mrb[0].mxu0
    %880 = vmatprep.mubr.f32.mxu0 %v467
    %881 = vmatmul.mubr.f32.gmra.mrb[0].mxu0 %v465
    %v882 = vpop.f32.mrb[0].mxu0
    %v883 = vadd.f32 0.0, %v882
    %v884 = vpop.f32.mrb[0].mxu0
    %885 = vmatprep.mubr.f32.mxu0 %v473
    %886 = vmatmul.mubr.f32.gmra.mrb[0].mxu0 %v471
    %v887 = vpop.f32.mrb[0].mxu0
    %v888 = vadd.f32 0.0, %v887
    %v889 = vpop.f32.mrb[0].mxu0
    %890 = vmatprep.mubr.f32.mxu0 %v477
    %891 = vmatmul.mubr.f32.gmra.mrb[0].mxu0 %v475
    %v892 = vpop.f32.mrb[0].mxu0
    %v893 = vadd.f32 0.0, %v892
    %v894 = vpop.f32.mrb[0].mxu0
    %895 = vmatprep.mubr.f32.mxu0 %v483
    %896 = vmatmul.mubr.f32.gmra.mrb[0].mxu0 %v481
    %v897 = vpop.f32.mrb[0].mxu0
    %v898 = vadd.f32 0.0, %v897
    %v899 = vpop.f32.mrb[0].mxu0
    %900 = vmatprep.mubr.f32.mxu0 %v487
    %901 = vmatmul.mubr.f32.gmra.mrb[0].mxu0 %v485
    %v902 = vpop.f32.mrb[0].mxu0
    %v903 = vadd.f32 0.0, %v902
    %v904 = vpop.f32.mrb[0].mxu0
    %905 = vmatprep.mubr.f32.mxu0 %v493
    %906 = vmatmul.mubr.f32.gmra.mrb[0].mxu0 %v491
    %v907 = vpop.f32.mrb[0].mxu0
    %v908 = vadd.f32 0.0, %v907
    %v909 = vpop.f32.mrb[0].mxu0
    %910 = vmatprep.mubr.f32.mxu0 %v497
    %911 = vmatmul.mubr.f32.gmra.mrb[0].mxu0 %v495
    %v912 = vpop.f32.mrb[0].mxu0
    %v913 = vadd.f32 0.0, %v912
    %v914 = vpop.f32.mrb[0].mxu0
    %915 = vmatprep.mubr.f32.mxu0 %v503
    %916 = vmatmul.mubr.f32.gmra.mrb[0].mxu0 %v501
    %v917 = vpop.f32.mrb[0].mxu0
    %v918 = vadd.f32 0.0, %v917
    %v919 = vpop.f32.mrb[0].mxu0
    %920 = vmatprep.mubr.f32.mxu0 %v507
    %921 = vmatmul.mubr.f32.gmra.mrb[0].mxu0 %v505
    %v922 = vpop.f32.mrb[0].mxu0
    %v923 = vadd.f32 0.0, %v922
    %v924 = vpop.f32.mrb[0].mxu0
    %925 = vmatprep.mubr.f32.mxu0 %v513
    %926 = vmatmul.mubr.f32.gmra.mrb[0].mxu0 %v511
    %v927 = vpop.f32.mrb[0].mxu0
    %v928 = vadd.f32 0.0, %v927
    %v929 = vpop.f32.mrb[0].mxu0
    %930 = vmatprep.mubr.f32.mxu0 %v517
    %931 = vmatmul.mubr.f32.gmra.mrb[0].mxu0 %v515
    %v932 = vpop.f32.mrb[0].mxu0
    %v933 = vadd.f32 0.0, %v932
    %v934 = vpop.f32.mrb[0].mxu0
    %935 = vmatprep.mubr.f32.mxu0 %v523
    %936 = vmatmul.mubr.f32.gmra.mrb[0].mxu0 %v521
    %v937 = vpop.f32.mrb[0].mxu0
    %v938 = vadd.f32 0.0, %v937
    %v939 = vpop.f32.mrb[0].mxu0
    %940 = vmatprep.mubr.f32.mxu0 %v527
    %941 = vmatmul.mubr.f32.gmra.mrb[0].mxu0 %v525
    %v942 = vpop.f32.mrb[0].mxu0
    %v943 = vadd.f32 0.0, %v942
    %v944 = vpop.f32.mrb[0].mxu0
    %945 = vmatprep.mubr.f32.mxu0 %v533
    %946 = vmatmul.mubr.f32.gmra.mrb[0].mxu0 %v531
    %v947 = vpop.f32.mrb[0].mxu0
    %v948 = vadd.f32 0.0, %v947
    %v949 = vpop.f32.mrb[0].mxu0
    %950 = vmatprep.mubr.f32.mxu0 %v537
    %951 = vmatmul.mubr.f32.gmra.mrb[0].mxu0 %v535
    %v952 = vpop.f32.mrb[0].mxu0
    %v953 = vadd.f32 0.0, %v952
    %v954 = vpop.f32.mrb[0].mxu0
    %955 = vmatprep.mubr.f32.mxu0 %v543
    %956 = vmatmul.mubr.f32.gmra.mrb[0].mxu0 %v541
    %v957 = vpop.f32.mrb[0].mxu0
    %v958 = vadd.f32 0.0, %v957
    %v959 = vpop.f32.mrb[0].mxu0
    %960 = vmatprep.mubr.f32.mxu0 %v547
    %961 = vmatmul.mubr.f32.gmra.mrb[0].mxu0 %v545
    %v962 = vpop.f32.mrb[0].mxu0
    %v963 = vadd.f32 0.0, %v962
    %v964 = vpop.f32.mrb[0].mxu0
    %965 = vmatprep.mubr.f32.mxu0 %v553
    %966 = vmatmul.mubr.f32.gmra.mrb[0].mxu0 %v551
    %v967 = vpop.f32.mrb[0].mxu0
    %v968 = vadd.f32 0.0, %v967
    %v969 = vpop.f32.mrb[0].mxu0
    %970 = vmatprep.mubr.f32.mxu0 %v557
    %971 = vmatmul.mubr.f32.gmra.mrb[0].mxu0 %v555
    %v972 = vpop.f32.mrb[0].mxu0
    %v973 = vadd.f32 0.0, %v972
    %v974 = vpop.f32.mrb[0].mxu0
    %975 = vmatprep.mubr.f32.mxu0 %v563
    %976 = vmatmul.mubr.f32.gmra.mrb[0].mxu0 %v561
    %v977 = vpop.f32.mrb[0].mxu0
    %v978 = vadd.f32 0.0, %v977
    %v979 = vpop.f32.mrb[0].mxu0
    %980 = vmatprep.mubr.f32.mxu0 %v567
    %981 = vmatmul.mubr.f32.gmra.mrb[0].mxu0 %v565
    %v982 = vpop.f32.mrb[0].mxu0
    %v983 = vadd.f32 0.0, %v982
    %v984 = vpop.f32.mrb[0].mxu0
    %985 = vmatprep.mubr.f32.mxu0 %v573
    %986 = vmatmul.mubr.f32.gmra.mrb[0].mxu0 %v571
    %v987 = vpop.f32.mrb[0].mxu0
    %v988 = vadd.f32 0.0, %v987
    %v989 = vpop.f32.mrb[0].mxu0
    %990 = vmatprep.mubr.f32.mxu0 %v577
    %991 = vmatmul.mubr.f32.gmra.mrb[0].mxu0 %v575
    %v992 = vpop.f32.mrb[0].mxu0
    %v993 = vadd.f32 0.0, %v992
    %v994 = vpop.f32.mrb[0].mxu0
    %995 = vdwg.mxu0
    %v996 = vadd.f32 %v739, %v838
    %v997 = vadd.f32 %v740, %v843
    %v998 = vadd.f32 %v741, %v848
    %v999 = vadd.f32 %v742, %v853
    %v1000 = vadd.f32 %v743, %v858
    %v1001 = vadd.f32 %v744, %v863
    %v1002 = vadd.f32 %v745, %v868
    %v1003 = vadd.f32 %v746, %v873
    %v1004 = vadd.f32 %v747, %v878
    %v1005 = vadd.f32 %v748, %v883
    %v1006 = vadd.f32 %v749, %v888
    %v1007 = vadd.f32 %v750, %v893
    %v1008 = vadd.f32 %v751, %v898
    %v1009 = vadd.f32 %v752, %v903
    %v1010 = vadd.f32 %v753, %v908
    %v1011 = vadd.f32 %v754, %v913
    %v1012 = vadd.f32 %v755, %v918
    %v1013 = vadd.f32 %v756, %v923
    %v1014 = vadd.f32 %v757, %v928
    %v1015 = vadd.f32 %v758, %v933
    %v1016 = vadd.f32 %v759, %v938
    %v1017 = vadd.f32 %v760, %v943
    %v1018 = vadd.f32 %v761, %v948
    %v1019 = vadd.f32 %v762, %v953
    %v1020 = vadd.f32 %v763, %v958
    %v1021 = vadd.f32 %v764, %v963
    %v1022 = vadd.f32 %v765, %v968
    %v1023 = vadd.f32 %v766, %v973
    %v1024 = vadd.f32 %v767, %v978
    %v1025 = vadd.f32 %v768, %v983
    %v1026 = vadd.f32 %v769, %v988
    %v1027 = vadd.f32 %v770, %v993
    %vm1028 = vcmask 7168
    %1029 = vst.msk [vmem:[#allocation2] sm:$0xff] %vm1028, %v996
    %1030 = vst.msk [vmem:[#allocation2 + $0x8] sm:$0xff] %vm1028, %v997
    %1031 = vst.msk [vmem:[#allocation2 + $0x10] sm:$0xff] %vm1028, %v998
    %1032 = vst.msk [vmem:[#allocation2 + $0x18] sm:$0xff] %vm1028, %v999
    %1033 = vst.msk [vmem:[#allocation2 + $0x20] sm:$0xff] %vm1028, %v1000
    %1034 = vst.msk [vmem:[#allocation2 + $0x28] sm:$0xff] %vm1028, %v1001
    %1035 = vst.msk [vmem:[#allocation2 + $0x30] sm:$0xff] %vm1028, %v1002
    %1036 = vst.msk [vmem:[#allocation2 + $0x38] sm:$0xff] %vm1028, %v1003
    %1037 = vst.msk [vmem:[#allocation2 + $0x40] sm:$0xff] %vm1028, %v1004
    %1038 = vst.msk [vmem:[#allocation2 + $0x48] sm:$0xff] %vm1028, %v1005
    %1039 = vst.msk [vmem:[#allocation2 + $0x50] sm:$0xff] %vm1028, %v1006
    %1040 = vst.msk [vmem:[#allocation2 + $0x58] sm:$0xff] %vm1028, %v1007
    %1041 = vst.msk [vmem:[#allocation2 + $0x60] sm:$0xff] %vm1028, %v1008
    %1042 = vst.msk [vmem:[#allocation2 + $0x68] sm:$0xff] %vm1028, %v1009
    %1043 = vst.msk [vmem:[#allocation2 + $0x70] sm:$0xff] %vm1028, %v1010
    %1044 = vst.msk [vmem:[#allocation2 + $0x78] sm:$0xff] %vm1028, %v1011
    %1045 = vst.msk [vmem:[#allocation2 + $0x80] sm:$0xff] %vm1028, %v1012
    %1046 = vst.msk [vmem:[#allocation2 + $0x88] sm:$0xff] %vm1028, %v1013
    %1047 = vst.msk [vmem:[#allocation2 + $0x90] sm:$0xff] %vm1028, %v1014
    %1048 = vst.msk [vmem:[#allocation2 + $0x98] sm:$0xff] %vm1028, %v1015
    %1049 = vst.msk [vmem:[#allocation2 + $0xa0] sm:$0xff] %vm1028, %v1016
    %1050 = vst.msk [vmem:[#allocation2 + $0xa8] sm:$0xff] %vm1028, %v1017
    %1051 = vst.msk [vmem:[#allocation2 + $0xb0] sm:$0xff] %vm1028, %v1018
    %1052 = vst.msk [vmem:[#allocation2 + $0xb8] sm:$0xff] %vm1028, %v1019
    %1053 = vst.msk [vmem:[#allocation2 + $0xc0] sm:$0xff] %vm1028, %v1020
    %1054 = vst.msk [vmem:[#allocation2 + $0xc8] sm:$0xff] %vm1028, %v1021
    %1055 = vst.msk [vmem:[#allocation2 + $0xd0] sm:$0xff] %vm1028, %v1022
    %1056 = vst.msk [vmem:[#allocation2 + $0xd8] sm:$0xff] %vm1028, %v1023
    %1057 = vst.msk [vmem:[#allocation2 + $0xe0] sm:$0xff] %vm1028, %v1024
    %1058 = vst.msk [vmem:[#allocation2 + $0xe8] sm:$0xff] %vm1028, %v1025
    %1059 = vst.msk [vmem:[#allocation2 + $0xf0] sm:$0xff] %vm1028, %v1026
    %1060 = vst.msk [vmem:[#allocation2 + $0xf8] sm:$0xff] %vm1028, %v1027
    %v1061 = vld [vmem:[#allocation3] sm:$0xff]
    %v1062 = vld [vmem:[#allocation3 + $0x8] sm:$0xff]
    %v1063 = vld [vmem:[#allocation3 + $0x10] sm:$0xff]
    %v1064 = vld [vmem:[#allocation3 + $0x18] sm:$0xff]
    %v1065 = vld [vmem:[#allocation3 + $0x20] sm:$0xff]
    %v1066 = vld [vmem:[#allocation3 + $0x28] sm:$0xff]
    %v1067 = vld [vmem:[#allocation3 + $0x30] sm:$0xff]
    %v1068 = vld [vmem:[#allocation3 + $0x38] sm:$0xff]
    %v1069 = vld [vmem:[#allocation3 + $0x40] sm:$0xff]
    %v1070 = vld [vmem:[#allocation3 + $0x48] sm:$0xff]
    %v1071 = vld [vmem:[#allocation3 + $0x50] sm:$0xff]
    %v1072 = vld [vmem:[#allocation3 + $0x58] sm:$0xff]
    %v1073 = vld [vmem:[#allocation3 + $0x60] sm:$0xff]
    %v1074 = vld [vmem:[#allocation3 + $0x68] sm:$0xff]
    %v1075 = vld [vmem:[#allocation3 + $0x70] sm:$0xff]
    %v1076 = vld [vmem:[#allocation3 + $0x78] sm:$0xff]
    %v1077 = vld [vmem:[#allocation3 + $0x80] sm:$0xff]
    %v1078 = vld [vmem:[#allocation3 + $0x88] sm:$0xff]
    %v1079 = vld [vmem:[#allocation3 + $0x90] sm:$0xff]
    %v1080 = vld [vmem:[#allocation3 + $0x98] sm:$0xff]
    %v1081 = vld [vmem:[#allocation3 + $0xa0] sm:$0xff]
    %v1082 = vld [vmem:[#allocation3 + $0xa8] sm:$0xff]
    %v1083 = vld [vmem:[#allocation3 + $0xb0] sm:$0xff]
    %v1084 = vld [vmem:[#allocation3 + $0xb8] sm:$0xff]
    %v1085 = vld [vmem:[#allocation3 + $0xc0] sm:$0xff]
    %v1086 = vld [vmem:[#allocation3 + $0xc8] sm:$0xff]
    %v1087 = vld [vmem:[#allocation3 + $0xd0] sm:$0xff]
    %v1088 = vld [vmem:[#allocation3 + $0xd8] sm:$0xff]
    %v1089 = vld [vmem:[#allocation3 + $0xe0] sm:$0xff]
    %v1090 = vld [vmem:[#allocation3 + $0xe8] sm:$0xff]
    %v1091 = vld [vmem:[#allocation3 + $0xf0] sm:$0xff]
    %v1092 = vld [vmem:[#allocation3 + $0xf8] sm:$0xff]
    %1093 = vmatprep.subr.mxu0 0.0
    %1094 = vmatpush1.msra.mxu0 %v707
    %1095 = vmatprep.subr.mxu0 0.0
    %1096 = vmatpush1.msra.mxu0 %v708
    %1097 = vmatprep.subr.mxu0 0.0
    %1098 = vmatpush1.msra.mxu0 %v709
    %1099 = vmatprep.subr.mxu0 0.0
    %1100 = vmatpush1.msra.mxu0 %v710
    %1101 = vmatprep.subr.mxu0 0.0
    %1102 = vmatpush1.msra.mxu0 %v711
    %1103 = vmatprep.subr.mxu0 0.0
    %1104 = vmatpush1.msra.mxu0 %v712
    %1105 = vmatprep.subr.mxu0 0.0
    %1106 = vmatpush1.msra.mxu0 %v713
    %1107 = vmatprep.subr.mxu0 0.0
    %1108 = vmatpush1.msra.mxu0 %v714
    %1109 = vmatprep.subr.mxu0 0.0
    %1110 = vmatpush1.msra.mxu0 %v715
    %1111 = vmatprep.subr.mxu0 0.0
    %1112 = vmatpush1.msra.mxu0 %v716
    %1113 = vmatprep.subr.mxu0 0.0
    %1114 = vmatpush1.msra.mxu0 %v717
    %1115 = vmatprep.subr.mxu0 0.0
    %1116 = vmatpush1.msra.mxu0 %v718
    %1117 = vmatprep.subr.mxu0 0.0
    %1118 = vmatpush1.msra.mxu0 %v719
    %1119 = vmatprep.subr.mxu0 0.0
    %1120 = vmatpush1.msra.mxu0 %v720
    %1121 = vmatprep.subr.mxu0 0.0
    %1122 = vmatpush1.msra.mxu0 %v721
    %1123 = vmatprep.subr.mxu0 0.0
    %1124 = vmatpush1.msra.mxu0 %v722
    %1125 = vmatprep.subr.mxu0 0.0
    %1126 = vmatpush1.msra.mxu0 %v723
    %1127 = vmatprep.subr.mxu0 0.0
    %1128 = vmatpush1.msra.mxu0 %v724
    %1129 = vmatprep.subr.mxu0 0.0
    %1130 = vmatpush1.msra.mxu0 %v725
    %1131 = vmatprep.subr.mxu0 0.0
    %1132 = vmatpush1.msra.mxu0 %v726
    %1133 = vmatprep.subr.mxu0 0.0
    %1134 = vmatpush1.msra.mxu0 %v727
    %1135 = vmatprep.subr.mxu0 0.0
    %1136 = vmatpush1.msra.mxu0 %v728
    %1137 = vmatprep.subr.mxu0 0.0
    %1138 = vmatpush1.msra.mxu0 %v729
    %1139 = vmatprep.subr.mxu0 0.0
    %1140 = vmatpush1.msra.mxu0 %v730
    %1141 = vmatprep.subr.mxu0 0.0
    %1142 = vmatpush1.msra.mxu0 %v731
    %1143 = vmatprep.subr.mxu0 0.0
    %1144 = vmatpush1.msra.mxu0 %v732
    %1145 = vmatprep.subr.mxu0 0.0
    %1146 = vmatpush1.msra.mxu0 %v733
    %1147 = vmatprep.subr.mxu0 0.0
    %1148 = vmatpush1.msra.mxu0 %v734
    %1149 = vmatprep.subr.mxu0 0.0
    %1150 = vmatpush1.msra.mxu0 %v735
    %1151 = vmatprep.subr.mxu0 0.0
    %1152 = vmatpush1.msra.mxu0 %v736
    %1153 = vmatprep.subr.mxu0 0.0
    %1154 = vmatpush1.msra.mxu0 %v737
    %1155 = vmatprep.subr.mxu0 0.0
    %1156 = vmatpush1.msra.mxu0 %v738
    %1157 = vmatprep.mubr.f32.mxu0 %v582
    %1158 = vmatmul.mubr.f32.gmra.mrb[0].mxu0 %v580
    %v1159 = vpop.f32.mrb[0].mxu0
    %v1160 = vadd.f32 0.0, %v1159
    %v1161 = vpop.f32.mrb[0].mxu0
    %1162 = vmatprep.mubr.f32.mxu0 %v586
    %1163 = vmatmul.mubr.f32.gmra.mrb[0].mxu0 %v584
    %v1164 = vpop.f32.mrb[0].mxu0
    %v1165 = vadd.f32 0.0, %v1164
    %v1166 = vpop.f32.mrb[0].mxu0
    %1167 = vmatprep.mubr.f32.mxu0 %v590
    %1168 = vmatmul.mubr.f32.gmra.mrb[0].mxu0 %v588
    %v1169 = vpop.f32.mrb[0].mxu0
    %v1170 = vadd.f32 0.0, %v1169
    %v1171 = vpop.f32.mrb[0].mxu0
    %1172 = vmatprep.mubr.f32.mxu0 %v594
    %1173 = vmatmul.mubr.f32.gmra.mrb[0].mxu0 %v592
    %v1174 = vpop.f32.mrb[0].mxu0
    %v1175 = vadd.f32 0.0, %v1174
    %v1176 = vpop.f32.mrb[0].mxu0
    %1177 = vmatprep.mubr.f32.mxu0 %v598
    %1178 = vmatmul.mubr.f32.gmra.mrb[0].mxu0 %v596
    %v1179 = vpop.f32.mrb[0].mxu0
    %v1180 = vadd.f32 0.0, %v1179
    %v1181 = vpop.f32.mrb[0].mxu0
    %1182 = vmatprep.mubr.f32.mxu0 %v602
    %1183 = vmatmul.mubr.f32.gmra.mrb[0].mxu0 %v600
    %v1184 = vpop.f32.mrb[0].mxu0
    %v1185 = vadd.f32 0.0, %v1184
    %v1186 = vpop.f32.mrb[0].mxu0
    %1187 = vmatprep.mubr.f32.mxu0 %v606
    %1188 = vmatmul.mubr.f32.gmra.mrb[0].mxu0 %v604
    %v1189 = vpop.f32.mrb[0].mxu0
    %v1190 = vadd.f32 0.0, %v1189
    %v1191 = vpop.f32.mrb[0].mxu0
    %1192 = vmatprep.mubr.f32.mxu0 %v610
    %1193 = vmatmul.mubr.f32.gmra.mrb[0].mxu0 %v608
    %v1194 = vpop.f32.mrb[0].mxu0
    %v1195 = vadd.f32 0.0, %v1194
    %v1196 = vpop.f32.mrb[0].mxu0
    %1197 = vmatprep.mubr.f32.mxu0 %v614
    %1198 = vmatmul.mubr.f32.gmra.mrb[0].mxu0 %v612
    %v1199 = vpop.f32.mrb[0].mxu0
    %v1200 = vadd.f32 0.0, %v1199
    %v1201 = vpop.f32.mrb[0].mxu0
    %1202 = vmatprep.mubr.f32.mxu0 %v618
    %1203 = vmatmul.mubr.f32.gmra.mrb[0].mxu0 %v616
    %v1204 = vpop.f32.mrb[0].mxu0
    %v1205 = vadd.f32 0.0, %v1204
    %v1206 = vpop.f32.mrb[0].mxu0
    %1207 = vmatprep.mubr.f32.mxu0 %v622
    %1208 = vmatmul.mubr.f32.gmra.mrb[0].mxu0 %v620
    %v1209 = vpop.f32.mrb[0].mxu0
    %v1210 = vadd.f32 0.0, %v1209
    %v1211 = vpop.f32.mrb[0].mxu0
    %1212 = vmatprep.mubr.f32.mxu0 %v626
    %1213 = vmatmul.mubr.f32.gmra.mrb[0].mxu0 %v624
    %v1214 = vpop.f32.mrb[0].mxu0
    %v1215 = vadd.f32 0.0, %v1214
    %v1216 = vpop.f32.mrb[0].mxu0
    %1217 = vmatprep.mubr.f32.mxu0 %v630
    %1218 = vmatmul.mubr.f32.gmra.mrb[0].mxu0 %v628
    %v1219 = vpop.f32.mrb[0].mxu0
    %v1220 = vadd.f32 0.0, %v1219
    %v1221 = vpop.f32.mrb[0].mxu0
    %1222 = vmatprep.mubr.f32.mxu0 %v634
    %1223 = vmatmul.mubr.f32.gmra.mrb[0].mxu0 %v632
    %v1224 = vpop.f32.mrb[0].mxu0
    %v1225 = vadd.f32 0.0, %v1224
    %v1226 = vpop.f32.mrb[0].mxu0
    %1227 = vmatprep.mubr.f32.mxu0 %v638
    %1228 = vmatmul.mubr.f32.gmra.mrb[0].mxu0 %v636
    %v1229 = vpop.f32.mrb[0].mxu0
    %v1230 = vadd.f32 0.0, %v1229
    %v1231 = vpop.f32.mrb[0].mxu0
    %1232 = vmatprep.mubr.f32.mxu0 %v642
    %1233 = vmatmul.mubr.f32.gmra.mrb[0].mxu0 %v640
    %v1234 = vpop.f32.mrb[0].mxu0
    %v1235 = vadd.f32 0.0, %v1234
    %v1236 = vpop.f32.mrb[0].mxu0
    %1237 = vmatprep.mubr.f32.mxu0 %v646
    %1238 = vmatmul.mubr.f32.gmra.mrb[0].mxu0 %v644
    %v1239 = vpop.f32.mrb[0].mxu0
    %v1240 = vadd.f32 0.0, %v1239
    %v1241 = vpop.f32.mrb[0].mxu0
    %1242 = vmatprep.mubr.f32.mxu0 %v650
    %1243 = vmatmul.mubr.f32.gmra.mrb[0].mxu0 %v648
    %v1244 = vpop.f32.mrb[0].mxu0
    %v1245 = vadd.f32 0.0, %v1244
    %v1246 = vpop.f32.mrb[0].mxu0
    %1247 = vmatprep.mubr.f32.mxu0 %v654
    %1248 = vmatmul.mubr.f32.gmra.mrb[0].mxu0 %v652
    %v1249 = vpop.f32.mrb[0].mxu0
    %v1250 = vadd.f32 0.0, %v1249
    %v1251 = vpop.f32.mrb[0].mxu0
    %1252 = vmatprep.mubr.f32.mxu0 %v658
    %1253 = vmatmul.mubr.f32.gmra.mrb[0].mxu0 %v656
    %v1254 = vpop.f32.mrb[0].mxu0
    %v1255 = vadd.f32 0.0, %v1254
    %v1256 = vpop.f32.mrb[0].mxu0
    %1257 = vmatprep.mubr.f32.mxu0 %v662
    %1258 = vmatmul.mubr.f32.gmra.mrb[0].mxu0 %v660
    %v1259 = vpop.f32.mrb[0].mxu0
    %v1260 = vadd.f32 0.0, %v1259
    %v1261 = vpop.f32.mrb[0].mxu0
    %1262 = vmatprep.mubr.f32.mxu0 %v666
    %1263 = vmatmul.mubr.f32.gmra.mrb[0].mxu0 %v664
    %v1264 = vpop.f32.mrb[0].mxu0
    %v1265 = vadd.f32 0.0, %v1264
    %v1266 = vpop.f32.mrb[0].mxu0
    %1267 = vmatprep.mubr.f32.mxu0 %v670
    %1268 = vmatmul.mubr.f32.gmra.mrb[0].mxu0 %v668
    %v1269 = vpop.f32.mrb[0].mxu0
    %v1270 = vadd.f32 0.0, %v1269
    %v1271 = vpop.f32.mrb[0].mxu0
    %1272 = vmatprep.mubr.f32.mxu0 %v674
    %1273 = vmatmul.mubr.f32.gmra.mrb[0].mxu0 %v672
    %v1274 = vpop.f32.mrb[0].mxu0
    %v1275 = vadd.f32 0.0, %v1274
    %v1276 = vpop.f32.mrb[0].mxu0
    %1277 = vmatprep.mubr.f32.mxu0 %v678
    %1278 = vmatmul.mubr.f32.gmra.mrb[0].mxu0 %v676
    %v1279 = vpop.f32.mrb[0].mxu0
    %v1280 = vadd.f32 0.0, %v1279
    %v1281 = vpop.f32.mrb[0].mxu0
    %1282 = vmatprep.mubr.f32.mxu0 %v682
    %1283 = vmatmul.mubr.f32.gmra.mrb[0].mxu0 %v680
    %v1284 = vpop.f32.mrb[0].mxu0
    %v1285 = vadd.f32 0.0, %v1284
    %v1286 = vpop.f32.mrb[0].mxu0
    %1287 = vmatprep.mubr.f32.mxu0 %v686
    %1288 = vmatmul.mubr.f32.gmra.mrb[0].mxu0 %v684
    %v1289 = vpop.f32.mrb[0].mxu0
    %v1290 = vadd.f32 0.0, %v1289
    %v1291 = vpop.f32.mrb[0].mxu0
    %1292 = vmatprep.mubr.f32.mxu0 %v690
    %1293 = vmatmul.mubr.f32.gmra.mrb[0].mxu0 %v688
    %v1294 = vpop.f32.mrb[0].mxu0
    %v1295 = vadd.f32 0.0, %v1294
    %v1296 = vpop.f32.mrb[0].mxu0
    %1297 = vmatprep.mubr.f32.mxu0 %v694
    %1298 = vmatmul.mubr.f32.gmra.mrb[0].mxu0 %v692
    %v1299 = vpop.f32.mrb[0].mxu0
    %v1300 = vadd.f32 0.0, %v1299
    %v1301 = vpop.f32.mrb[0].mxu0
    %1302 = vmatprep.mubr.f32.mxu0 %v698
    %1303 = vmatmul.mubr.f32.gmra.mrb[0].mxu0 %v696
    %v1304 = vpop.f32.mrb[0].mxu0
    %v1305 = vadd.f32 0.0, %v1304
    %v1306 = vpop.f32.mrb[0].mxu0
    %1307 = vmatprep.mubr.f32.mxu0 %v702
    %1308 = vmatmul.mubr.f32.gmra.mrb[0].mxu0 %v700
    %v1309 = vpop.f32.mrb[0].mxu0
    %v1310 = vadd.f32 0.0, %v1309
    %v1311 = vpop.f32.mrb[0].mxu0
    %1312 = vmatprep.mubr.f32.mxu0 %v706
    %1313 = vmatmul.mubr.f32.gmra.mrb[0].mxu0 %v704
    %v1314 = vpop.f32.mrb[0].mxu0
    %v1315 = vadd.f32 0.0, %v1314
    %v1316 = vpop.f32.mrb[0].mxu0
    %1317 = vdwg.mxu0
    %v1318 = vadd.f32 %v1061, %v1160
    %v1319 = vadd.f32 %v1062, %v1165
    %v1320 = vadd.f32 %v1063, %v1170
    %v1321 = vadd.f32 %v1064, %v1175
    %v1322 = vadd.f32 %v1065, %v1180
    %v1323 = vadd.f32 %v1066, %v1185
    %v1324 = vadd.f32 %v1067, %v1190
    %v1325 = vadd.f32 %v1068, %v1195
    %v1326 = vadd.f32 %v1069, %v1200
    %v1327 = vadd.f32 %v1070, %v1205
    %v1328 = vadd.f32 %v1071, %v1210
    %v1329 = vadd.f32 %v1072, %v1215
    %v1330 = vadd.f32 %v1073, %v1220
    %v1331 = vadd.f32 %v1074, %v1225
    %v1332 = vadd.f32 %v1075, %v1230
    %v1333 = vadd.f32 %v1076, %v1235
    %v1334 = vadd.f32 %v1077, %v1240
    %v1335 = vadd.f32 %v1078, %v1245
    %v1336 = vadd.f32 %v1079, %v1250
    %v1337 = vadd.f32 %v1080, %v1255
    %v1338 = vadd.f32 %v1081, %v1260
    %v1339 = vadd.f32 %v1082, %v1265
    %v1340 = vadd.f32 %v1083, %v1270
    %v1341 = vadd.f32 %v1084, %v1275
    %v1342 = vadd.f32 %v1085, %v1280
    %v1343 = vadd.f32 %v1086, %v1285
    %v1344 = vadd.f32 %v1087, %v1290
    %v1345 = vadd.f32 %v1088, %v1295
    %v1346 = vadd.f32 %v1089, %v1300
    %v1347 = vadd.f32 %v1090, %v1305
    %v1348 = vadd.f32 %v1091, %v1310
    %v1349 = vadd.f32 %v1092, %v1315
    %1350 = vst.msk [vmem:[#allocation3] sm:$0xff] %vm1028, %v1318
    %1351 = vst.msk [vmem:[#allocation3 + $0x8] sm:$0xff] %vm1028, %v1319
    %1352 = vst.msk [vmem:[#allocation3 + $0x10] sm:$0xff] %vm1028, %v1320
    %1353 = vst.msk [vmem:[#allocation3 + $0x18] sm:$0xff] %vm1028, %v1321
    %1354 = vst.msk [vmem:[#allocation3 + $0x20] sm:$0xff] %vm1028, %v1322
    %1355 = vst.msk [vmem:[#allocation3 + $0x28] sm:$0xff] %vm1028, %v1323
    %1356 = vst.msk [vmem:[#allocation3 + $0x30] sm:$0xff] %vm1028, %v1324
    %1357 = vst.msk [vmem:[#allocation3 + $0x38] sm:$0xff] %vm1028, %v1325
    %1358 = vst.msk [vmem:[#allocation3 + $0x40] sm:$0xff] %vm1028, %v1326
    %1359 = vst.msk [vmem:[#allocation3 + $0x48] sm:$0xff] %vm1028, %v1327
    %1360 = vst.msk [vmem:[#allocation3 + $0x50] sm:$0xff] %vm1028, %v1328
    %1361 = vst.msk [vmem:[#allocation3 + $0x58] sm:$0xff] %vm1028, %v1329
    %1362 = vst.msk [vmem:[#allocation3 + $0x60] sm:$0xff] %vm1028, %v1330
    %1363 = vst.msk [vmem:[#allocation3 + $0x68] sm:$0xff] %vm1028, %v1331
    %1364 = vst.msk [vmem:[#allocation3 + $0x70] sm:$0xff] %vm1028, %v1332
    %1365 = vst.msk [vmem:[#allocation3 + $0x78] sm:$0xff] %vm1028, %v1333
    %1366 = vst.msk [vmem:[#allocation3 + $0x80] sm:$0xff] %vm1028, %v1334
    %1367 = vst.msk [vmem:[#allocation3 + $0x88] sm:$0xff] %vm1028, %v1335
    %1368 = vst.msk [vmem:[#allocation3 + $0x90] sm:$0xff] %vm1028, %v1336
    %1369 = vst.msk [vmem:[#allocation3 + $0x98] sm:$0xff] %vm1028, %v1337
    %1370 = vst.msk [vmem:[#allocation3 + $0xa0] sm:$0xff] %vm1028, %v1338
    %1371 = vst.msk [vmem:[#allocation3 + $0xa8] sm:$0xff] %vm1028, %v1339
    %1372 = vst.msk [vmem:[#allocation3 + $0xb0] sm:$0xff] %vm1028, %v1340
    %1373 = vst.msk [vmem:[#allocation3 + $0xb8] sm:$0xff] %vm1028, %v1341
    %1374 = vst.msk [vmem:[#allocation3 + $0xc0] sm:$0xff] %vm1028, %v1342
    %1375 = vst.msk [vmem:[#allocation3 + $0xc8] sm:$0xff] %vm1028, %v1343
    %1376 = vst.msk [vmem:[#allocation3 + $0xd0] sm:$0xff] %vm1028, %v1344
    %1377 = vst.msk [vmem:[#allocation3 + $0xd8] sm:$0xff] %vm1028, %v1345
    %1378 = vst.msk [vmem:[#allocation3 + $0xe0] sm:$0xff] %vm1028, %v1346
    %1379 = vst.msk [vmem:[#allocation3 + $0xe8] sm:$0xff] %vm1028, %v1347
    %1380 = vst.msk [vmem:[#allocation3 + $0xf0] sm:$0xff] %vm1028, %v1348
    %1381 = vst.msk [vmem:[#allocation3 + $0xf8] sm:$0xff] %vm1028, %v1349
  $region29: #{supcon_loss_with_prototype.1} parent=0 // pred_fallthru
    _
  // Predicated region
  $region30: #{supcon_loss_with_prototype.1} parent=0 // pred_check
    %p1382 = pneg %p24
  $region31: #{supcon_loss_with_prototype.1} parent=0 // pred_check_branch
    %1384 = sbr.rel (%p1382) target = $region33
  $region32: #{supcon_loss_with_prototype.1} parent=0 // pred_region
    %v1385 = vld [vmem:[%s1] sm:$0xf]
    %v1386 = vld [vmem:[%s1 + $0x4] sm:$0xf]
    %v1387 = vld [vmem:[%s1 + $0x8] sm:$0xf]
    %v1388 = vld [vmem:[%s1 + $0xc] sm:$0xf]
    %v1389 = vld [vmem:[%s1 + $0x10] sm:$0xf]
    %v1390 = vld [vmem:[%s1 + $0x14] sm:$0xf]
    %v1391 = vld [vmem:[%s1 + $0x18] sm:$0xf]
    %v1392 = vld [vmem:[%s1 + $0x1c] sm:$0xf]
    %v1393 = vld [vmem:[%s1 + $0x20] sm:$0xf]
    %v1394 = vld [vmem:[%s1 + $0x24] sm:$0xf]
    %v1395 = vld [vmem:[%s1 + $0x28] sm:$0xf]
    %v1396 = vld [vmem:[%s1 + $0x2c] sm:$0xf]
    %v1397 = vld [vmem:[%s1 + $0x30] sm:$0xf]
    %v1398 = vld [vmem:[%s1 + $0x34] sm:$0xf]
    %v1399 = vld [vmem:[%s1 + $0x38] sm:$0xf]
    %v1400 = vld [vmem:[%s1 + $0x3c] sm:$0xf]
    %v1401 = vld [vmem:[%s1 + $0x40] sm:$0xf]
    %v1402 = vld [vmem:[%s1 + $0x44] sm:$0xf]
    %v1403 = vld [vmem:[%s1 + $0x48] sm:$0xf]
    %v1404 = vld [vmem:[%s1 + $0x4c] sm:$0xf]
    %v1405 = vld [vmem:[%s1 + $0x50] sm:$0xf]
    %v1406 = vld [vmem:[%s1 + $0x54] sm:$0xf]
    %v1407 = vld [vmem:[%s1 + $0x58] sm:$0xf]
    %v1408 = vld [vmem:[%s1 + $0x5c] sm:$0xf]
    %v1409 = vld [vmem:[%s1 + $0x60] sm:$0xf]
    %v1410 = vld [vmem:[%s1 + $0x64] sm:$0xf]
    %v1411 = vld [vmem:[%s1 + $0x68] sm:$0xf]
    %v1412 = vld [vmem:[%s1 + $0x6c] sm:$0xf]
    %v1413 = vld [vmem:[%s1 + $0x70] sm:$0xf]
    %v1414 = vld [vmem:[%s1 + $0x74] sm:$0xf]
    %v1415 = vld [vmem:[%s1 + $0x78] sm:$0xf]
    %v1416 = vld [vmem:[%s1 + $0x7c] sm:$0xf]
    %v1417 = vmul.bf16 %v1385, 1084244128
    %v1418 = vmul.bf16 %v1386, 1084244128
    %v1419 = vmul.bf16 %v1387, 1084244128
    %v1420 = vmul.bf16 %v1388, 1084244128
    %v1421 = vmul.bf16 %v1389, 1084244128
    %v1422 = vmul.bf16 %v1390, 1084244128
    %v1423 = vmul.bf16 %v1391, 1084244128
    %v1424 = vmul.bf16 %v1392, 1084244128
    %v1425 = vmul.bf16 %v1393, 1084244128
    %v1426 = vmul.bf16 %v1394, 1084244128
    %v1427 = vmul.bf16 %v1395, 1084244128
    %v1428 = vmul.bf16 %v1396, 1084244128
    %v1429 = vmul.bf16 %v1397, 1084244128
    %v1430 = vmul.bf16 %v1398, 1084244128
    %v1431 = vmul.bf16 %v1399, 1084244128
    %v1432 = vmul.bf16 %v1400, 1084244128
    %v1433 = vmul.bf16 %v1401, 1084244128
    %v1434 = vmul.bf16 %v1402, 1084244128
    %v1435 = vmul.bf16 %v1403, 1084244128
    %v1436 = vmul.bf16 %v1404, 1084244128
    %v1437 = vmul.bf16 %v1405, 1084244128
    %v1438 = vmul.bf16 %v1406, 1084244128
    %v1439 = vmul.bf16 %v1407, 1084244128
    %v1440 = vmul.bf16 %v1408, 1084244128
    %v1441 = vmul.bf16 %v1409, 1084244128
    %v1442 = vmul.bf16 %v1410, 1084244128
    %v1443 = vmul.bf16 %v1411, 1084244128
    %v1444 = vmul.bf16 %v1412, 1084244128
    %v1445 = vmul.bf16 %v1413, 1084244128
    %v1446 = vmul.bf16 %v1414, 1084244128
    %v1447 = vmul.bf16 %v1415, 1084244128
    %v1448 = vmul.bf16 %v1416, 1084244128
    %v1449 = vld [vmem:[%s3] sm:$0xf]
    %v1450 = vld [vmem:[%s3 + $0x4] sm:$0xf]
    %v1451 = vld [vmem:[%s3 + $0x8] sm:$0xf]
    %v1452 = vld [vmem:[%s3 + $0xc] sm:$0xf]
    %v1453 = vld [vmem:[%s3 + $0x10] sm:$0xf]
    %v1454 = vld [vmem:[%s3 + $0x14] sm:$0xf]
    %v1455 = vld [vmem:[%s3 + $0x18] sm:$0xf]
    %v1456 = vld [vmem:[%s3 + $0x1c] sm:$0xf]
    %v1457 = vld [vmem:[%s3 + $0x20] sm:$0xf]
    %v1458 = vld [vmem:[%s3 + $0x24] sm:$0xf]
    %v1459 = vld [vmem:[%s3 + $0x28] sm:$0xf]
    %v1460 = vld [vmem:[%s3 + $0x2c] sm:$0xf]
    %v1461 = vld [vmem:[%s3 + $0x30] sm:$0xf]
    %v1462 = vld [vmem:[%s3 + $0x34] sm:$0xf]
    %v1463 = vld [vmem:[%s3 + $0x38] sm:$0xf]
    %v1464 = vld [vmem:[%s3 + $0x3c] sm:$0xf]
    %v1497 = vunpack.c.l.b16 %v1417
    %v1498 = vunpack.c.l.b16 %v1418
    %v1499 = vunpack.c.l.b16 %v1419
    %v1500 = vunpack.c.l.b16 %v1420
    %v1501 = vunpack.c.l.b16 %v1421
    %v1502 = vunpack.c.l.b16 %v1422
    %v1503 = vunpack.c.l.b16 %v1423
    %v1504 = vunpack.c.l.b16 %v1424
    %v1505 = vunpack.c.l.b16 %v1425
    %v1506 = vunpack.c.l.b16 %v1426
    %v1507 = vunpack.c.l.b16 %v1427
    %v1508 = vunpack.c.l.b16 %v1428
    %v1509 = vunpack.c.l.b16 %v1429
    %v1510 = vunpack.c.l.b16 %v1430
    %v1511 = vunpack.c.l.b16 %v1431
    %v1512 = vunpack.c.l.b16 %v1432
    %v1513 = vunpack.c.l.b16 %v1433
    %v1514 = vunpack.c.l.b16 %v1434
    %v1515 = vunpack.c.l.b16 %v1435
    %v1516 = vunpack.c.l.b16 %v1436
    %v1517 = vunpack.c.l.b16 %v1437
    %v1518 = vunpack.c.l.b16 %v1438
    %v1519 = vunpack.c.l.b16 %v1439
    %v1520 = vunpack.c.l.b16 %v1440
    %v1521 = vunpack.c.l.b16 %v1441
    %v1522 = vunpack.c.l.b16 %v1442
    %v1523 = vunpack.c.l.b16 %v1443
    %v1524 = vunpack.c.l.b16 %v1444
    %v1525 = vunpack.c.l.b16 %v1445
    %v1526 = vunpack.c.l.b16 %v1446
    %v1527 = vunpack.c.l.b16 %v1447
    %v1528 = vunpack.c.l.b16 %v1448
    %v1529 = vpack.c.b16 %v1498, %v1497
    %v1530 = vpack.c.b16 %v1500, %v1499
    %v1531 = vpack.c.b16 %v1502, %v1501
    %v1532 = vpack.c.b16 %v1504, %v1503
    %v1533 = vpack.c.b16 %v1506, %v1505
    %v1534 = vpack.c.b16 %v1508, %v1507
    %v1535 = vpack.c.b16 %v1510, %v1509
    %v1536 = vpack.c.b16 %v1512, %v1511
    %v1537 = vpack.c.b16 %v1514, %v1513
    %v1538 = vpack.c.b16 %v1516, %v1515
    %v1539 = vpack.c.b16 %v1518, %v1517
    %v1540 = vpack.c.b16 %v1520, %v1519
    %v1541 = vpack.c.b16 %v1522, %v1521
    %v1542 = vpack.c.b16 %v1524, %v1523
    %v1543 = vpack.c.b16 %v1526, %v1525
    %v1544 = vpack.c.b16 %v1528, %v1527
    %v1577 = vunpack.c.l.b16 %v1449
    %v1578 = vunpack.c.l.b16 %v1450
    %v1579 = vunpack.c.l.b16 %v1451
    %v1580 = vunpack.c.l.b16 %v1452
    %v1581 = vunpack.c.l.b16 %v1453
    %v1582 = vunpack.c.l.b16 %v1454
    %v1583 = vunpack.c.l.b16 %v1455
    %v1584 = vunpack.c.l.b16 %v1456
    %v1585 = vunpack.c.l.b16 %v1457
    %v1586 = vunpack.c.l.b16 %v1458
    %v1587 = vunpack.c.l.b16 %v1459
    %v1588 = vunpack.c.l.b16 %v1460
    %v1589 = vunpack.c.l.b16 %v1461
    %v1590 = vunpack.c.l.b16 %v1462
    %v1591 = vunpack.c.l.b16 %v1463
    %v1592 = vunpack.c.l.b16 %v1464
    %v1593 = vpack.c.b16 %v1578, %v1577
    %v1594 = vpack.c.b16 %v1580, %v1579
    %v1595 = vpack.c.b16 %v1582, %v1581
    %v1596 = vpack.c.b16 %v1584, %v1583
    %v1597 = vpack.c.b16 %v1586, %v1585
    %v1598 = vpack.c.b16 %v1588, %v1587
    %v1599 = vpack.c.b16 %v1590, %v1589
    %v1600 = vpack.c.b16 %v1592, %v1591
    %1609 = vmatprep.subr.bf16.mxu0 0
    %1610 = vmatpush1.bf16.xpose.msra.mxu0 %v1593
    %1611 = vmatprep.subr.bf16.mxu0 0
    %1612 = vmatpush1.bf16.xpose.msra.mxu0 %v1594
    %1613 = vmatprep.subr.bf16.mxu0 0
    %1614 = vmatpush1.bf16.xpose.msra.mxu0 %v1595
    %1615 = vmatprep.subr.bf16.mxu0 0
    %1616 = vmatpush1.bf16.xpose.msra.mxu0 %v1596
    %1617 = vmatprep.subr.bf16.mxu0 0
    %1618 = vmatpush1.bf16.xpose.msra.mxu0 %v1597
    %1619 = vmatprep.subr.bf16.mxu0 0
    %1620 = vmatpush1.bf16.xpose.msra.mxu0 %v1598
    %1621 = vmatprep.subr.bf16.mxu0 0
    %1622 = vmatpush1.bf16.xpose.msra.mxu0 %v1599
    %1623 = vmatprep.subr.bf16.mxu0 0
    %1624 = vmatpush1.bf16.xpose.msra.mxu0 %v1600
    %1625 = vmatprep.subr.bf16.mxu0 0
    %1626 = vmatpush1.bf16.xpose.msra.mxu0 0
    %1627 = vmatprep.subr.bf16.mxu0 0
    %1628 = vmatpush1.bf16.xpose.msra.mxu0 0
    %1629 = vmatprep.subr.bf16.mxu0 0
    %1630 = vmatpush1.bf16.xpose.msra.mxu0 0
    %1631 = vmatprep.subr.bf16.mxu0 0
    %1632 = vmatpush1.bf16.xpose.msra.mxu0 0
    %1633 = vmatprep.subr.bf16.mxu0 0
    %1634 = vmatpush1.bf16.xpose.msra.mxu0 0
    %1635 = vmatprep.subr.bf16.mxu0 0
    %1636 = vmatpush1.bf16.xpose.msra.mxu0 0
    %1637 = vmatprep.subr.bf16.mxu0 0
    %1638 = vmatpush1.bf16.xpose.msra.mxu0 0
    %1639 = vmatprep.subr.bf16.mxu0 0
    %1640 = vmatpush1.bf16.xpose.msra.mxu0 0
    %1641 = vmatprep.mubr.bf16.mxu0 0
    %1642 = vmatmul.mubr.bf16.gmra.mrb[0].mxu0 %v1529
    %v1643 = vpop.f32.mrb[0].mxu0
    %v1644 = vadd.f32 0.0, %v1643
    %v1645 = vpop.f32.mrb[0].mxu0
    %v1646 = vpop.f32.mrb[0].mxu0
    %v1647 = vadd.f32 0.0, %v1646
    %v1648 = vpop.f32.mrb[0].mxu0
    %1649 = vmatprep.mubr.bf16.mxu0 0
    %1650 = vmatmul.mubr.bf16.gmra.mrb[0].mxu0 %v1530
    %v1651 = vpop.f32.mrb[0].mxu0
    %v1652 = vadd.f32 0.0, %v1651
    %v1653 = vpop.f32.mrb[0].mxu0
    %v1654 = vpop.f32.mrb[0].mxu0
    %v1655 = vadd.f32 0.0, %v1654
    %v1656 = vpop.f32.mrb[0].mxu0
    %1657 = vmatprep.mubr.bf16.mxu0 0
    %1658 = vmatmul.mubr.bf16.gmra.mrb[0].mxu0 %v1531
    %v1659 = vpop.f32.mrb[0].mxu0
    %v1660 = vadd.f32 0.0, %v1659
    %v1661 = vpop.f32.mrb[0].mxu0
    %v1662 = vpop.f32.mrb[0].mxu0
    %v1663 = vadd.f32 0.0, %v1662
    %v1664 = vpop.f32.mrb[0].mxu0
    %1665 = vmatprep.mubr.bf16.mxu0 0
    %1666 = vmatmul.mubr.bf16.gmra.mrb[0].mxu0 %v1532
    %v1667 = vpop.f32.mrb[0].mxu0
    %v1668 = vadd.f32 0.0, %v1667
    %v1669 = vpop.f32.mrb[0].mxu0
    %v1670 = vpop.f32.mrb[0].mxu0
    %v1671 = vadd.f32 0.0, %v1670
    %v1672 = vpop.f32.mrb[0].mxu0
    %1673 = vmatprep.mubr.bf16.mxu0 0
    %1674 = vmatmul.mubr.bf16.gmra.mrb[0].mxu0 %v1533
    %v1675 = vpop.f32.mrb[0].mxu0
    %v1676 = vadd.f32 0.0, %v1675
    %v1677 = vpop.f32.mrb[0].mxu0
    %v1678 = vpop.f32.mrb[0].mxu0
    %v1679 = vadd.f32 0.0, %v1678
    %v1680 = vpop.f32.mrb[0].mxu0
    %1681 = vmatprep.mubr.bf16.mxu0 0
    %1682 = vmatmul.mubr.bf16.gmra.mrb[0].mxu0 %v1534
    %v1683 = vpop.f32.mrb[0].mxu0
    %v1684 = vadd.f32 0.0, %v1683
    %v1685 = vpop.f32.mrb[0].mxu0
    %v1686 = vpop.f32.mrb[0].mxu0
    %v1687 = vadd.f32 0.0, %v1686
    %v1688 = vpop.f32.mrb[0].mxu0
    %1689 = vmatprep.mubr.bf16.mxu0 0
    %1690 = vmatmul.mubr.bf16.gmra.mrb[0].mxu0 %v1535
    %v1691 = vpop.f32.mrb[0].mxu0
    %v1692 = vadd.f32 0.0, %v1691
    %v1693 = vpop.f32.mrb[0].mxu0
    %v1694 = vpop.f32.mrb[0].mxu0
    %v1695 = vadd.f32 0.0, %v1694
    %v1696 = vpop.f32.mrb[0].mxu0
    %1697 = vmatprep.mubr.bf16.mxu0 0
    %1698 = vmatmul.mubr.bf16.gmra.mrb[0].mxu0 %v1536
    %v1699 = vpop.f32.mrb[0].mxu0
    %v1700 = vadd.f32 0.0, %v1699
    %v1701 = vpop.f32.mrb[0].mxu0
    %v1702 = vpop.f32.mrb[0].mxu0
    %v1703 = vadd.f32 0.0, %v1702
    %v1704 = vpop.f32.mrb[0].mxu0
    %1705 = vmatprep.mubr.bf16.mxu0 0
    %1706 = vmatmul.mubr.bf16.gmra.mrb[0].mxu0 %v1537
    %v1707 = vpop.f32.mrb[0].mxu0
    %v1708 = vadd.f32 0.0, %v1707
    %v1709 = vpop.f32.mrb[0].mxu0
    %v1710 = vpop.f32.mrb[0].mxu0
    %v1711 = vadd.f32 0.0, %v1710
    %v1712 = vpop.f32.mrb[0].mxu0
    %1713 = vmatprep.mubr.bf16.mxu0 0
    %1714 = vmatmul.mubr.bf16.gmra.mrb[0].mxu0 %v1538
    %v1715 = vpop.f32.mrb[0].mxu0
    %v1716 = vadd.f32 0.0, %v1715
    %v1717 = vpop.f32.mrb[0].mxu0
    %v1718 = vpop.f32.mrb[0].mxu0
    %v1719 = vadd.f32 0.0, %v1718
    %v1720 = vpop.f32.mrb[0].mxu0
    %1721 = vmatprep.mubr.bf16.mxu0 0
    %1722 = vmatmul.mubr.bf16.gmra.mrb[0].mxu0 %v1539
    %v1723 = vpop.f32.mrb[0].mxu0
    %v1724 = vadd.f32 0.0, %v1723
    %v1725 = vpop.f32.mrb[0].mxu0
    %v1726 = vpop.f32.mrb[0].mxu0
    %v1727 = vadd.f32 0.0, %v1726
    %v1728 = vpop.f32.mrb[0].mxu0
    %1729 = vmatprep.mubr.bf16.mxu0 0
    %1730 = vmatmul.mubr.bf16.gmra.mrb[0].mxu0 %v1540
    %v1731 = vpop.f32.mrb[0].mxu0
    %v1732 = vadd.f32 0.0, %v1731
    %v1733 = vpop.f32.mrb[0].mxu0
    %v1734 = vpop.f32.mrb[0].mxu0
    %v1735 = vadd.f32 0.0, %v1734
    %v1736 = vpop.f32.mrb[0].mxu0
    %1737 = vmatprep.mubr.bf16.mxu0 0
    %1738 = vmatmul.mubr.bf16.gmra.mrb[0].mxu0 %v1541
    %v1739 = vpop.f32.mrb[0].mxu0
    %v1740 = vadd.f32 0.0, %v1739
    %v1741 = vpop.f32.mrb[0].mxu0
    %v1742 = vpop.f32.mrb[0].mxu0
    %v1743 = vadd.f32 0.0, %v1742
    %v1744 = vpop.f32.mrb[0].mxu0
    %1745 = vmatprep.mubr.bf16.mxu0 0
    %1746 = vmatmul.mubr.bf16.gmra.mrb[0].mxu0 %v1542
    %v1747 = vpop.f32.mrb[0].mxu0
    %v1748 = vadd.f32 0.0, %v1747
    %v1749 = vpop.f32.mrb[0].mxu0
    %v1750 = vpop.f32.mrb[0].mxu0
    %v1751 = vadd.f32 0.0, %v1750
    %v1752 = vpop.f32.mrb[0].mxu0
    %1753 = vmatprep.mubr.bf16.mxu0 0
    %1754 = vmatmul.mubr.bf16.gmra.mrb[0].mxu0 %v1543
    %v1755 = vpop.f32.mrb[0].mxu0
    %v1756 = vadd.f32 0.0, %v1755
    %v1757 = vpop.f32.mrb[0].mxu0
    %v1758 = vpop.f32.mrb[0].mxu0
    %v1759 = vadd.f32 0.0, %v1758
    %v1760 = vpop.f32.mrb[0].mxu0
    %1761 = vmatprep.mubr.bf16.mxu0 0
    %1762 = vmatmul.mubr.bf16.gmra.mrb[0].mxu0 %v1544
    %v1763 = vpop.f32.mrb[0].mxu0
    %v1764 = vadd.f32 0.0, %v1763
    %v1765 = vpop.f32.mrb[0].mxu0
    %v1766 = vpop.f32.mrb[0].mxu0
    %v1767 = vadd.f32 0.0, %v1766
    %v1768 = vpop.f32.mrb[0].mxu0
    %1769 = vdwg.mxu0
    %1770 = vadd.xlane.f32.xlu0 %v1644
    %v1771 = vpop.xlane.xlu0 %1770
    %1772 = vadd.xlane.f32.xlu0 %v1647
    %v1773 = vpop.xlane.xlu0 %1772
    %1774 = vadd.xlane.f32.xlu0 %v1652
    %v1775 = vpop.xlane.xlu0 %1774
    %1776 = vadd.xlane.f32.xlu0 %v1655
    %v1777 = vpop.xlane.xlu0 %1776
    %1778 = vadd.xlane.f32.xlu0 %v1660
    %v1779 = vpop.xlane.xlu0 %1778
    %1780 = vadd.xlane.f32.xlu0 %v1663
    %v1781 = vpop.xlane.xlu0 %1780
    %1782 = vadd.xlane.f32.xlu0 %v1668
    %v1783 = vpop.xlane.xlu0 %1782
    %1784 = vadd.xlane.f32.xlu0 %v1671
    %v1785 = vpop.xlane.xlu0 %1784
    %1786 = vadd.xlane.f32.xlu0 %v1676
    %v1787 = vpop.xlane.xlu0 %1786
    %1788 = vadd.xlane.f32.xlu0 %v1679
    %v1789 = vpop.xlane.xlu0 %1788
    %1790 = vadd.xlane.f32.xlu0 %v1684
    %v1791 = vpop.xlane.xlu0 %1790
    %1792 = vadd.xlane.f32.xlu0 %v1687
    %v1793 = vpop.xlane.xlu0 %1792
    %1794 = vadd.xlane.f32.xlu0 %v1692
    %v1795 = vpop.xlane.xlu0 %1794
    %1796 = vadd.xlane.f32.xlu0 %v1695
    %v1797 = vpop.xlane.xlu0 %1796
    %1798 = vadd.xlane.f32.xlu0 %v1700
    %v1799 = vpop.xlane.xlu0 %1798
    %1800 = vadd.xlane.f32.xlu0 %v1703
    %v1801 = vpop.xlane.xlu0 %1800
    %1802 = vadd.xlane.f32.xlu0 %v1708
    %v1803 = vpop.xlane.xlu0 %1802
    %1804 = vadd.xlane.f32.xlu0 %v1711
    %v1805 = vpop.xlane.xlu0 %1804
    %1806 = vadd.xlane.f32.xlu0 %v1716
    %v1807 = vpop.xlane.xlu0 %1806
    %1808 = vadd.xlane.f32.xlu0 %v1719
    %v1809 = vpop.xlane.xlu0 %1808
    %1810 = vadd.xlane.f32.xlu0 %v1724
    %v1811 = vpop.xlane.xlu0 %1810
    %1812 = vadd.xlane.f32.xlu0 %v1727
    %v1813 = vpop.xlane.xlu0 %1812
    %1814 = vadd.xlane.f32.xlu0 %v1732
    %v1815 = vpop.xlane.xlu0 %1814
    %1816 = vadd.xlane.f32.xlu0 %v1735
    %v1817 = vpop.xlane.xlu0 %1816
    %1818 = vadd.xlane.f32.xlu0 %v1740
    %v1819 = vpop.xlane.xlu0 %1818
    %1820 = vadd.xlane.f32.xlu0 %v1743
    %v1821 = vpop.xlane.xlu0 %1820
    %1822 = vadd.xlane.f32.xlu0 %v1748
    %v1823 = vpop.xlane.xlu0 %1822
    %1824 = vadd.xlane.f32.xlu0 %v1751
    %v1825 = vpop.xlane.xlu0 %1824
    %1826 = vadd.xlane.f32.xlu0 %v1756
    %v1827 = vpop.xlane.xlu0 %1826
    %1828 = vadd.xlane.f32.xlu0 %v1759
    %v1829 = vpop.xlane.xlu0 %1828
    %1830 = vadd.xlane.f32.xlu0 %v1764
    %v1831 = vpop.xlane.xlu0 %1830
    %1832 = vadd.xlane.f32.xlu0 %v1767
    %v1833 = vpop.xlane.xlu0 %1832
    %v1834 = vmul.f32 %v1644, 1.442695
    %v1835 = vpow.pop %v1834
    %v1836 = vmul.f32 %v1647, 1.442695
    %v1837 = vpow.pop %v1836
    %v1838 = vmul.f32 %v1652, 1.442695
    %v1839 = vpow.pop %v1838
    %v1840 = vmul.f32 %v1655, 1.442695
    %v1841 = vpow.pop %v1840
    %v1842 = vmul.f32 %v1660, 1.442695
    %v1843 = vpow.pop %v1842
    %v1844 = vmul.f32 %v1663, 1.442695
    %v1845 = vpow.pop %v1844
    %v1846 = vmul.f32 %v1668, 1.442695
    %v1847 = vpow.pop %v1846
    %v1848 = vmul.f32 %v1671, 1.442695
    %v1849 = vpow.pop %v1848
    %v1850 = vmul.f32 %v1676, 1.442695
    %v1851 = vpow.pop %v1850
    %v1852 = vmul.f32 %v1679, 1.442695
    %v1853 = vpow.pop %v1852
    %v1854 = vmul.f32 %v1684, 1.442695
    %v1855 = vpow.pop %v1854
    %v1856 = vmul.f32 %v1687, 1.442695
    %v1857 = vpow.pop %v1856
    %v1858 = vmul.f32 %v1692, 1.442695
    %v1859 = vpow.pop %v1858
    %v1860 = vmul.f32 %v1695, 1.442695
    %v1861 = vpow.pop %v1860
    %v1862 = vmul.f32 %v1700, 1.442695
    %v1863 = vpow.pop %v1862
    %v1864 = vmul.f32 %v1703, 1.442695
    %v1865 = vpow.pop %v1864
    %v1866 = vmul.f32 %v1708, 1.442695
    %v1867 = vpow.pop %v1866
    %v1868 = vmul.f32 %v1711, 1.442695
    %v1869 = vpow.pop %v1868
    %v1870 = vmul.f32 %v1716, 1.442695
    %v1871 = vpow.pop %v1870
    %v1872 = vmul.f32 %v1719, 1.442695
    %v1873 = vpow.pop %v1872
    %v1874 = vmul.f32 %v1724, 1.442695
    %v1875 = vpow.pop %v1874
    %v1876 = vmul.f32 %v1727, 1.442695
    %v1877 = vpow.pop %v1876
    %v1878 = vmul.f32 %v1732, 1.442695
    %v1879 = vpow.pop %v1878
    %v1880 = vmul.f32 %v1735, 1.442695
    %v1881 = vpow.pop %v1880
    %v1882 = vmul.f32 %v1740, 1.442695
    %v1883 = vpow.pop %v1882
    %v1884 = vmul.f32 %v1743, 1.442695
    %v1885 = vpow.pop %v1884
    %v1886 = vmul.f32 %v1748, 1.442695
    %v1887 = vpow.pop %v1886
    %v1888 = vmul.f32 %v1751, 1.442695
    %v1889 = vpow.pop %v1888
    %v1890 = vmul.f32 %v1756, 1.442695
    %v1891 = vpow.pop %v1890
    %v1892 = vmul.f32 %v1759, 1.442695
    %v1893 = vpow.pop %v1892
    %v1894 = vmul.f32 %v1764, 1.442695
    %v1895 = vpow.pop %v1894
    %v1896 = vmul.f32 %v1767, 1.442695
    %v1897 = vpow.pop %v1896
    %1898 = vadd.xlane.f32.xlu0 %v1835
    %v1899 = vpop.xlane.xlu0 %1898
    %1900 = vadd.xlane.f32.xlu0 %v1837
    %v1901 = vpop.xlane.xlu0 %1900
    %1902 = vadd.xlane.f32.xlu0 %v1839
    %v1903 = vpop.xlane.xlu0 %1902
    %1904 = vadd.xlane.f32.xlu0 %v1841
    %v1905 = vpop.xlane.xlu0 %1904
    %1906 = vadd.xlane.f32.xlu0 %v1843
    %v1907 = vpop.xlane.xlu0 %1906
    %1908 = vadd.xlane.f32.xlu0 %v1845
    %v1909 = vpop.xlane.xlu0 %1908
    %1910 = vadd.xlane.f32.xlu0 %v1847
    %v1911 = vpop.xlane.xlu0 %1910
    %1912 = vadd.xlane.f32.xlu0 %v1849
    %v1913 = vpop.xlane.xlu0 %1912
    %1914 = vadd.xlane.f32.xlu0 %v1851
    %v1915 = vpop.xlane.xlu0 %1914
    %1916 = vadd.xlane.f32.xlu0 %v1853
    %v1917 = vpop.xlane.xlu0 %1916
    %1918 = vadd.xlane.f32.xlu0 %v1855
    %v1919 = vpop.xlane.xlu0 %1918
    %1920 = vadd.xlane.f32.xlu0 %v1857
    %v1921 = vpop.xlane.xlu0 %1920
    %1922 = vadd.xlane.f32.xlu0 %v1859
    %v1923 = vpop.xlane.xlu0 %1922
    %1924 = vadd.xlane.f32.xlu0 %v1861
    %v1925 = vpop.xlane.xlu0 %1924
    %1926 = vadd.xlane.f32.xlu0 %v1863
    %v1927 = vpop.xlane.xlu0 %1926
    %1928 = vadd.xlane.f32.xlu0 %v1865
    %v1929 = vpop.xlane.xlu0 %1928
    %1930 = vadd.xlane.f32.xlu0 %v1867
    %v1931 = vpop.xlane.xlu0 %1930
    %1932 = vadd.xlane.f32.xlu0 %v1869
    %v1933 = vpop.xlane.xlu0 %1932
    %1934 = vadd.xlane.f32.xlu0 %v1871
    %v1935 = vpop.xlane.xlu0 %1934
    %1936 = vadd.xlane.f32.xlu0 %v1873
    %v1937 = vpop.xlane.xlu0 %1936
    %1938 = vadd.xlane.f32.xlu0 %v1875
    %v1939 = vpop.xlane.xlu0 %1938
    %1940 = vadd.xlane.f32.xlu0 %v1877
    %v1941 = vpop.xlane.xlu0 %1940
    %1942 = vadd.xlane.f32.xlu0 %v1879
    %v1943 = vpop.xlane.xlu0 %1942
    %1944 = vadd.xlane.f32.xlu0 %v1881
    %v1945 = vpop.xlane.xlu0 %1944
    %1946 = vadd.xlane.f32.xlu0 %v1883
    %v1947 = vpop.xlane.xlu0 %1946
    %1948 = vadd.xlane.f32.xlu0 %v1885
    %v1949 = vpop.xlane.xlu0 %1948
    %1950 = vadd.xlane.f32.xlu0 %v1887
    %v1951 = vpop.xlane.xlu0 %1950
    %1952 = vadd.xlane.f32.xlu0 %v1889
    %v1953 = vpop.xlane.xlu0 %1952
    %1954 = vadd.xlane.f32.xlu0 %v1891
    %v1955 = vpop.xlane.xlu0 %1954
    %1956 = vadd.xlane.f32.xlu0 %v1893
    %v1957 = vpop.xlane.xlu0 %1956
    %1958 = vadd.xlane.f32.xlu0 %v1895
    %v1959 = vpop.xlane.xlu0 %1958
    %1960 = vadd.xlane.f32.xlu0 %v1897
    %v1961 = vpop.xlane.xlu0 %1960
    %v1962 = vsub.f32 %v1899, 124.0
    %v1963 = vsub.f32 %v1901, 124.0
    %v1964 = vsub.f32 %v1903, 124.0
    %v1965 = vsub.f32 %v1905, 124.0
    %v1966 = vsub.f32 %v1907, 124.0
    %v1967 = vsub.f32 %v1909, 124.0
    %v1968 = vsub.f32 %v1911, 124.0
    %v1969 = vsub.f32 %v1913, 124.0
    %v1970 = vsub.f32 %v1915, 124.0
    %v1971 = vsub.f32 %v1917, 124.0
    %v1972 = vsub.f32 %v1919, 124.0
    %v1973 = vsub.f32 %v1921, 124.0
    %v1974 = vsub.f32 %v1923, 124.0
    %v1975 = vsub.f32 %v1925, 124.0
    %v1976 = vsub.f32 %v1927, 124.0
    %v1977 = vsub.f32 %v1929, 124.0
    %v1978 = vsub.f32 %v1931, 124.0
    %v1979 = vsub.f32 %v1933, 124.0
    %v1980 = vsub.f32 %v1935, 124.0
    %v1981 = vsub.f32 %v1937, 124.0
    %v1982 = vsub.f32 %v1939, 124.0
    %v1983 = vsub.f32 %v1941, 124.0
    %v1984 = vsub.f32 %v1943, 124.0
    %v1985 = vsub.f32 %v1945, 124.0
    %v1986 = vsub.f32 %v1947, 124.0
    %v1987 = vsub.f32 %v1949, 124.0
    %v1988 = vsub.f32 %v1951, 124.0
    %v1989 = vsub.f32 %v1953, 124.0
    %v1990 = vsub.f32 %v1955, 124.0
    %v1991 = vsub.f32 %v1957, 124.0
    %v1992 = vsub.f32 %v1959, 124.0
    %v1993 = vsub.f32 %v1961, 124.0
    %v1994 = vunpack.c.l.bf16 %v1417
    %v1995 = vunpack.c.l.bf16 %v1418
    %v1996 = vunpack.c.l.bf16 %v1419
    %v1997 = vunpack.c.l.bf16 %v1420
    %v1998 = vunpack.c.l.bf16 %v1421
    %v1999 = vunpack.c.l.bf16 %v1422
    %v2000 = vunpack.c.l.bf16 %v1423
    %v2001 = vunpack.c.l.bf16 %v1424
    %v2002 = vunpack.c.l.bf16 %v1425
    %v2003 = vunpack.c.l.bf16 %v1426
    %v2004 = vunpack.c.l.bf16 %v1427
    %v2005 = vunpack.c.l.bf16 %v1428
    %v2006 = vunpack.c.l.bf16 %v1429
    %v2007 = vunpack.c.l.bf16 %v1430
    %v2008 = vunpack.c.l.bf16 %v1431
    %v2009 = vunpack.c.l.bf16 %v1432
    %v2010 = vunpack.c.l.bf16 %v1433
    %v2011 = vunpack.c.l.bf16 %v1434
    %v2012 = vunpack.c.l.bf16 %v1435
    %v2013 = vunpack.c.l.bf16 %v1436
    %v2014 = vunpack.c.l.bf16 %v1437
    %v2015 = vunpack.c.l.bf16 %v1438
    %v2016 = vunpack.c.l.bf16 %v1439
    %v2017 = vunpack.c.l.bf16 %v1440
    %v2018 = vunpack.c.l.bf16 %v1441
    %v2019 = vunpack.c.l.bf16 %v1442
    %v2020 = vunpack.c.l.bf16 %v1443
    %v2021 = vunpack.c.l.bf16 %v1444
    %v2022 = vunpack.c.l.bf16 %v1445
    %v2023 = vunpack.c.l.bf16 %v1446
    %v2024 = vunpack.c.l.bf16 %v1447
    %v2025 = vunpack.c.l.bf16 %v1448
    %v2026 = vunpack.c.l.bf16 %v1385
    %v2027 = vunpack.c.l.bf16 %v1386
    %v2028 = vunpack.c.l.bf16 %v1387
    %v2029 = vunpack.c.l.bf16 %v1388
    %v2030 = vunpack.c.l.bf16 %v1389
    %v2031 = vunpack.c.l.bf16 %v1390
    %v2032 = vunpack.c.l.bf16 %v1391
    %v2033 = vunpack.c.l.bf16 %v1392
    %v2034 = vunpack.c.l.bf16 %v1393
    %v2035 = vunpack.c.l.bf16 %v1394
    %v2036 = vunpack.c.l.bf16 %v1395
    %v2037 = vunpack.c.l.bf16 %v1396
    %v2038 = vunpack.c.l.bf16 %v1397
    %v2039 = vunpack.c.l.bf16 %v1398
    %v2040 = vunpack.c.l.bf16 %v1399
    %v2041 = vunpack.c.l.bf16 %v1400
    %v2042 = vunpack.c.l.bf16 %v1401
    %v2043 = vunpack.c.l.bf16 %v1402
    %v2044 = vunpack.c.l.bf16 %v1403
    %v2045 = vunpack.c.l.bf16 %v1404
    %v2046 = vunpack.c.l.bf16 %v1405
    %v2047 = vunpack.c.l.bf16 %v1406
    %v2048 = vunpack.c.l.bf16 %v1407
    %v2049 = vunpack.c.l.bf16 %v1408
    %v2050 = vunpack.c.l.bf16 %v1409
    %v2051 = vunpack.c.l.bf16 %v1410
    %v2052 = vunpack.c.l.bf16 %v1411
    %v2053 = vunpack.c.l.bf16 %v1412
    %v2054 = vunpack.c.l.bf16 %v1413
    %v2055 = vunpack.c.l.bf16 %v1414
    %v2056 = vunpack.c.l.bf16 %v1415
    %v2057 = vunpack.c.l.bf16 %v1416
    %v2058 = vmul.f32 %v1994, %v2026
    %v2059 = vmul.f32 %v1995, %v2027
    %v2060 = vmul.f32 %v1996, %v2028
    %v2061 = vmul.f32 %v1997, %v2029
    %v2062 = vmul.f32 %v1998, %v2030
    %v2063 = vmul.f32 %v1999, %v2031
    %v2064 = vmul.f32 %v2000, %v2032
    %v2065 = vmul.f32 %v2001, %v2033
    %v2066 = vmul.f32 %v2002, %v2034
    %v2067 = vmul.f32 %v2003, %v2035
    %v2068 = vmul.f32 %v2004, %v2036
    %v2069 = vmul.f32 %v2005, %v2037
    %v2070 = vmul.f32 %v2006, %v2038
    %v2071 = vmul.f32 %v2007, %v2039
    %v2072 = vmul.f32 %v2008, %v2040
    %v2073 = vmul.f32 %v2009, %v2041
    %v2074 = vmul.f32 %v2010, %v2042
    %v2075 = vmul.f32 %v2011, %v2043
    %v2076 = vmul.f32 %v2012, %v2044
    %v2077 = vmul.f32 %v2013, %v2045
    %v2078 = vmul.f32 %v2014, %v2046
    %v2079 = vmul.f32 %v2015, %v2047
    %v2080 = vmul.f32 %v2016, %v2048
    %v2081 = vmul.f32 %v2017, %v2049
    %v2082 = vmul.f32 %v2018, %v2050
    %v2083 = vmul.f32 %v2019, %v2051
    %v2084 = vmul.f32 %v2020, %v2052
    %v2085 = vmul.f32 %v2021, %v2053
    %v2086 = vmul.f32 %v2022, %v2054
    %v2087 = vmul.f32 %v2023, %v2055
    %v2088 = vmul.f32 %v2024, %v2056
    %v2089 = vmul.f32 %v2025, %v2057
    %2090 = vadd.xlane.f32.xlu0 %v2058
    %v2091 = vpop.xlane.xlu0 %2090
    %2092 = vadd.xlane.f32.xlu0 %v2059
    %v2093 = vpop.xlane.xlu0 %2092
    %2094 = vadd.xlane.f32.xlu0 %v2060
    %v2095 = vpop.xlane.xlu0 %2094
    %2096 = vadd.xlane.f32.xlu0 %v2061
    %v2097 = vpop.xlane.xlu0 %2096
    %2098 = vadd.xlane.f32.xlu0 %v2062
    %v2099 = vpop.xlane.xlu0 %2098
    %2100 = vadd.xlane.f32.xlu0 %v2063
    %v2101 = vpop.xlane.xlu0 %2100
    %2102 = vadd.xlane.f32.xlu0 %v2064
    %v2103 = vpop.xlane.xlu0 %2102
    %2104 = vadd.xlane.f32.xlu0 %v2065
    %v2105 = vpop.xlane.xlu0 %2104
    %2106 = vadd.xlane.f32.xlu0 %v2066
    %v2107 = vpop.xlane.xlu0 %2106
    %2108 = vadd.xlane.f32.xlu0 %v2067
    %v2109 = vpop.xlane.xlu0 %2108
    %2110 = vadd.xlane.f32.xlu0 %v2068
    %v2111 = vpop.xlane.xlu0 %2110
    %2112 = vadd.xlane.f32.xlu0 %v2069
    %v2113 = vpop.xlane.xlu0 %2112
    %2114 = vadd.xlane.f32.xlu0 %v2070
    %v2115 = vpop.xlane.xlu0 %2114
    %2116 = vadd.xlane.f32.xlu0 %v2071
    %v2117 = vpop.xlane.xlu0 %2116
    %2118 = vadd.xlane.f32.xlu0 %v2072
    %v2119 = vpop.xlane.xlu0 %2118
    %2120 = vadd.xlane.f32.xlu0 %v2073
    %v2121 = vpop.xlane.xlu0 %2120
    %2122 = vadd.xlane.f32.xlu0 %v2074
    %v2123 = vpop.xlane.xlu0 %2122
    %2124 = vadd.xlane.f32.xlu0 %v2075
    %v2125 = vpop.xlane.xlu0 %2124
    %2126 = vadd.xlane.f32.xlu0 %v2076
    %v2127 = vpop.xlane.xlu0 %2126
    %2128 = vadd.xlane.f32.xlu0 %v2077
    %v2129 = vpop.xlane.xlu0 %2128
    %2130 = vadd.xlane.f32.xlu0 %v2078
    %v2131 = vpop.xlane.xlu0 %2130
    %2132 = vadd.xlane.f32.xlu0 %v2079
    %v2133 = vpop.xlane.xlu0 %2132
    %2134 = vadd.xlane.f32.xlu0 %v2080
    %v2135 = vpop.xlane.xlu0 %2134
    %2136 = vadd.xlane.f32.xlu0 %v2081
    %v2137 = vpop.xlane.xlu0 %2136
    %2138 = vadd.xlane.f32.xlu0 %v2082
    %v2139 = vpop.xlane.xlu0 %2138
    %2140 = vadd.xlane.f32.xlu0 %v2083
    %v2141 = vpop.xlane.xlu0 %2140
    %2142 = vadd.xlane.f32.xlu0 %v2084
    %v2143 = vpop.xlane.xlu0 %2142
    %2144 = vadd.xlane.f32.xlu0 %v2085
    %v2145 = vpop.xlane.xlu0 %2144
    %2146 = vadd.xlane.f32.xlu0 %v2086
    %v2147 = vpop.xlane.xlu0 %2146
    %2148 = vadd.xlane.f32.xlu0 %v2087
    %v2149 = vpop.xlane.xlu0 %2148
    %2150 = vadd.xlane.f32.xlu0 %v2088
    %v2151 = vpop.xlane.xlu0 %2150
    %2152 = vadd.xlane.f32.xlu0 %v2089
    %v2153 = vpop.xlane.xlu0 %2152
    %v2154 = vld [vmem:[%s5] sm:$0xff]
    %v2155 = vld [vmem:[%s5 + $0x8] sm:$0xff]
    %v2156 = vld [vmem:[%s5 + $0x10] sm:$0xff]
    %v2157 = vld [vmem:[%s5 + $0x18] sm:$0xff]
    %v2158 = vld [vmem:[%s5 + $0x20] sm:$0xff]
    %v2159 = vld [vmem:[%s5 + $0x28] sm:$0xff]
    %v2160 = vld [vmem:[%s5 + $0x30] sm:$0xff]
    %v2161 = vld [vmem:[%s5 + $0x38] sm:$0xff]
    %v2162 = vld [vmem:[%s5 + $0x40] sm:$0xff]
    %v2163 = vld [vmem:[%s5 + $0x48] sm:$0xff]
    %v2164 = vld [vmem:[%s5 + $0x50] sm:$0xff]
    %v2165 = vld [vmem:[%s5 + $0x58] sm:$0xff]
    %v2166 = vld [vmem:[%s5 + $0x60] sm:$0xff]
    %v2167 = vld [vmem:[%s5 + $0x68] sm:$0xff]
    %v2168 = vld [vmem:[%s5 + $0x70] sm:$0xff]
    %v2169 = vld [vmem:[%s5 + $0x78] sm:$0xff]
    %v2170 = vld [vmem:[%s5 + $0x80] sm:$0xff]
    %v2171 = vld [vmem:[%s5 + $0x88] sm:$0xff]
    %v2172 = vld [vmem:[%s5 + $0x90] sm:$0xff]
    %v2173 = vld [vmem:[%s5 + $0x98] sm:$0xff]
    %v2174 = vld [vmem:[%s5 + $0xa0] sm:$0xff]
    %v2175 = vld [vmem:[%s5 + $0xa8] sm:$0xff]
    %v2176 = vld [vmem:[%s5 + $0xb0] sm:$0xff]
    %v2177 = vld [vmem:[%s5 + $0xb8] sm:$0xff]
    %v2178 = vld [vmem:[%s5 + $0xc0] sm:$0xff]
    %v2179 = vld [vmem:[%s5 + $0xc8] sm:$0xff]
    %v2180 = vld [vmem:[%s5 + $0xd0] sm:$0xff]
    %v2181 = vld [vmem:[%s5 + $0xd8] sm:$0xff]
    %v2182 = vld [vmem:[%s5 + $0xe0] sm:$0xff]
    %v2183 = vld [vmem:[%s5 + $0xe8] sm:$0xff]
    %v2184 = vld [vmem:[%s5 + $0xf0] sm:$0xff]
    %v2185 = vld [vmem:[%s5 + $0xf8] sm:$0xff]
    %v2186 = vld [vmem:[#allocation2] sm:$0xff]
    %v2187 = vld [vmem:[#allocation2 + $0x8] sm:$0xff]
    %v2188 = vld [vmem:[#allocation2 + $0x10] sm:$0xff]
    %v2189 = vld [vmem:[#allocation2 + $0x18] sm:$0xff]
    %v2190 = vld [vmem:[#allocation2 + $0x20] sm:$0xff]
    %v2191 = vld [vmem:[#allocation2 + $0x28] sm:$0xff]
    %v2192 = vld [vmem:[#allocation2 + $0x30] sm:$0xff]
    %v2193 = vld [vmem:[#allocation2 + $0x38] sm:$0xff]
    %v2194 = vld [vmem:[#allocation2 + $0x40] sm:$0xff]
    %v2195 = vld [vmem:[#allocation2 + $0x48] sm:$0xff]
    %v2196 = vld [vmem:[#allocation2 + $0x50] sm:$0xff]
    %v2197 = vld [vmem:[#allocation2 + $0x58] sm:$0xff]
    %v2198 = vld [vmem:[#allocation2 + $0x60] sm:$0xff]
    %v2199 = vld [vmem:[#allocation2 + $0x68] sm:$0xff]
    %v2200 = vld [vmem:[#allocation2 + $0x70] sm:$0xff]
    %v2201 = vld [vmem:[#allocation2 + $0x78] sm:$0xff]
    %v2202 = vld [vmem:[#allocation2 + $0x80] sm:$0xff]
    %v2203 = vld [vmem:[#allocation2 + $0x88] sm:$0xff]
    %v2204 = vld [vmem:[#allocation2 + $0x90] sm:$0xff]
    %v2205 = vld [vmem:[#allocation2 + $0x98] sm:$0xff]
    %v2206 = vld [vmem:[#allocation2 + $0xa0] sm:$0xff]
    %v2207 = vld [vmem:[#allocation2 + $0xa8] sm:$0xff]
    %v2208 = vld [vmem:[#allocation2 + $0xb0] sm:$0xff]
    %v2209 = vld [vmem:[#allocation2 + $0xb8] sm:$0xff]
    %v2210 = vld [vmem:[#allocation2 + $0xc0] sm:$0xff]
    %v2211 = vld [vmem:[#allocation2 + $0xc8] sm:$0xff]
    %v2212 = vld [vmem:[#allocation2 + $0xd0] sm:$0xff]
    %v2213 = vld [vmem:[#allocation2 + $0xd8] sm:$0xff]
    %v2214 = vld [vmem:[#allocation2 + $0xe0] sm:$0xff]
    %v2215 = vld [vmem:[#allocation2 + $0xe8] sm:$0xff]
    %v2216 = vld [vmem:[#allocation2 + $0xf0] sm:$0xff]
    %v2217 = vld [vmem:[#allocation2 + $0xf8] sm:$0xff]
    %v2218 = vmul.f32 %v2091, %v2154
    %v2219 = vmul.f32 %v2093, %v2155
    %v2220 = vmul.f32 %v2095, %v2156
    %v2221 = vmul.f32 %v2097, %v2157
    %v2222 = vmul.f32 %v2099, %v2158
    %v2223 = vmul.f32 %v2101, %v2159
    %v2224 = vmul.f32 %v2103, %v2160
    %v2225 = vmul.f32 %v2105, %v2161
    %v2226 = vmul.f32 %v2107, %v2162
    %v2227 = vmul.f32 %v2109, %v2163
    %v2228 = vmul.f32 %v2111, %v2164
    %v2229 = vmul.f32 %v2113, %v2165
    %v2230 = vmul.f32 %v2115, %v2166
    %v2231 = vmul.f32 %v2117, %v2167
    %v2232 = vmul.f32 %v2119, %v2168
    %v2233 = vmul.f32 %v2121, %v2169
    %v2234 = vmul.f32 %v2123, %v2170
    %v2235 = vmul.f32 %v2125, %v2171
    %v2236 = vmul.f32 %v2127, %v2172
    %v2237 = vmul.f32 %v2129, %v2173
    %v2238 = vmul.f32 %v2131, %v2174
    %v2239 = vmul.f32 %v2133, %v2175
    %v2240 = vmul.f32 %v2135, %v2176
    %v2241 = vmul.f32 %v2137, %v2177
    %v2242 = vmul.f32 %v2139, %v2178
    %v2243 = vmul.f32 %v2141, %v2179
    %v2244 = vmul.f32 %v2143, %v2180
    %v2245 = vmul.f32 %v2145, %v2181
    %v2246 = vmul.f32 %v2147, %v2182
    %v2247 = vmul.f32 %v2149, %v2183
    %v2248 = vmul.f32 %v2151, %v2184
    %v2249 = vmul.f32 %v2153, %v2185
    %2282 = vrot.lane.b32.xlu0 %v2218, 125
    %v2283 = vpop.permute.xlu0 %2282
    %2284 = vrot.lane.b32.xlu0 %v2219, 125
    %v2285 = vpop.permute.xlu0 %2284
    %2286 = vrot.lane.b32.xlu0 %v2220, 125
    %v2287 = vpop.permute.xlu0 %2286
    %2288 = vrot.lane.b32.xlu0 %v2221, 125
    %v2289 = vpop.permute.xlu0 %2288
    %2290 = vrot.lane.b32.xlu0 %v2222, 125
    %v2291 = vpop.permute.xlu0 %2290
    %2292 = vrot.lane.b32.xlu0 %v2223, 125
    %v2293 = vpop.permute.xlu0 %2292
    %2294 = vrot.lane.b32.xlu0 %v2224, 125
    %v2295 = vpop.permute.xlu0 %2294
    %2296 = vrot.lane.b32.xlu0 %v2225, 125
    %v2297 = vpop.permute.xlu0 %2296
    %2298 = vrot.lane.b32.xlu0 %v2226, 125
    %v2299 = vpop.permute.xlu0 %2298
    %2300 = vrot.lane.b32.xlu0 %v2227, 125
    %v2301 = vpop.permute.xlu0 %2300
    %2302 = vrot.lane.b32.xlu0 %v2228, 125
    %v2303 = vpop.permute.xlu0 %2302
    %2304 = vrot.lane.b32.xlu0 %v2229, 125
    %v2305 = vpop.permute.xlu0 %2304
    %2306 = vrot.lane.b32.xlu0 %v2230, 125
    %v2307 = vpop.permute.xlu0 %2306
    %2308 = vrot.lane.b32.xlu0 %v2231, 125
    %v2309 = vpop.permute.xlu0 %2308
    %2310 = vrot.lane.b32.xlu0 %v2232, 125
    %v2311 = vpop.permute.xlu0 %2310
    %2312 = vrot.lane.b32.xlu0 %v2233, 125
    %v2313 = vpop.permute.xlu0 %2312
    %2314 = vrot.lane.b32.xlu0 %v2234, 125
    %v2315 = vpop.permute.xlu0 %2314
    %2316 = vrot.lane.b32.xlu0 %v2235, 125
    %v2317 = vpop.permute.xlu0 %2316
    %2318 = vrot.lane.b32.xlu0 %v2236, 125
    %v2319 = vpop.permute.xlu0 %2318
    %2320 = vrot.lane.b32.xlu0 %v2237, 125
    %v2321 = vpop.permute.xlu0 %2320
    %2322 = vrot.lane.b32.xlu0 %v2238, 125
    %v2323 = vpop.permute.xlu0 %2322
    %2324 = vrot.lane.b32.xlu0 %v2239, 125
    %v2325 = vpop.permute.xlu0 %2324
    %2326 = vrot.lane.b32.xlu0 %v2240, 125
    %v2327 = vpop.permute.xlu0 %2326
    %2328 = vrot.lane.b32.xlu0 %v2241, 125
    %v2329 = vpop.permute.xlu0 %2328
    %2330 = vrot.lane.b32.xlu0 %v2242, 125
    %v2331 = vpop.permute.xlu0 %2330
    %2332 = vrot.lane.b32.xlu0 %v2243, 125
    %v2333 = vpop.permute.xlu0 %2332
    %2334 = vrot.lane.b32.xlu0 %v2244, 125
    %v2335 = vpop.permute.xlu0 %2334
    %2336 = vrot.lane.b32.xlu0 %v2245, 125
    %v2337 = vpop.permute.xlu0 %2336
    %2338 = vrot.lane.b32.xlu0 %v2246, 125
    %v2339 = vpop.permute.xlu0 %2338
    %2340 = vrot.lane.b32.xlu0 %v2247, 125
    %v2341 = vpop.permute.xlu0 %2340
    %2342 = vrot.lane.b32.xlu0 %v2248, 125
    %v2343 = vpop.permute.xlu0 %2342
    %2344 = vrot.lane.b32.xlu0 %v2249, 125
    %v2345 = vpop.permute.xlu0 %2344
    %v2378 = vsub.f32 %v2186, %v2283
    %v2379 = vsub.f32 %v2187, %v2285
    %v2380 = vsub.f32 %v2188, %v2287
    %v2381 = vsub.f32 %v2189, %v2289
    %v2382 = vsub.f32 %v2190, %v2291
    %v2383 = vsub.f32 %v2191, %v2293
    %v2384 = vsub.f32 %v2192, %v2295
    %v2385 = vsub.f32 %v2193, %v2297
    %v2386 = vsub.f32 %v2194, %v2299
    %v2387 = vsub.f32 %v2195, %v2301
    %v2388 = vsub.f32 %v2196, %v2303
    %v2389 = vsub.f32 %v2197, %v2305
    %v2390 = vsub.f32 %v2198, %v2307
    %v2391 = vsub.f32 %v2199, %v2309
    %v2392 = vsub.f32 %v2200, %v2311
    %v2393 = vsub.f32 %v2201, %v2313
    %v2394 = vsub.f32 %v2202, %v2315
    %v2395 = vsub.f32 %v2203, %v2317
    %v2396 = vsub.f32 %v2204, %v2319
    %v2397 = vsub.f32 %v2205, %v2321
    %v2398 = vsub.f32 %v2206, %v2323
    %v2399 = vsub.f32 %v2207, %v2325
    %v2400 = vsub.f32 %v2208, %v2327
    %v2401 = vsub.f32 %v2209, %v2329
    %v2402 = vsub.f32 %v2210, %v2331
    %v2403 = vsub.f32 %v2211, %v2333
    %v2404 = vsub.f32 %v2212, %v2335
    %v2405 = vsub.f32 %v2213, %v2337
    %v2406 = vsub.f32 %v2214, %v2339
    %v2407 = vsub.f32 %v2215, %v2341
    %v2408 = vsub.f32 %v2216, %v2343
    %v2409 = vsub.f32 %v2217, %v2345
    %v2410 = vld [vmem:[#allocation3] sm:$0xff]
    %v2411 = vld [vmem:[#allocation3 + $0x8] sm:$0xff]
    %v2412 = vld [vmem:[#allocation3 + $0x10] sm:$0xff]
    %v2413 = vld [vmem:[#allocation3 + $0x18] sm:$0xff]
    %v2414 = vld [vmem:[#allocation3 + $0x20] sm:$0xff]
    %v2415 = vld [vmem:[#allocation3 + $0x28] sm:$0xff]
    %v2416 = vld [vmem:[#allocation3 + $0x30] sm:$0xff]
    %v2417 = vld [vmem:[#allocation3 + $0x38] sm:$0xff]
    %v2418 = vld [vmem:[#allocation3 + $0x40] sm:$0xff]
    %v2419 = vld [vmem:[#allocation3 + $0x48] sm:$0xff]
    %v2420 = vld [vmem:[#allocation3 + $0x50] sm:$0xff]
    %v2421 = vld [vmem:[#allocation3 + $0x58] sm:$0xff]
    %v2422 = vld [vmem:[#allocation3 + $0x60] sm:$0xff]
    %v2423 = vld [vmem:[#allocation3 + $0x68] sm:$0xff]
    %v2424 = vld [vmem:[#allocation3 + $0x70] sm:$0xff]
    %v2425 = vld [vmem:[#allocation3 + $0x78] sm:$0xff]
    %v2426 = vld [vmem:[#allocation3 + $0x80] sm:$0xff]
    %v2427 = vld [vmem:[#allocation3 + $0x88] sm:$0xff]
    %v2428 = vld [vmem:[#allocation3 + $0x90] sm:$0xff]
    %v2429 = vld [vmem:[#allocation3 + $0x98] sm:$0xff]
    %v2430 = vld [vmem:[#allocation3 + $0xa0] sm:$0xff]
    %v2431 = vld [vmem:[#allocation3 + $0xa8] sm:$0xff]
    %v2432 = vld [vmem:[#allocation3 + $0xb0] sm:$0xff]
    %v2433 = vld [vmem:[#allocation3 + $0xb8] sm:$0xff]
    %v2434 = vld [vmem:[#allocation3 + $0xc0] sm:$0xff]
    %v2435 = vld [vmem:[#allocation3 + $0xc8] sm:$0xff]
    %v2436 = vld [vmem:[#allocation3 + $0xd0] sm:$0xff]
    %v2437 = vld [vmem:[#allocation3 + $0xd8] sm:$0xff]
    %v2438 = vld [vmem:[#allocation3 + $0xe0] sm:$0xff]
    %v2439 = vld [vmem:[#allocation3 + $0xe8] sm:$0xff]
    %v2440 = vld [vmem:[#allocation3 + $0xf0] sm:$0xff]
    %v2441 = vld [vmem:[#allocation3 + $0xf8] sm:$0xff]
    %v2442 = vmul.f32 %v2091, 1.442695
    %v2443 = vpow.pop %v2442
    %v2444 = vmul.f32 %v2093, 1.442695
    %v2445 = vpow.pop %v2444
    %v2446 = vmul.f32 %v2095, 1.442695
    %v2447 = vpow.pop %v2446
    %v2448 = vmul.f32 %v2097, 1.442695
    %v2449 = vpow.pop %v2448
    %v2450 = vmul.f32 %v2099, 1.442695
    %v2451 = vpow.pop %v2450
    %v2452 = vmul.f32 %v2101, 1.442695
    %v2453 = vpow.pop %v2452
    %v2454 = vmul.f32 %v2103, 1.442695
    %v2455 = vpow.pop %v2454
    %v2456 = vmul.f32 %v2105, 1.442695
    %v2457 = vpow.pop %v2456
    %v2458 = vmul.f32 %v2107, 1.442695
    %v2459 = vpow.pop %v2458
    %v2460 = vmul.f32 %v2109, 1.442695
    %v2461 = vpow.pop %v2460
    %v2462 = vmul.f32 %v2111, 1.442695
    %v2463 = vpow.pop %v2462
    %v2464 = vmul.f32 %v2113, 1.442695
    %v2465 = vpow.pop %v2464
    %v2466 = vmul.f32 %v2115, 1.442695
    %v2467 = vpow.pop %v2466
    %v2468 = vmul.f32 %v2117, 1.442695
    %v2469 = vpow.pop %v2468
    %v2470 = vmul.f32 %v2119, 1.442695
    %v2471 = vpow.pop %v2470
    %v2472 = vmul.f32 %v2121, 1.442695
    %v2473 = vpow.pop %v2472
    %v2474 = vmul.f32 %v2123, 1.442695
    %v2475 = vpow.pop %v2474
    %v2476 = vmul.f32 %v2125, 1.442695
    %v2477 = vpow.pop %v2476
    %v2478 = vmul.f32 %v2127, 1.442695
    %v2479 = vpow.pop %v2478
    %v2480 = vmul.f32 %v2129, 1.442695
    %v2481 = vpow.pop %v2480
    %v2482 = vmul.f32 %v2131, 1.442695
    %v2483 = vpow.pop %v2482
    %v2484 = vmul.f32 %v2133, 1.442695
    %v2485 = vpow.pop %v2484
    %v2486 = vmul.f32 %v2135, 1.442695
    %v2487 = vpow.pop %v2486
    %v2488 = vmul.f32 %v2137, 1.442695
    %v2489 = vpow.pop %v2488
    %v2490 = vmul.f32 %v2139, 1.442695
    %v2491 = vpow.pop %v2490
    %v2492 = vmul.f32 %v2141, 1.442695
    %v2493 = vpow.pop %v2492
    %v2494 = vmul.f32 %v2143, 1.442695
    %v2495 = vpow.pop %v2494
    %v2496 = vmul.f32 %v2145, 1.442695
    %v2497 = vpow.pop %v2496
    %v2498 = vmul.f32 %v2147, 1.442695
    %v2499 = vpow.pop %v2498
    %v2500 = vmul.f32 %v2149, 1.442695
    %v2501 = vpow.pop %v2500
    %v2502 = vmul.f32 %v2151, 1.442695
    %v2503 = vpow.pop %v2502
    %v2504 = vmul.f32 %v2153, 1.442695
    %v2505 = vpow.pop %v2504
    %v2506 = vmul.f32 %v2443, %v2154
    %v2507 = vmul.f32 %v2445, %v2155
    %v2508 = vmul.f32 %v2447, %v2156
    %v2509 = vmul.f32 %v2449, %v2157
    %v2510 = vmul.f32 %v2451, %v2158
    %v2511 = vmul.f32 %v2453, %v2159
    %v2512 = vmul.f32 %v2455, %v2160
    %v2513 = vmul.f32 %v2457, %v2161
    %v2514 = vmul.f32 %v2459, %v2162
    %v2515 = vmul.f32 %v2461, %v2163
    %v2516 = vmul.f32 %v2463, %v2164
    %v2517 = vmul.f32 %v2465, %v2165
    %v2518 = vmul.f32 %v2467, %v2166
    %v2519 = vmul.f32 %v2469, %v2167
    %v2520 = vmul.f32 %v2471, %v2168
    %v2521 = vmul.f32 %v2473, %v2169
    %v2522 = vmul.f32 %v2475, %v2170
    %v2523 = vmul.f32 %v2477, %v2171
    %v2524 = vmul.f32 %v2479, %v2172
    %v2525 = vmul.f32 %v2481, %v2173
    %v2526 = vmul.f32 %v2483, %v2174
    %v2527 = vmul.f32 %v2485, %v2175
    %v2528 = vmul.f32 %v2487, %v2176
    %v2529 = vmul.f32 %v2489, %v2177
    %v2530 = vmul.f32 %v2491, %v2178
    %v2531 = vmul.f32 %v2493, %v2179
    %v2532 = vmul.f32 %v2495, %v2180
    %v2533 = vmul.f32 %v2497, %v2181
    %v2534 = vmul.f32 %v2499, %v2182
    %v2535 = vmul.f32 %v2501, %v2183
    %v2536 = vmul.f32 %v2503, %v2184
    %v2537 = vmul.f32 %v2505, %v2185
    %2570 = vrot.lane.b32.xlu0 %v2506, 125
    %v2571 = vpop.permute.xlu0 %2570
    %2572 = vrot.lane.b32.xlu0 %v2507, 125
    %v2573 = vpop.permute.xlu0 %2572
    %2574 = vrot.lane.b32.xlu0 %v2508, 125
    %v2575 = vpop.permute.xlu0 %2574
    %2576 = vrot.lane.b32.xlu0 %v2509, 125
    %v2577 = vpop.permute.xlu0 %2576
    %2578 = vrot.lane.b32.xlu0 %v2510, 125
    %v2579 = vpop.permute.xlu0 %2578
    %2580 = vrot.lane.b32.xlu0 %v2511, 125
    %v2581 = vpop.permute.xlu0 %2580
    %2582 = vrot.lane.b32.xlu0 %v2512, 125
    %v2583 = vpop.permute.xlu0 %2582
    %2584 = vrot.lane.b32.xlu0 %v2513, 125
    %v2585 = vpop.permute.xlu0 %2584
    %2586 = vrot.lane.b32.xlu0 %v2514, 125
    %v2587 = vpop.permute.xlu0 %2586
    %2588 = vrot.lane.b32.xlu0 %v2515, 125
    %v2589 = vpop.permute.xlu0 %2588
    %2590 = vrot.lane.b32.xlu0 %v2516, 125
    %v2591 = vpop.permute.xlu0 %2590
    %2592 = vrot.lane.b32.xlu0 %v2517, 125
    %v2593 = vpop.permute.xlu0 %2592
    %2594 = vrot.lane.b32.xlu0 %v2518, 125
    %v2595 = vpop.permute.xlu0 %2594
    %2596 = vrot.lane.b32.xlu0 %v2519, 125
    %v2597 = vpop.permute.xlu0 %2596
    %2598 = vrot.lane.b32.xlu0 %v2520, 125
    %v2599 = vpop.permute.xlu0 %2598
    %2600 = vrot.lane.b32.xlu0 %v2521, 125
    %v2601 = vpop.permute.xlu0 %2600
    %2602 = vrot.lane.b32.xlu0 %v2522, 125
    %v2603 = vpop.permute.xlu0 %2602
    %2604 = vrot.lane.b32.xlu0 %v2523, 125
    %v2605 = vpop.permute.xlu0 %2604
    %2606 = vrot.lane.b32.xlu0 %v2524, 125
    %v2607 = vpop.permute.xlu0 %2606
    %2608 = vrot.lane.b32.xlu0 %v2525, 125
    %v2609 = vpop.permute.xlu0 %2608
    %2610 = vrot.lane.b32.xlu0 %v2526, 125
    %v2611 = vpop.permute.xlu0 %2610
    %2612 = vrot.lane.b32.xlu0 %v2527, 125
    %v2613 = vpop.permute.xlu0 %2612
    %2614 = vrot.lane.b32.xlu0 %v2528, 125
    %v2615 = vpop.permute.xlu0 %2614
    %2616 = vrot.lane.b32.xlu0 %v2529, 125
    %v2617 = vpop.permute.xlu0 %2616
    %2618 = vrot.lane.b32.xlu0 %v2530, 125
    %v2619 = vpop.permute.xlu0 %2618
    %2620 = vrot.lane.b32.xlu0 %v2531, 125
    %v2621 = vpop.permute.xlu0 %2620
    %2622 = vrot.lane.b32.xlu0 %v2532, 125
    %v2623 = vpop.permute.xlu0 %2622
    %2624 = vrot.lane.b32.xlu0 %v2533, 125
    %v2625 = vpop.permute.xlu0 %2624
    %2626 = vrot.lane.b32.xlu0 %v2534, 125
    %v2627 = vpop.permute.xlu0 %2626
    %2628 = vrot.lane.b32.xlu0 %v2535, 125
    %v2629 = vpop.permute.xlu0 %2628
    %2630 = vrot.lane.b32.xlu0 %v2536, 125
    %v2631 = vpop.permute.xlu0 %2630
    %2632 = vrot.lane.b32.xlu0 %v2537, 125
    %v2633 = vpop.permute.xlu0 %2632
    %v2666 = vsub.f32 %v2410, %v2571
    %v2667 = vsub.f32 %v2411, %v2573
    %v2668 = vsub.f32 %v2412, %v2575
    %v2669 = vsub.f32 %v2413, %v2577
    %v2670 = vsub.f32 %v2414, %v2579
    %v2671 = vsub.f32 %v2415, %v2581
    %v2672 = vsub.f32 %v2416, %v2583
    %v2673 = vsub.f32 %v2417, %v2585
    %v2674 = vsub.f32 %v2418, %v2587
    %v2675 = vsub.f32 %v2419, %v2589
    %v2676 = vsub.f32 %v2420, %v2591
    %v2677 = vsub.f32 %v2421, %v2593
    %v2678 = vsub.f32 %v2422, %v2595
    %v2679 = vsub.f32 %v2423, %v2597
    %v2680 = vsub.f32 %v2424, %v2599
    %v2681 = vsub.f32 %v2425, %v2601
    %v2682 = vsub.f32 %v2426, %v2603
    %v2683 = vsub.f32 %v2427, %v2605
    %v2684 = vsub.f32 %v2428, %v2607
    %v2685 = vsub.f32 %v2429, %v2609
    %v2686 = vsub.f32 %v2430, %v2611
    %v2687 = vsub.f32 %v2431, %v2613
    %v2688 = vsub.f32 %v2432, %v2615
    %v2689 = vsub.f32 %v2433, %v2617
    %v2690 = vsub.f32 %v2434, %v2619
    %v2691 = vsub.f32 %v2435, %v2621
    %v2692 = vsub.f32 %v2436, %v2623
    %v2693 = vsub.f32 %v2437, %v2625
    %v2694 = vsub.f32 %v2438, %v2627
    %v2695 = vsub.f32 %v2439, %v2629
    %v2696 = vsub.f32 %v2440, %v2631
    %v2697 = vsub.f32 %v2441, %v2633
    %vm2698 = vcmp.gt.f32.partialorder %v2154, 0.0
    %vm2699 = vcmp.gt.f32.partialorder %v2155, 0.0
    %vm2700 = vcmp.gt.f32.partialorder %v2156, 0.0
    %vm2701 = vcmp.gt.f32.partialorder %v2157, 0.0
    %vm2702 = vcmp.gt.f32.partialorder %v2158, 0.0
    %vm2703 = vcmp.gt.f32.partialorder %v2159, 0.0
    %vm2704 = vcmp.gt.f32.partialorder %v2160, 0.0
    %vm2705 = vcmp.gt.f32.partialorder %v2161, 0.0
    %vm2706 = vcmp.gt.f32.partialorder %v2162, 0.0
    %vm2707 = vcmp.gt.f32.partialorder %v2163, 0.0
    %vm2708 = vcmp.gt.f32.partialorder %v2164, 0.0
    %vm2709 = vcmp.gt.f32.partialorder %v2165, 0.0
    %vm2710 = vcmp.gt.f32.partialorder %v2166, 0.0
    %vm2711 = vcmp.gt.f32.partialorder %v2167, 0.0
    %vm2712 = vcmp.gt.f32.partialorder %v2168, 0.0
    %vm2713 = vcmp.gt.f32.partialorder %v2169, 0.0
    %vm2714 = vcmp.gt.f32.partialorder %v2170, 0.0
    %vm2715 = vcmp.gt.f32.partialorder %v2171, 0.0
    %vm2716 = vcmp.gt.f32.partialorder %v2172, 0.0
    %vm2717 = vcmp.gt.f32.partialorder %v2173, 0.0
    %vm2718 = vcmp.gt.f32.partialorder %v2174, 0.0
    %vm2719 = vcmp.gt.f32.partialorder %v2175, 0.0
    %vm2720 = vcmp.gt.f32.partialorder %v2176, 0.0
    %vm2721 = vcmp.gt.f32.partialorder %v2177, 0.0
    %vm2722 = vcmp.gt.f32.partialorder %v2178, 0.0
    %vm2723 = vcmp.gt.f32.partialorder %v2179, 0.0
    %vm2724 = vcmp.gt.f32.partialorder %v2180, 0.0
    %vm2725 = vcmp.gt.f32.partialorder %v2181, 0.0
    %vm2726 = vcmp.gt.f32.partialorder %v2182, 0.0
    %vm2727 = vcmp.gt.f32.partialorder %v2183, 0.0
    %vm2728 = vcmp.gt.f32.partialorder %v2184, 0.0
    %vm2729 = vcmp.gt.f32.partialorder %v2185, 0.0
    %v2730 = vadd.f32 %v2666, %v1771
    %v2731 = vadd.f32 %v2667, %v1773
    %v2732 = vadd.f32 %v2668, %v1775
    %v2733 = vadd.f32 %v2669, %v1777
    %v2734 = vadd.f32 %v2670, %v1779
    %v2735 = vadd.f32 %v2671, %v1781
    %v2736 = vadd.f32 %v2672, %v1783
    %v2737 = vadd.f32 %v2673, %v1785
    %v2738 = vadd.f32 %v2674, %v1787
    %v2739 = vadd.f32 %v2675, %v1789
    %v2740 = vadd.f32 %v2676, %v1791
    %v2741 = vadd.f32 %v2677, %v1793
    %v2742 = vadd.f32 %v2678, %v1795
    %v2743 = vadd.f32 %v2679, %v1797
    %v2744 = vadd.f32 %v2680, %v1799
    %v2745 = vadd.f32 %v2681, %v1801
    %v2746 = vadd.f32 %v2682, %v1803
    %v2747 = vadd.f32 %v2683, %v1805
    %v2748 = vadd.f32 %v2684, %v1807
    %v2749 = vadd.f32 %v2685, %v1809
    %v2750 = vadd.f32 %v2686, %v1811
    %v2751 = vadd.f32 %v2687, %v1813
    %v2752 = vadd.f32 %v2688, %v1815
    %v2753 = vadd.f32 %v2689, %v1817
    %v2754 = vadd.f32 %v2690, %v1819
    %v2755 = vadd.f32 %v2691, %v1821
    %v2756 = vadd.f32 %v2692, %v1823
    %v2757 = vadd.f32 %v2693, %v1825
    %v2758 = vadd.f32 %v2694, %v1827
    %v2759 = vadd.f32 %v2695, %v1829
    %v2760 = vadd.f32 %v2696, %v1831
    %v2761 = vadd.f32 %v2697, %v1833
    %v2762 = vsel %vm2698, %v2730, 1.0
    %v2763 = vsel %vm2699, %v2731, 1.0
    %v2764 = vsel %vm2700, %v2732, 1.0
    %v2765 = vsel %vm2701, %v2733, 1.0
    %v2766 = vsel %vm2702, %v2734, 1.0
    %v2767 = vsel %vm2703, %v2735, 1.0
    %v2768 = vsel %vm2704, %v2736, 1.0
    %v2769 = vsel %vm2705, %v2737, 1.0
    %v2770 = vsel %vm2706, %v2738, 1.0
    %v2771 = vsel %vm2707, %v2739, 1.0
    %v2772 = vsel %vm2708, %v2740, 1.0
    %v2773 = vsel %vm2709, %v2741, 1.0
    %v2774 = vsel %vm2710, %v2742, 1.0
    %v2775 = vsel %vm2711, %v2743, 1.0
    %v2776 = vsel %vm2712, %v2744, 1.0
    %v2777 = vsel %vm2713, %v2745, 1.0
    %v2778 = vsel %vm2714, %v2746, 1.0
    %v2779 = vsel %vm2715, %v2747, 1.0
    %v2780 = vsel %vm2716, %v2748, 1.0
    %v2781 = vsel %vm2717, %v2749, 1.0
    %v2782 = vsel %vm2718, %v2750, 1.0
    %v2783 = vsel %vm2719, %v2751, 1.0
    %v2784 = vsel %vm2720, %v2752, 1.0
    %v2785 = vsel %vm2721, %v2753, 1.0
    %v2786 = vsel %vm2722, %v2754, 1.0
    %v2787 = vsel %vm2723, %v2755, 1.0
    %v2788 = vsel %vm2724, %v2756, 1.0
    %v2789 = vsel %vm2725, %v2757, 1.0
    %v2790 = vsel %vm2726, %v2758, 1.0
    %v2791 = vsel %vm2727, %v2759, 1.0
    %v2792 = vsel %vm2728, %v2760, 1.0
    %v2793 = vsel %vm2729, %v2761, 1.0
    %v2794 = vadd.f32 %v2666, %v1962
    %v2795 = vadd.f32 %v2667, %v1963
    %v2796 = vadd.f32 %v2668, %v1964
    %v2797 = vadd.f32 %v2669, %v1965
    %v2798 = vadd.f32 %v2670, %v1966
    %v2799 = vadd.f32 %v2671, %v1967
    %v2800 = vadd.f32 %v2672, %v1968
    %v2801 = vadd.f32 %v2673, %v1969
    %v2802 = vadd.f32 %v2674, %v1970
    %v2803 = vadd.f32 %v2675, %v1971
    %v2804 = vadd.f32 %v2676, %v1972
    %v2805 = vadd.f32 %v2677, %v1973
    %v2806 = vadd.f32 %v2678, %v1974
    %v2807 = vadd.f32 %v2679, %v1975
    %v2808 = vadd.f32 %v2680, %v1976
    %v2809 = vadd.f32 %v2681, %v1977
    %v2810 = vadd.f32 %v2682, %v1978
    %v2811 = vadd.f32 %v2683, %v1979
    %v2812 = vadd.f32 %v2684, %v1980
    %v2813 = vadd.f32 %v2685, %v1981
    %v2814 = vadd.f32 %v2686, %v1982
    %v2815 = vadd.f32 %v2687, %v1983
    %v2816 = vadd.f32 %v2688, %v1984
    %v2817 = vadd.f32 %v2689, %v1985
    %v2818 = vadd.f32 %v2690, %v1986
    %v2819 = vadd.f32 %v2691, %v1987
    %v2820 = vadd.f32 %v2692, %v1988
    %v2821 = vadd.f32 %v2693, %v1989
    %v2822 = vadd.f32 %v2694, %v1990
    %v2823 = vadd.f32 %v2695, %v1991
    %v2824 = vadd.f32 %v2696, %v1992
    %v2825 = vadd.f32 %v2697, %v1993
    %2858 = vrot.lane.b32.xlu0 %v2794, 1
    %v2859 = vpop.permute.xlu0 %2858
    %2860 = vrot.lane.b32.xlu0 %v2795, 1
    %v2861 = vpop.permute.xlu0 %2860
    %2862 = vrot.lane.b32.xlu0 %v2796, 1
    %v2863 = vpop.permute.xlu0 %2862
    %2864 = vrot.lane.b32.xlu0 %v2797, 1
    %v2865 = vpop.permute.xlu0 %2864
    %2866 = vrot.lane.b32.xlu0 %v2798, 1
    %v2867 = vpop.permute.xlu0 %2866
    %2868 = vrot.lane.b32.xlu0 %v2799, 1
    %v2869 = vpop.permute.xlu0 %2868
    %2870 = vrot.lane.b32.xlu0 %v2800, 1
    %v2871 = vpop.permute.xlu0 %2870
    %2872 = vrot.lane.b32.xlu0 %v2801, 1
    %v2873 = vpop.permute.xlu0 %2872
    %2874 = vrot.lane.b32.xlu0 %v2802, 1
    %v2875 = vpop.permute.xlu0 %2874
    %2876 = vrot.lane.b32.xlu0 %v2803, 1
    %v2877 = vpop.permute.xlu0 %2876
    %2878 = vrot.lane.b32.xlu0 %v2804, 1
    %v2879 = vpop.permute.xlu0 %2878
    %2880 = vrot.lane.b32.xlu0 %v2805, 1
    %v2881 = vpop.permute.xlu0 %2880
    %2882 = vrot.lane.b32.xlu0 %v2806, 1
    %v2883 = vpop.permute.xlu0 %2882
    %2884 = vrot.lane.b32.xlu0 %v2807, 1
    %v2885 = vpop.permute.xlu0 %2884
    %2886 = vrot.lane.b32.xlu0 %v2808, 1
    %v2887 = vpop.permute.xlu0 %2886
    %2888 = vrot.lane.b32.xlu0 %v2809, 1
    %v2889 = vpop.permute.xlu0 %2888
    %2890 = vrot.lane.b32.xlu0 %v2810, 1
    %v2891 = vpop.permute.xlu0 %2890
    %2892 = vrot.lane.b32.xlu0 %v2811, 1
    %v2893 = vpop.permute.xlu0 %2892
    %2894 = vrot.lane.b32.xlu0 %v2812, 1
    %v2895 = vpop.permute.xlu0 %2894
    %2896 = vrot.lane.b32.xlu0 %v2813, 1
    %v2897 = vpop.permute.xlu0 %2896
    %2898 = vrot.lane.b32.xlu0 %v2814, 1
    %v2899 = vpop.permute.xlu0 %2898
    %2900 = vrot.lane.b32.xlu0 %v2815, 1
    %v2901 = vpop.permute.xlu0 %2900
    %2902 = vrot.lane.b32.xlu0 %v2816, 1
    %v2903 = vpop.permute.xlu0 %2902
    %2904 = vrot.lane.b32.xlu0 %v2817, 1
    %v2905 = vpop.permute.xlu0 %2904
    %2906 = vrot.lane.b32.xlu0 %v2818, 1
    %v2907 = vpop.permute.xlu0 %2906
    %2908 = vrot.lane.b32.xlu0 %v2819, 1
    %v2909 = vpop.permute.xlu0 %2908
    %2910 = vrot.lane.b32.xlu0 %v2820, 1
    %v2911 = vpop.permute.xlu0 %2910
    %2912 = vrot.lane.b32.xlu0 %v2821, 1
    %v2913 = vpop.permute.xlu0 %2912
    %2914 = vrot.lane.b32.xlu0 %v2822, 1
    %v2915 = vpop.permute.xlu0 %2914
    %2916 = vrot.lane.b32.xlu0 %v2823, 1
    %v2917 = vpop.permute.xlu0 %2916
    %2918 = vrot.lane.b32.xlu0 %v2824, 1
    %v2919 = vpop.permute.xlu0 %2918
    %2920 = vrot.lane.b32.xlu0 %v2825, 1
    %v2921 = vpop.permute.xlu0 %2920
    %v2954 = vsel %vm2698, %v2859, 1.0
    %v2955 = vsel %vm2699, %v2861, 1.0
    %v2956 = vsel %vm2700, %v2863, 1.0
    %v2957 = vsel %vm2701, %v2865, 1.0
    %v2958 = vsel %vm2702, %v2867, 1.0
    %v2959 = vsel %vm2703, %v2869, 1.0
    %v2960 = vsel %vm2704, %v2871, 1.0
    %v2961 = vsel %vm2705, %v2873, 1.0
    %v2962 = vsel %vm2706, %v2875, 1.0
    %v2963 = vsel %vm2707, %v2877, 1.0
    %v2964 = vsel %vm2708, %v2879, 1.0
    %v2965 = vsel %vm2709, %v2881, 1.0
    %v2966 = vsel %vm2710, %v2883, 1.0
    %v2967 = vsel %vm2711, %v2885, 1.0
    %v2968 = vsel %vm2712, %v2887, 1.0
    %v2969 = vsel %vm2713, %v2889, 1.0
    %v2970 = vsel %vm2714, %v2891, 1.0
    %v2971 = vsel %vm2715, %v2893, 1.0
    %v2972 = vsel %vm2716, %v2895, 1.0
    %v2973 = vsel %vm2717, %v2897, 1.0
    %v2974 = vsel %vm2718, %v2899, 1.0
    %v2975 = vsel %vm2719, %v2901, 1.0
    %v2976 = vsel %vm2720, %v2903, 1.0
    %v2977 = vsel %vm2721, %v2905, 1.0
    %v2978 = vsel %vm2722, %v2907, 1.0
    %v2979 = vsel %vm2723, %v2909, 1.0
    %v2980 = vsel %vm2724, %v2911, 1.0
    %v2981 = vsel %vm2725, %v2913, 1.0
    %v2982 = vsel %vm2726, %v2915, 1.0
    %v2983 = vsel %vm2727, %v2917, 1.0
    %v2984 = vsel %vm2728, %v2919, 1.0
    %v2985 = vsel %vm2729, %v2921, 1.0
    %v2986 = vlog2.pop %v2762
    %v2987 = vmul.f32 %v2986, 0.6931472
    %v2988 = vlog2.pop %v2763
    %v2989 = vmul.f32 %v2988, 0.6931472
    %v2990 = vlog2.pop %v2764
    %v2991 = vmul.f32 %v2990, 0.6931472
    %v2992 = vlog2.pop %v2765
    %v2993 = vmul.f32 %v2992, 0.6931472
    %v2994 = vlog2.pop %v2766
    %v2995 = vmul.f32 %v2994, 0.6931472
    %v2996 = vlog2.pop %v2767
    %v2997 = vmul.f32 %v2996, 0.6931472
    %v2998 = vlog2.pop %v2768
    %v2999 = vmul.f32 %v2998, 0.6931472
    %v3000 = vlog2.pop %v2769
    %v3001 = vmul.f32 %v3000, 0.6931472
    %v3002 = vlog2.pop %v2770
    %v3003 = vmul.f32 %v3002, 0.6931472
    %v3004 = vlog2.pop %v2771
    %v3005 = vmul.f32 %v3004, 0.6931472
    %v3006 = vlog2.pop %v2772
    %v3007 = vmul.f32 %v3006, 0.6931472
    %v3008 = vlog2.pop %v2773
    %v3009 = vmul.f32 %v3008, 0.6931472
    %v3010 = vlog2.pop %v2774
    %v3011 = vmul.f32 %v3010, 0.6931472
    %v3012 = vlog2.pop %v2775
    %v3013 = vmul.f32 %v3012, 0.6931472
    %v3014 = vlog2.pop %v2776
    %v3015 = vmul.f32 %v3014, 0.6931472
    %v3016 = vlog2.pop %v2777
    %v3017 = vmul.f32 %v3016, 0.6931472
    %v3018 = vlog2.pop %v2778
    %v3019 = vmul.f32 %v3018, 0.6931472
    %v3020 = vlog2.pop %v2779
    %v3021 = vmul.f32 %v3020, 0.6931472
    %v3022 = vlog2.pop %v2780
    %v3023 = vmul.f32 %v3022, 0.6931472
    %v3024 = vlog2.pop %v2781
    %v3025 = vmul.f32 %v3024, 0.6931472
    %v3026 = vlog2.pop %v2782
    %v3027 = vmul.f32 %v3026, 0.6931472
    %v3028 = vlog2.pop %v2783
    %v3029 = vmul.f32 %v3028, 0.6931472
    %v3030 = vlog2.pop %v2784
    %v3031 = vmul.f32 %v3030, 0.6931472
    %v3032 = vlog2.pop %v2785
    %v3033 = vmul.f32 %v3032, 0.6931472
    %v3034 = vlog2.pop %v2786
    %v3035 = vmul.f32 %v3034, 0.6931472
    %v3036 = vlog2.pop %v2787
    %v3037 = vmul.f32 %v3036, 0.6931472
    %v3038 = vlog2.pop %v2788
    %v3039 = vmul.f32 %v3038, 0.6931472
    %v3040 = vlog2.pop %v2789
    %v3041 = vmul.f32 %v3040, 0.6931472
    %v3042 = vlog2.pop %v2790
    %v3043 = vmul.f32 %v3042, 0.6931472
    %v3044 = vlog2.pop %v2791
    %v3045 = vmul.f32 %v3044, 0.6931472
    %v3046 = vlog2.pop %v2792
    %v3047 = vmul.f32 %v3046, 0.6931472
    %v3048 = vlog2.pop %v2793
    %v3049 = vmul.f32 %v3048, 0.6931472
    %v3050 = vmul.f32 %v2154, %v2987
    %v3051 = vmul.f32 %v2155, %v2989
    %v3052 = vmul.f32 %v2156, %v2991
    %v3053 = vmul.f32 %v2157, %v2993
    %v3054 = vmul.f32 %v2158, %v2995
    %v3055 = vmul.f32 %v2159, %v2997
    %v3056 = vmul.f32 %v2160, %v2999
    %v3057 = vmul.f32 %v2161, %v3001
    %v3058 = vmul.f32 %v2162, %v3003
    %v3059 = vmul.f32 %v2163, %v3005
    %v3060 = vmul.f32 %v2164, %v3007
    %v3061 = vmul.f32 %v2165, %v3009
    %v3062 = vmul.f32 %v2166, %v3011
    %v3063 = vmul.f32 %v2167, %v3013
    %v3064 = vmul.f32 %v2168, %v3015
    %v3065 = vmul.f32 %v2169, %v3017
    %v3066 = vmul.f32 %v2170, %v3019
    %v3067 = vmul.f32 %v2171, %v3021
    %v3068 = vmul.f32 %v2172, %v3023
    %v3069 = vmul.f32 %v2173, %v3025
    %v3070 = vmul.f32 %v2174, %v3027
    %v3071 = vmul.f32 %v2175, %v3029
    %v3072 = vmul.f32 %v2176, %v3031
    %v3073 = vmul.f32 %v2177, %v3033
    %v3074 = vmul.f32 %v2178, %v3035
    %v3075 = vmul.f32 %v2179, %v3037
    %v3076 = vmul.f32 %v2180, %v3039
    %v3077 = vmul.f32 %v2181, %v3041
    %v3078 = vmul.f32 %v2182, %v3043
    %v3079 = vmul.f32 %v2183, %v3045
    %v3080 = vmul.f32 %v2184, %v3047
    %v3081 = vmul.f32 %v2185, %v3049
    %3114 = vrot.lane.b32.xlu0 %v2378, 2
    %v3115 = vpop.permute.xlu0 %3114
    %3116 = vrot.lane.b32.xlu0 %v2379, 2
    %v3117 = vpop.permute.xlu0 %3116
    %3118 = vrot.lane.b32.xlu0 %v2380, 2
    %v3119 = vpop.permute.xlu0 %3118
    %3120 = vrot.lane.b32.xlu0 %v2381, 2
    %v3121 = vpop.permute.xlu0 %3120
    %3122 = vrot.lane.b32.xlu0 %v2382, 2
    %v3123 = vpop.permute.xlu0 %3122
    %3124 = vrot.lane.b32.xlu0 %v2383, 2
    %v3125 = vpop.permute.xlu0 %3124
    %3126 = vrot.lane.b32.xlu0 %v2384, 2
    %v3127 = vpop.permute.xlu0 %3126
    %3128 = vrot.lane.b32.xlu0 %v2385, 2
    %v3129 = vpop.permute.xlu0 %3128
    %3130 = vrot.lane.b32.xlu0 %v2386, 2
    %v3131 = vpop.permute.xlu0 %3130
    %3132 = vrot.lane.b32.xlu0 %v2387, 2
    %v3133 = vpop.permute.xlu0 %3132
    %3134 = vrot.lane.b32.xlu0 %v2388, 2
    %v3135 = vpop.permute.xlu0 %3134
    %3136 = vrot.lane.b32.xlu0 %v2389, 2
    %v3137 = vpop.permute.xlu0 %3136
    %3138 = vrot.lane.b32.xlu0 %v2390, 2
    %v3139 = vpop.permute.xlu0 %3138
    %3140 = vrot.lane.b32.xlu0 %v2391, 2
    %v3141 = vpop.permute.xlu0 %3140
    %3142 = vrot.lane.b32.xlu0 %v2392, 2
    %v3143 = vpop.permute.xlu0 %3142
    %3144 = vrot.lane.b32.xlu0 %v2393, 2
    %v3145 = vpop.permute.xlu0 %3144
    %3146 = vrot.lane.b32.xlu0 %v2394, 2
    %v3147 = vpop.permute.xlu0 %3146
    %3148 = vrot.lane.b32.xlu0 %v2395, 2
    %v3149 = vpop.permute.xlu0 %3148
    %3150 = vrot.lane.b32.xlu0 %v2396, 2
    %v3151 = vpop.permute.xlu0 %3150
    %3152 = vrot.lane.b32.xlu0 %v2397, 2
    %v3153 = vpop.permute.xlu0 %3152
    %3154 = vrot.lane.b32.xlu0 %v2398, 2
    %v3155 = vpop.permute.xlu0 %3154
    %3156 = vrot.lane.b32.xlu0 %v2399, 2
    %v3157 = vpop.permute.xlu0 %3156
    %3158 = vrot.lane.b32.xlu0 %v2400, 2
    %v3159 = vpop.permute.xlu0 %3158
    %3160 = vrot.lane.b32.xlu0 %v2401, 2
    %v3161 = vpop.permute.xlu0 %3160
    %3162 = vrot.lane.b32.xlu0 %v2402, 2
    %v3163 = vpop.permute.xlu0 %3162
    %3164 = vrot.lane.b32.xlu0 %v2403, 2
    %v3165 = vpop.permute.xlu0 %3164
    %3166 = vrot.lane.b32.xlu0 %v2404, 2
    %v3167 = vpop.permute.xlu0 %3166
    %3168 = vrot.lane.b32.xlu0 %v2405, 2
    %v3169 = vpop.permute.xlu0 %3168
    %3170 = vrot.lane.b32.xlu0 %v2406, 2
    %v3171 = vpop.permute.xlu0 %3170
    %3172 = vrot.lane.b32.xlu0 %v2407, 2
    %v3173 = vpop.permute.xlu0 %3172
    %3174 = vrot.lane.b32.xlu0 %v2408, 2
    %v3175 = vpop.permute.xlu0 %3174
    %3176 = vrot.lane.b32.xlu0 %v2409, 2
    %v3177 = vpop.permute.xlu0 %3176
    %v3210 = vmul.f32 %v2154, %v3115
    %v3211 = vmul.f32 %v2155, %v3117
    %v3212 = vmul.f32 %v2156, %v3119
    %v3213 = vmul.f32 %v2157, %v3121
    %v3214 = vmul.f32 %v2158, %v3123
    %v3215 = vmul.f32 %v2159, %v3125
    %v3216 = vmul.f32 %v2160, %v3127
    %v3217 = vmul.f32 %v2161, %v3129
    %v3218 = vmul.f32 %v2162, %v3131
    %v3219 = vmul.f32 %v2163, %v3133
    %v3220 = vmul.f32 %v2164, %v3135
    %v3221 = vmul.f32 %v2165, %v3137
    %v3222 = vmul.f32 %v2166, %v3139
    %v3223 = vmul.f32 %v2167, %v3141
    %v3224 = vmul.f32 %v2168, %v3143
    %v3225 = vmul.f32 %v2169, %v3145
    %v3226 = vmul.f32 %v2170, %v3147
    %v3227 = vmul.f32 %v2171, %v3149
    %v3228 = vmul.f32 %v2172, %v3151
    %v3229 = vmul.f32 %v2173, %v3153
    %v3230 = vmul.f32 %v2174, %v3155
    %v3231 = vmul.f32 %v2175, %v3157
    %v3232 = vmul.f32 %v2176, %v3159
    %v3233 = vmul.f32 %v2177, %v3161
    %v3234 = vmul.f32 %v2178, %v3163
    %v3235 = vmul.f32 %v2179, %v3165
    %v3236 = vmul.f32 %v2180, %v3167
    %v3237 = vmul.f32 %v2181, %v3169
    %v3238 = vmul.f32 %v2182, %v3171
    %v3239 = vmul.f32 %v2183, %v3173
    %v3240 = vmul.f32 %v2184, %v3175
    %v3241 = vmul.f32 %v2185, %v3177
    %3274 = vrot.lane.b32.xlu0 %v3210, 126
    %v3275 = vpop.permute.xlu0 %3274
    %3276 = vrot.lane.b32.xlu0 %v3211, 126
    %v3277 = vpop.permute.xlu0 %3276
    %3278 = vrot.lane.b32.xlu0 %v3212, 126
    %v3279 = vpop.permute.xlu0 %3278
    %3280 = vrot.lane.b32.xlu0 %v3213, 126
    %v3281 = vpop.permute.xlu0 %3280
    %3282 = vrot.lane.b32.xlu0 %v3214, 126
    %v3283 = vpop.permute.xlu0 %3282
    %3284 = vrot.lane.b32.xlu0 %v3215, 126
    %v3285 = vpop.permute.xlu0 %3284
    %3286 = vrot.lane.b32.xlu0 %v3216, 126
    %v3287 = vpop.permute.xlu0 %3286
    %3288 = vrot.lane.b32.xlu0 %v3217, 126
    %v3289 = vpop.permute.xlu0 %3288
    %3290 = vrot.lane.b32.xlu0 %v3218, 126
    %v3291 = vpop.permute.xlu0 %3290
    %3292 = vrot.lane.b32.xlu0 %v3219, 126
    %v3293 = vpop.permute.xlu0 %3292
    %3294 = vrot.lane.b32.xlu0 %v3220, 126
    %v3295 = vpop.permute.xlu0 %3294
    %3296 = vrot.lane.b32.xlu0 %v3221, 126
    %v3297 = vpop.permute.xlu0 %3296
    %3298 = vrot.lane.b32.xlu0 %v3222, 126
    %v3299 = vpop.permute.xlu0 %3298
    %3300 = vrot.lane.b32.xlu0 %v3223, 126
    %v3301 = vpop.permute.xlu0 %3300
    %3302 = vrot.lane.b32.xlu0 %v3224, 126
    %v3303 = vpop.permute.xlu0 %3302
    %3304 = vrot.lane.b32.xlu0 %v3225, 126
    %v3305 = vpop.permute.xlu0 %3304
    %3306 = vrot.lane.b32.xlu0 %v3226, 126
    %v3307 = vpop.permute.xlu0 %3306
    %3308 = vrot.lane.b32.xlu0 %v3227, 126
    %v3309 = vpop.permute.xlu0 %3308
    %3310 = vrot.lane.b32.xlu0 %v3228, 126
    %v3311 = vpop.permute.xlu0 %3310
    %3312 = vrot.lane.b32.xlu0 %v3229, 126
    %v3313 = vpop.permute.xlu0 %3312
    %3314 = vrot.lane.b32.xlu0 %v3230, 126
    %v3315 = vpop.permute.xlu0 %3314
    %3316 = vrot.lane.b32.xlu0 %v3231, 126
    %v3317 = vpop.permute.xlu0 %3316
    %3318 = vrot.lane.b32.xlu0 %v3232, 126
    %v3319 = vpop.permute.xlu0 %3318
    %3320 = vrot.lane.b32.xlu0 %v3233, 126
    %v3321 = vpop.permute.xlu0 %3320
    %3322 = vrot.lane.b32.xlu0 %v3234, 126
    %v3323 = vpop.permute.xlu0 %3322
    %3324 = vrot.lane.b32.xlu0 %v3235, 126
    %v3325 = vpop.permute.xlu0 %3324
    %3326 = vrot.lane.b32.xlu0 %v3236, 126
    %v3327 = vpop.permute.xlu0 %3326
    %3328 = vrot.lane.b32.xlu0 %v3237, 126
    %v3329 = vpop.permute.xlu0 %3328
    %3330 = vrot.lane.b32.xlu0 %v3238, 126
    %v3331 = vpop.permute.xlu0 %3330
    %3332 = vrot.lane.b32.xlu0 %v3239, 126
    %v3333 = vpop.permute.xlu0 %3332
    %3334 = vrot.lane.b32.xlu0 %v3240, 126
    %v3335 = vpop.permute.xlu0 %3334
    %3336 = vrot.lane.b32.xlu0 %v3241, 126
    %v3337 = vpop.permute.xlu0 %3336
    %v3370 = vsub.f32 %v3050, %v3275
    %v3371 = vsub.f32 %v3051, %v3277
    %v3372 = vsub.f32 %v3052, %v3279
    %v3373 = vsub.f32 %v3053, %v3281
    %v3374 = vsub.f32 %v3054, %v3283
    %v3375 = vsub.f32 %v3055, %v3285
    %v3376 = vsub.f32 %v3056, %v3287
    %v3377 = vsub.f32 %v3057, %v3289
    %v3378 = vsub.f32 %v3058, %v3291
    %v3379 = vsub.f32 %v3059, %v3293
    %v3380 = vsub.f32 %v3060, %v3295
    %v3381 = vsub.f32 %v3061, %v3297
    %v3382 = vsub.f32 %v3062, %v3299
    %v3383 = vsub.f32 %v3063, %v3301
    %v3384 = vsub.f32 %v3064, %v3303
    %v3385 = vsub.f32 %v3065, %v3305
    %v3386 = vsub.f32 %v3066, %v3307
    %v3387 = vsub.f32 %v3067, %v3309
    %v3388 = vsub.f32 %v3068, %v3311
    %v3389 = vsub.f32 %v3069, %v3313
    %v3390 = vsub.f32 %v3070, %v3315
    %v3391 = vsub.f32 %v3071, %v3317
    %v3392 = vsub.f32 %v3072, %v3319
    %v3393 = vsub.f32 %v3073, %v3321
    %v3394 = vsub.f32 %v3074, %v3323
    %v3395 = vsub.f32 %v3075, %v3325
    %v3396 = vsub.f32 %v3076, %v3327
    %v3397 = vsub.f32 %v3077, %v3329
    %v3398 = vsub.f32 %v3078, %v3331
    %v3399 = vsub.f32 %v3079, %v3333
    %v3400 = vsub.f32 %v3080, %v3335
    %v3401 = vsub.f32 %v3081, %v3337
    %v3402 = vlog2.pop %v2954
    %v3403 = vmul.f32 %v3402, 0.6931472
    %v3404 = vlog2.pop %v2955
    %v3405 = vmul.f32 %v3404, 0.6931472
    %v3406 = vlog2.pop %v2956
    %v3407 = vmul.f32 %v3406, 0.6931472
    %v3408 = vlog2.pop %v2957
    %v3409 = vmul.f32 %v3408, 0.6931472
    %v3410 = vlog2.pop %v2958
    %v3411 = vmul.f32 %v3410, 0.6931472
    %v3412 = vlog2.pop %v2959
    %v3413 = vmul.f32 %v3412, 0.6931472
    %v3414 = vlog2.pop %v2960
    %v3415 = vmul.f32 %v3414, 0.6931472
    %v3416 = vlog2.pop %v2961
    %v3417 = vmul.f32 %v3416, 0.6931472
    %v3418 = vlog2.pop %v2962
    %v3419 = vmul.f32 %v3418, 0.6931472
    %v3420 = vlog2.pop %v2963
    %v3421 = vmul.f32 %v3420, 0.6931472
    %v3422 = vlog2.pop %v2964
    %v3423 = vmul.f32 %v3422, 0.6931472
    %v3424 = vlog2.pop %v2965
    %v3425 = vmul.f32 %v3424, 0.6931472
    %v3426 = vlog2.pop %v2966
    %v3427 = vmul.f32 %v3426, 0.6931472
    %v3428 = vlog2.pop %v2967
    %v3429 = vmul.f32 %v3428, 0.6931472
    %v3430 = vlog2.pop %v2968
    %v3431 = vmul.f32 %v3430, 0.6931472
    %v3432 = vlog2.pop %v2969
    %v3433 = vmul.f32 %v3432, 0.6931472
    %v3434 = vlog2.pop %v2970
    %v3435 = vmul.f32 %v3434, 0.6931472
    %v3436 = vlog2.pop %v2971
    %v3437 = vmul.f32 %v3436, 0.6931472
    %v3438 = vlog2.pop %v2972
    %v3439 = vmul.f32 %v3438, 0.6931472
    %v3440 = vlog2.pop %v2973
    %v3441 = vmul.f32 %v3440, 0.6931472
    %v3442 = vlog2.pop %v2974
    %v3443 = vmul.f32 %v3442, 0.6931472
    %v3444 = vlog2.pop %v2975
    %v3445 = vmul.f32 %v3444, 0.6931472
    %v3446 = vlog2.pop %v2976
    %v3447 = vmul.f32 %v3446, 0.6931472
    %v3448 = vlog2.pop %v2977
    %v3449 = vmul.f32 %v3448, 0.6931472
    %v3450 = vlog2.pop %v2978
    %v3451 = vmul.f32 %v3450, 0.6931472
    %v3452 = vlog2.pop %v2979
    %v3453 = vmul.f32 %v3452, 0.6931472
    %v3454 = vlog2.pop %v2980
    %v3455 = vmul.f32 %v3454, 0.6931472
    %v3456 = vlog2.pop %v2981
    %v3457 = vmul.f32 %v3456, 0.6931472
    %v3458 = vlog2.pop %v2982
    %v3459 = vmul.f32 %v3458, 0.6931472
    %v3460 = vlog2.pop %v2983
    %v3461 = vmul.f32 %v3460, 0.6931472
    %v3462 = vlog2.pop %v2984
    %v3463 = vmul.f32 %v3462, 0.6931472
    %v3464 = vlog2.pop %v2985
    %v3465 = vmul.f32 %v3464, 0.6931472
    %3498 = vrot.lane.b32.xlu0 %v2154, 125
    %v3499 = vpop.permute.xlu0 %3498
    %3500 = vrot.lane.b32.xlu0 %v2155, 125
    %v3501 = vpop.permute.xlu0 %3500
    %3502 = vrot.lane.b32.xlu0 %v2156, 125
    %v3503 = vpop.permute.xlu0 %3502
    %3504 = vrot.lane.b32.xlu0 %v2157, 125
    %v3505 = vpop.permute.xlu0 %3504
    %3506 = vrot.lane.b32.xlu0 %v2158, 125
    %v3507 = vpop.permute.xlu0 %3506
    %3508 = vrot.lane.b32.xlu0 %v2159, 125
    %v3509 = vpop.permute.xlu0 %3508
    %3510 = vrot.lane.b32.xlu0 %v2160, 125
    %v3511 = vpop.permute.xlu0 %3510
    %3512 = vrot.lane.b32.xlu0 %v2161, 125
    %v3513 = vpop.permute.xlu0 %3512
    %3514 = vrot.lane.b32.xlu0 %v2162, 125
    %v3515 = vpop.permute.xlu0 %3514
    %3516 = vrot.lane.b32.xlu0 %v2163, 125
    %v3517 = vpop.permute.xlu0 %3516
    %3518 = vrot.lane.b32.xlu0 %v2164, 125
    %v3519 = vpop.permute.xlu0 %3518
    %3520 = vrot.lane.b32.xlu0 %v2165, 125
    %v3521 = vpop.permute.xlu0 %3520
    %3522 = vrot.lane.b32.xlu0 %v2166, 125
    %v3523 = vpop.permute.xlu0 %3522
    %3524 = vrot.lane.b32.xlu0 %v2167, 125
    %v3525 = vpop.permute.xlu0 %3524
    %3526 = vrot.lane.b32.xlu0 %v2168, 125
    %v3527 = vpop.permute.xlu0 %3526
    %3528 = vrot.lane.b32.xlu0 %v2169, 125
    %v3529 = vpop.permute.xlu0 %3528
    %3530 = vrot.lane.b32.xlu0 %v2170, 125
    %v3531 = vpop.permute.xlu0 %3530
    %3532 = vrot.lane.b32.xlu0 %v2171, 125
    %v3533 = vpop.permute.xlu0 %3532
    %3534 = vrot.lane.b32.xlu0 %v2172, 125
    %v3535 = vpop.permute.xlu0 %3534
    %3536 = vrot.lane.b32.xlu0 %v2173, 125
    %v3537 = vpop.permute.xlu0 %3536
    %3538 = vrot.lane.b32.xlu0 %v2174, 125
    %v3539 = vpop.permute.xlu0 %3538
    %3540 = vrot.lane.b32.xlu0 %v2175, 125
    %v3541 = vpop.permute.xlu0 %3540
    %3542 = vrot.lane.b32.xlu0 %v2176, 125
    %v3543 = vpop.permute.xlu0 %3542
    %3544 = vrot.lane.b32.xlu0 %v2177, 125
    %v3545 = vpop.permute.xlu0 %3544
    %3546 = vrot.lane.b32.xlu0 %v2178, 125
    %v3547 = vpop.permute.xlu0 %3546
    %3548 = vrot.lane.b32.xlu0 %v2179, 125
    %v3549 = vpop.permute.xlu0 %3548
    %3550 = vrot.lane.b32.xlu0 %v2180, 125
    %v3551 = vpop.permute.xlu0 %3550
    %3552 = vrot.lane.b32.xlu0 %v2181, 125
    %v3553 = vpop.permute.xlu0 %3552
    %3554 = vrot.lane.b32.xlu0 %v2182, 125
    %v3555 = vpop.permute.xlu0 %3554
    %3556 = vrot.lane.b32.xlu0 %v2183, 125
    %v3557 = vpop.permute.xlu0 %3556
    %3558 = vrot.lane.b32.xlu0 %v2184, 125
    %v3559 = vpop.permute.xlu0 %3558
    %3560 = vrot.lane.b32.xlu0 %v2185, 125
    %v3561 = vpop.permute.xlu0 %3560
    %v3594 = vsub.f32 %v3403, %v3499
    %v3595 = vsub.f32 %v3405, %v3501
    %v3596 = vsub.f32 %v3407, %v3503
    %v3597 = vsub.f32 %v3409, %v3505
    %v3598 = vsub.f32 %v3411, %v3507
    %v3599 = vsub.f32 %v3413, %v3509
    %v3600 = vsub.f32 %v3415, %v3511
    %v3601 = vsub.f32 %v3417, %v3513
    %v3602 = vsub.f32 %v3419, %v3515
    %v3603 = vsub.f32 %v3421, %v3517
    %v3604 = vsub.f32 %v3423, %v3519
    %v3605 = vsub.f32 %v3425, %v3521
    %v3606 = vsub.f32 %v3427, %v3523
    %v3607 = vsub.f32 %v3429, %v3525
    %v3608 = vsub.f32 %v3431, %v3527
    %v3609 = vsub.f32 %v3433, %v3529
    %v3610 = vsub.f32 %v3435, %v3531
    %v3611 = vsub.f32 %v3437, %v3533
    %v3612 = vsub.f32 %v3439, %v3535
    %v3613 = vsub.f32 %v3441, %v3537
    %v3614 = vsub.f32 %v3443, %v3539
    %v3615 = vsub.f32 %v3445, %v3541
    %v3616 = vsub.f32 %v3447, %v3543
    %v3617 = vsub.f32 %v3449, %v3545
    %v3618 = vsub.f32 %v3451, %v3547
    %v3619 = vsub.f32 %v3453, %v3549
    %v3620 = vsub.f32 %v3455, %v3551
    %v3621 = vsub.f32 %v3457, %v3553
    %v3622 = vsub.f32 %v3459, %v3555
    %v3623 = vsub.f32 %v3461, %v3557
    %v3624 = vsub.f32 %v3463, %v3559
    %v3625 = vsub.f32 %v3465, %v3561
    %v3626 = vmul.f32 %v2154, %v3594
    %v3627 = vmul.f32 %v2155, %v3595
    %v3628 = vmul.f32 %v2156, %v3596
    %v3629 = vmul.f32 %v2157, %v3597
    %v3630 = vmul.f32 %v2158, %v3598
    %v3631 = vmul.f32 %v2159, %v3599
    %v3632 = vmul.f32 %v2160, %v3600
    %v3633 = vmul.f32 %v2161, %v3601
    %v3634 = vmul.f32 %v2162, %v3602
    %v3635 = vmul.f32 %v2163, %v3603
    %v3636 = vmul.f32 %v2164, %v3604
    %v3637 = vmul.f32 %v2165, %v3605
    %v3638 = vmul.f32 %v2166, %v3606
    %v3639 = vmul.f32 %v2167, %v3607
    %v3640 = vmul.f32 %v2168, %v3608
    %v3641 = vmul.f32 %v2169, %v3609
    %v3642 = vmul.f32 %v2170, %v3610
    %v3643 = vmul.f32 %v2171, %v3611
    %v3644 = vmul.f32 %v2172, %v3612
    %v3645 = vmul.f32 %v2173, %v3613
    %v3646 = vmul.f32 %v2174, %v3614
    %v3647 = vmul.f32 %v2175, %v3615
    %v3648 = vmul.f32 %v2176, %v3616
    %v3649 = vmul.f32 %v2177, %v3617
    %v3650 = vmul.f32 %v2178, %v3618
    %v3651 = vmul.f32 %v2179, %v3619
    %v3652 = vmul.f32 %v2180, %v3620
    %v3653 = vmul.f32 %v2181, %v3621
    %v3654 = vmul.f32 %v2182, %v3622
    %v3655 = vmul.f32 %v2183, %v3623
    %v3656 = vmul.f32 %v2184, %v3624
    %v3657 = vmul.f32 %v2185, %v3625
    %3690 = vrot.lane.b32.xlu0 %v3626, 127
    %v3691 = vpop.permute.xlu0 %3690
    %3692 = vrot.lane.b32.xlu0 %v3627, 127
    %v3693 = vpop.permute.xlu0 %3692
    %3694 = vrot.lane.b32.xlu0 %v3628, 127
    %v3695 = vpop.permute.xlu0 %3694
    %3696 = vrot.lane.b32.xlu0 %v3629, 127
    %v3697 = vpop.permute.xlu0 %3696
    %3698 = vrot.lane.b32.xlu0 %v3630, 127
    %v3699 = vpop.permute.xlu0 %3698
    %3700 = vrot.lane.b32.xlu0 %v3631, 127
    %v3701 = vpop.permute.xlu0 %3700
    %3702 = vrot.lane.b32.xlu0 %v3632, 127
    %v3703 = vpop.permute.xlu0 %3702
    %3704 = vrot.lane.b32.xlu0 %v3633, 127
    %v3705 = vpop.permute.xlu0 %3704
    %3706 = vrot.lane.b32.xlu0 %v3634, 127
    %v3707 = vpop.permute.xlu0 %3706
    %3708 = vrot.lane.b32.xlu0 %v3635, 127
    %v3709 = vpop.permute.xlu0 %3708
    %3710 = vrot.lane.b32.xlu0 %v3636, 127
    %v3711 = vpop.permute.xlu0 %3710
    %3712 = vrot.lane.b32.xlu0 %v3637, 127
    %v3713 = vpop.permute.xlu0 %3712
    %3714 = vrot.lane.b32.xlu0 %v3638, 127
    %v3715 = vpop.permute.xlu0 %3714
    %3716 = vrot.lane.b32.xlu0 %v3639, 127
    %v3717 = vpop.permute.xlu0 %3716
    %3718 = vrot.lane.b32.xlu0 %v3640, 127
    %v3719 = vpop.permute.xlu0 %3718
    %3720 = vrot.lane.b32.xlu0 %v3641, 127
    %v3721 = vpop.permute.xlu0 %3720
    %3722 = vrot.lane.b32.xlu0 %v3642, 127
    %v3723 = vpop.permute.xlu0 %3722
    %3724 = vrot.lane.b32.xlu0 %v3643, 127
    %v3725 = vpop.permute.xlu0 %3724
    %3726 = vrot.lane.b32.xlu0 %v3644, 127
    %v3727 = vpop.permute.xlu0 %3726
    %3728 = vrot.lane.b32.xlu0 %v3645, 127
    %v3729 = vpop.permute.xlu0 %3728
    %3730 = vrot.lane.b32.xlu0 %v3646, 127
    %v3731 = vpop.permute.xlu0 %3730
    %3732 = vrot.lane.b32.xlu0 %v3647, 127
    %v3733 = vpop.permute.xlu0 %3732
    %3734 = vrot.lane.b32.xlu0 %v3648, 127
    %v3735 = vpop.permute.xlu0 %3734
    %3736 = vrot.lane.b32.xlu0 %v3649, 127
    %v3737 = vpop.permute.xlu0 %3736
    %3738 = vrot.lane.b32.xlu0 %v3650, 127
    %v3739 = vpop.permute.xlu0 %3738
    %3740 = vrot.lane.b32.xlu0 %v3651, 127
    %v3741 = vpop.permute.xlu0 %3740
    %3742 = vrot.lane.b32.xlu0 %v3652, 127
    %v3743 = vpop.permute.xlu0 %3742
    %3744 = vrot.lane.b32.xlu0 %v3653, 127
    %v3745 = vpop.permute.xlu0 %3744
    %3746 = vrot.lane.b32.xlu0 %v3654, 127
    %v3747 = vpop.permute.xlu0 %3746
    %3748 = vrot.lane.b32.xlu0 %v3655, 127
    %v3749 = vpop.permute.xlu0 %3748
    %3750 = vrot.lane.b32.xlu0 %v3656, 127
    %v3751 = vpop.permute.xlu0 %3750
    %3752 = vrot.lane.b32.xlu0 %v3657, 127
    %v3753 = vpop.permute.xlu0 %3752
    %v3786 = vadd.f32 %v3370, %v3691
    %v3787 = vadd.f32 %v3371, %v3693
    %v3788 = vadd.f32 %v3372, %v3695
    %v3789 = vadd.f32 %v3373, %v3697
    %v3790 = vadd.f32 %v3374, %v3699
    %v3791 = vadd.f32 %v3375, %v3701
    %v3792 = vadd.f32 %v3376, %v3703
    %v3793 = vadd.f32 %v3377, %v3705
    %v3794 = vadd.f32 %v3378, %v3707
    %v3795 = vadd.f32 %v3379, %v3709
    %v3796 = vadd.f32 %v3380, %v3711
    %v3797 = vadd.f32 %v3381, %v3713
    %v3798 = vadd.f32 %v3382, %v3715
    %v3799 = vadd.f32 %v3383, %v3717
    %v3800 = vadd.f32 %v3384, %v3719
    %v3801 = vadd.f32 %v3385, %v3721
    %v3802 = vadd.f32 %v3386, %v3723
    %v3803 = vadd.f32 %v3387, %v3725
    %v3804 = vadd.f32 %v3388, %v3727
    %v3805 = vadd.f32 %v3389, %v3729
    %v3806 = vadd.f32 %v3390, %v3731
    %v3807 = vadd.f32 %v3391, %v3733
    %v3808 = vadd.f32 %v3392, %v3735
    %v3809 = vadd.f32 %v3393, %v3737
    %v3810 = vadd.f32 %v3394, %v3739
    %v3811 = vadd.f32 %v3395, %v3741
    %v3812 = vadd.f32 %v3396, %v3743
    %v3813 = vadd.f32 %v3397, %v3745
    %v3814 = vadd.f32 %v3398, %v3747
    %v3815 = vadd.f32 %v3399, %v3749
    %v3816 = vadd.f32 %v3400, %v3751
    %v3817 = vadd.f32 %v3401, %v3753
    %vm3818 = vcmask 7168
    %3819 = vst.msk [vmem:[%s6] sm:$0xff] %vm3818, %v3786
    %3820 = vst.msk [vmem:[%s6 + $0x8] sm:$0xff] %vm3818, %v3787
    %3821 = vst.msk [vmem:[%s6 + $0x10] sm:$0xff] %vm3818, %v3788
    %3822 = vst.msk [vmem:[%s6 + $0x18] sm:$0xff] %vm3818, %v3789
    %3823 = vst.msk [vmem:[%s6 + $0x20] sm:$0xff] %vm3818, %v3790
    %3824 = vst.msk [vmem:[%s6 + $0x28] sm:$0xff] %vm3818, %v3791
    %3825 = vst.msk [vmem:[%s6 + $0x30] sm:$0xff] %vm3818, %v3792
    %3826 = vst.msk [vmem:[%s6 + $0x38] sm:$0xff] %vm3818, %v3793
    %3827 = vst.msk [vmem:[%s6 + $0x40] sm:$0xff] %vm3818, %v3794
    %3828 = vst.msk [vmem:[%s6 + $0x48] sm:$0xff] %vm3818, %v3795
    %3829 = vst.msk [vmem:[%s6 + $0x50] sm:$0xff] %vm3818, %v3796
    %3830 = vst.msk [vmem:[%s6 + $0x58] sm:$0xff] %vm3818, %v3797
    %3831 = vst.msk [vmem:[%s6 + $0x60] sm:$0xff] %vm3818, %v3798
    %3832 = vst.msk [vmem:[%s6 + $0x68] sm:$0xff] %vm3818, %v3799
    %3833 = vst.msk [vmem:[%s6 + $0x70] sm:$0xff] %vm3818, %v3800
    %3834 = vst.msk [vmem:[%s6 + $0x78] sm:$0xff] %vm3818, %v3801
    %3835 = vst.msk [vmem:[%s6 + $0x80] sm:$0xff] %vm3818, %v3802
    %3836 = vst.msk [vmem:[%s6 + $0x88] sm:$0xff] %vm3818, %v3803
    %3837 = vst.msk [vmem:[%s6 + $0x90] sm:$0xff] %vm3818, %v3804
    %3838 = vst.msk [vmem:[%s6 + $0x98] sm:$0xff] %vm3818, %v3805
    %3839 = vst.msk [vmem:[%s6 + $0xa0] sm:$0xff] %vm3818, %v3806
    %3840 = vst.msk [vmem:[%s6 + $0xa8] sm:$0xff] %vm3818, %v3807
    %3841 = vst.msk [vmem:[%s6 + $0xb0] sm:$0xff] %vm3818, %v3808
    %3842 = vst.msk [vmem:[%s6 + $0xb8] sm:$0xff] %vm3818, %v3809
    %3843 = vst.msk [vmem:[%s6 + $0xc0] sm:$0xff] %vm3818, %v3810
    %3844 = vst.msk [vmem:[%s6 + $0xc8] sm:$0xff] %vm3818, %v3811
    %3845 = vst.msk [vmem:[%s6 + $0xd0] sm:$0xff] %vm3818, %v3812
    %3846 = vst.msk [vmem:[%s6 + $0xd8] sm:$0xff] %vm3818, %v3813
    %3847 = vst.msk [vmem:[%s6 + $0xe0] sm:$0xff] %vm3818, %v3814
    %3848 = vst.msk [vmem:[%s6 + $0xe8] sm:$0xff] %vm3818, %v3815
    %3849 = vst.msk [vmem:[%s6 + $0xf0] sm:$0xff] %vm3818, %v3816
    %3850 = vst.msk [vmem:[%s6 + $0xf8] sm:$0xff] %vm3818, %v3817
  $region33: #{supcon_loss_with_prototype.1} parent=0 // pred_fallthru
    _
  // Predicated region
  $region34: #{supcon_loss_with_prototype.1} parent=0 // pred_check
    _
  $region35: #{supcon_loss_with_prototype.1} parent=0 // pred_check_branch
    %3852 = sbr.rel (0) target = $region37
  $region36: #{supcon_loss_with_prototype.1} parent=0 // pred_region
    _
  $region37: #{supcon_loss_with_prototype.1} parent=0 // pred_fallthru
    _
  // Predicated region
  $region38: #{supcon_loss_with_prototype.1} parent=0 // pred_check
    _
  $region39: #{supcon_loss_with_prototype.1} parent=0 // pred_check_branch
    %3854 = sbr.rel (0) target = $region41
  $region40: #{supcon_loss_with_prototype.1} parent=0 // pred_region
    _
  $region41: #{supcon_loss_with_prototype.1} parent=0 // pred_fallthru
    _

</llo_original>
